<compile_context>
chip_gen: v7x
topology: tpu7x:2x2x1
jax: 0.10.0
libtpu: 0.0.40
codegen_flags: <defaults>
</compile_context>

<pallas_src>
import functools

import jax
import jax.numpy as jnp
from jax import lax
from jax.experimental import pallas as pl
from jax.experimental.pallas import tpu as pltpu

_BN_EPS = 1e-5
_KS = 8      # Conv1d kernel size
_POOL = 4    # MaxPool1d kernel == stride


def _conv_out_len(L, num_conv):
    for idx in range(num_conv):
        L = L - _KS + 1
        if idx != num_conv - 1:
            L = L // _POOL
    return L


# ----------------------------------------------------------------------------
# The fused Pallas kernel
# ----------------------------------------------------------------------------
def _tfnet3_kernel(*refs, num_conv, num_tfs):
    x_ref = refs[0]
    conv_refs = refs[1:1 + 2 * num_conv]
    (wih_ref, bih_ref, whhbd_ref,
     aw1_ref, ab1_ref, aw2_ref, ab2_ref, av_ref, abv_ref,
     fw1_ref, fb1_ref, fw2_ref, fb2_ref,
     out_ref, hs_ref) = refs[1 + 2 * num_conv:]

    f32 = jnp.float32
    B = x_ref.shape[0]
    H = whhbd_ref.shape[0] // 2
    H4 = 4 * H

    # ---- conv stack: Conv1d(k=8,s=1) + folded BN + ReLU; pool after all but last
    temp = x_ref[...]                                           # (B, L, C) NLC
    for idx in range(num_conv):
        w = conv_refs[2 * idx][...]                             # (KS*Cin, Cout)
        bias = conv_refs[2 * idx + 1][...]                      # (1, Cout)
        Cin = temp.shape[2]
        Lo = temp.shape[1] - _KS + 1
        # im2col: concat shifted slices along channels, then ONE reshape
        patches = jnp.concatenate(
            [temp[:, k:k + Lo, :] for k in range(_KS)],
            axis=2).reshape(B * Lo, _KS * Cin)                  # (B*Lo, KS*Cin)
        y = jnp.maximum(
            jnp.dot(patches, w, preferred_element_type=f32) + bias, 0.0)
        C = y.shape[1]
        if idx != num_conv - 1:                                 # MaxPool1d(4, 4)
            Lk = (Lo // _POOL) * _POOL
            yg = y.reshape(B, Lo, C)[:, :Lk, :].reshape(
                B * (Lk // _POOL), _POOL, C)
            y = functools.reduce(jnp.maximum,
                                 [yg[:, p, :] for p in range(_POOL)])
            Lo = Lk // _POOL
        temp = y.reshape(B, Lo, C)
        # dropout: identity (inference mode)

    L = temp.shape[1]
    x2d = temp.reshape(B * L, H)                                # rows (b, l)

    # ---- bidirectional LSTM -------------------------------------------------
    # One fused input projection for BOTH directions / all gates: (C, 8H).
    gx = jnp.dot(x2d, wih_ref[...], preferred_element_type=f32) + bih_ref[...]
    gx3 = gx.reshape(B, L, 8 * H)
    # Per-step fused gate inputs, hoisted off the serial recurrence path.
    # Step s pairs fwd time s with bwd time L-1-s (interleaved directions);
    # both 4H halves sit on 128-lane boundaries, so the concat is ~free.
    gx_steps = [jnp.concatenate([gx3[:, s, 0:H4], gx3[:, L - 1 - s, H4:]],
                                axis=-1) for s in range(L)]     # (B, 8H) each

    whh_bd = whhbd_ref[...]                                     # (2H, 8H) block-diag
    h_cat = jnp.zeros((B, 2 * H), f32)                          # [h_fwd | h_bwd]
    c_f = jnp.zeros((B, H), f32)
    c_b = jnp.zeros((B, H), f32)
    h_f = jnp.zeros((B, H), f32)
    h_b = jnp.zeros((B, H), f32)
    for s in range(L):                                          # static unroll
        # single MXU push per timestep for both directions
        gates = gx_steps[s] + jnp.dot(h_cat, whh_bd, preferred_element_type=f32)
        sg = jax.nn.sigmoid(gates)                              # 1 EUP push
        th = jnp.tanh(gates)                                    # 1 EUP push
        i_f = sg[:, 0 * H:1 * H]; f_f = sg[:, 1 * H:2 * H]
        g_f = th[:, 2 * H:3 * H]; o_f = sg[:, 3 * H:4 * H]
        i_b = sg[:, 4 * H:5 * H]; f_b = sg[:, 5 * H:6 * H]
        g_b = th[:, 6 * H:7 * H]; o_b = sg[:, 7 * H:8 * H]
        c_f = f_f * c_f + i_f * g_f
        c_b = f_b * c_b + i_b * g_b
        h_f = o_f * jnp.tanh(c_f)
        h_b = o_b * jnp.tanh(c_b)
        h_cat = jnp.concatenate([h_f, h_b], axis=-1)
        # per-step hidden states go straight to VMEM scratch (vst slots idle)
        hs_ref[s, :, 0:H] = h_f
        hs_ref[L - 1 - s, :, H:2 * H] = h_b

    # h_n.view(batch, 2H): faithful raw row-major reinterpret of (2, B, H)
    hidden = jnp.stack([h_f, h_b], axis=0).reshape(B, 2 * H)    # (B, 2H)

    # ---- Bahdanau attention (time-major, softmax over L) --------------------
    D2 = 2 * H
    vals = hs_ref[...]                                          # (L, B, 2H)
    vals2d = vals.reshape(L * B, D2)
    s1 = (jnp.dot(vals2d, aw1_ref[...], preferred_element_type=f32)
          + ab1_ref[...]).reshape(L, B, D2)
    s2 = jnp.dot(hidden, aw2_ref[...], preferred_element_type=f32) + ab2_ref[...]
    e = jnp.tanh(s1 + s2[None, :, :]).reshape(L * B, D2)
    score = (jnp.dot(e, av_ref[...], preferred_element_type=f32)
             + abv_ref[...]).reshape(L, B, num_tfs)
    m = jnp.max(score, axis=0, keepdims=True)
    ex = jnp.exp(score - m)
    inv = pl.reciprocal(jnp.sum(ex, axis=0, keepdims=True), approx=True)
    aw = ex * inv                                               # (L, B, T)

    # context[b, t, :] = sum_l aw[l, b, t] * vals[l, b, :]  (one batched dot)
    ctx = jnp.einsum("lbt,lbd->btd", aw, vals,
                     preferred_element_type=f32)                # (B, T, 2H)

    # ---- per-TF two-layer MLP heads as block-diagonal matmuls ---------------
    ctx_flat = ctx.reshape(B, num_tfs * D2)                     # (B, T*2H)
    h1 = jnp.maximum(
        jnp.dot(ctx_flat, fw1_ref[...], preferred_element_type=f32)
        + fb1_ref[...], 0.0)                                    # (B, T*64)
    out_ref[...] = (jnp.dot(h1, fw2_ref[...], preferred_element_type=f32)
                    + fb2_ref[...])                             # (B, T)


# ----------------------------------------------------------------------------
# Wrapper: one pallas_call, everything whole-array VMEM resident (no grid)
# ----------------------------------------------------------------------------
def tfnet3_forward(kp, dna_x):
    num_conv = len(kp["conv_w"])
    num_tfs = kp["av"].shape[1]
    B, seq_len, _ = dna_x.shape
    H = kp["whh_bd"].shape[0] // 2
    L = _conv_out_len(seq_len, num_conv)

    conv_args = []
    for w, b in zip(kp["conv_w"], kp["conv_b"]):
        conv_args += [w, b]
    args = [dna_x, *conv_args,
            kp["wih"], kp["bih"], kp["whh_bd"],
            kp["aw1"], kp["ab1"], kp["aw2"], kp["ab2"], kp["av"], kp["abv"],
            kp["fw1_bd"], kp["fb1"], kp["fw2_bd"], kp["fb2"]]

    kernel = functools.partial(_tfnet3_kernel, num_conv=num_conv,
                               num_tfs=num_tfs)
    vmem_spec = pl.BlockSpec(memory_space=pltpu.MemorySpace.VMEM)
    return pl.pallas_call(
        kernel,
        out_shape=jax.ShapeDtypeStruct((B, num_tfs), jnp.float32),
        in_specs=[vmem_spec] * len(args),
        out_specs=vmem_spec,
        scratch_shapes=[pltpu.VMEM((L, B, 2 * H), jnp.float32)],
    )(*args)


# ----------------------------------------------------------------------------
# Parameter prep: fold BN, pack fused / block-diagonal weights (once)
# ----------------------------------------------------------------------------
def prepare_params(params):
    kp = {"conv_w": [], "conv_b": []}
    for layer in params["conv"]:
        cout, cin, ks = layer["w"].shape
        w_mat = jnp.transpose(layer["w"], (2, 1, 0)).reshape(ks * cin, cout)
        scale = layer["bn_gamma"] * lax.rsqrt(layer["bn_var"] + _BN_EPS)
        kp["conv_w"].append(w_mat * scale[None, :])
        kp["conv_b"].append(((layer["b"] - layer["bn_mean"]) * scale
                             + layer["bn_beta"]).reshape(1, cout))

    lstm = params["lstm"]
    H = lstm["w_hh"].shape[-1]
    # fused input projection: columns = [fwd(i|f|g|o) | bwd(i|f|g|o)]
    kp["wih"] = jnp.concatenate([lstm["w_ih"][0].T, lstm["w_ih"][1].T], axis=1)
    kp["bih"] = jnp.concatenate([lstm["b_ih"][0] + lstm["b_hh"][0],
                                 lstm["b_ih"][1] + lstm["b_hh"][1]]
                                ).reshape(1, 8 * H)
    # block-diagonal recurrent weight: h_cat (B,2H) @ whh_bd (2H,8H)
    whh_bd = jnp.zeros((2 * H, 8 * H), jnp.float32)
    whh_bd = whh_bd.at[:H, :4 * H].set(lstm["w_hh"][0].T)
    whh_bd = whh_bd.at[H:, 4 * H:].set(lstm["w_hh"][1].T)
    kp["whh_bd"] = whh_bd

    att = params["attn2"]
    kp["aw1"] = att["w1"].T
    kp["ab1"] = att["b1"].reshape(1, -1)
    kp["aw2"] = att["w2"].T
    kp["ab2"] = att["b2"].reshape(1, -1)
    kp["av"] = att["v"].T
    kp["abv"] = att["bv"].reshape(1, -1)

    fc = params["fc"]
    T, hid, d2 = fc["w1"].shape[0], fc["w1"].shape[1], fc["w1"].shape[2]
    fw1_bd = jnp.zeros((T * d2, T * hid), jnp.float32)
    fw2_bd = jnp.zeros((T * hid, T), jnp.float32)
    for t in range(T):
        fw1_bd = fw1_bd.at[t * d2:(t + 1) * d2,
                           t * hid:(t + 1) * hid].set(fc["w1"][t].T)
        fw2_bd = fw2_bd.at[t * hid:(t + 1) * hid, t].set(fc["w2"][t][0])
    kp["fw1_bd"] = fw1_bd
    kp["fb1"] = fc["b1"].reshape(1, T * hid)
    kp["fw2_bd"] = fw2_bd
    kp["fb2"] = fc["b2"].reshape(1, T)
    return kp


# ----------------------------------------------------------------------------
# Deterministic synthetic parameters (PyTorch-native layouts)
# ----------------------------------------------------------------------------
def init_params(emb_size, linear_size, num_tfs, seed=0):
    keys = iter(jax.random.split(jax.random.PRNGKey(seed), 256))

    def normal(shape, scale=0.1):
        return scale * jax.random.normal(next(keys), shape, dtype=jnp.float32)

    def uniform(shape, lo, hi):
        return jax.random.uniform(next(keys), shape, dtype=jnp.float32,
                                  minval=lo, maxval=hi)

    in_channels = [int(emb_size)] + list(linear_size)
    conv_layers = []
    for cin, cout in zip(in_channels[:-1], in_channels[1:]):
        conv_layers.append(dict(
            w=normal((cout, cin, _KS)),      # PyTorch Conv1d weight layout
            b=normal((cout,)),
            bn_gamma=uniform((cout,), 0.5, 1.5),
            bn_beta=normal((cout,)),
            bn_mean=normal((cout,)),
            bn_var=uniform((cout,), 0.5, 1.5),
        ))

    C = in_channels[-1]
    lstm = dict(
        w_ih=jnp.stack([normal((4 * C, C)) for _ in range(2)], 0),
        w_hh=jnp.stack([normal((4 * C, C)) for _ in range(2)], 0),
        b_ih=jnp.stack([normal((4 * C,)) for _ in range(2)], 0),
        b_hh=jnp.stack([normal((4 * C,)) for _ in range(2)], 0),
    )
    D2 = 2 * C
    attn2 = dict(w1=normal((D2, D2)), b1=normal((D2,)),
                 w2=normal((D2, D2)), b2=normal((D2,)),
                 v=normal((num_tfs, D2)), bv=normal((num_tfs,)))
    fc = dict(w1=jnp.stack([normal((64, D2)) for _ in range(num_tfs)], 0),
              b1=jnp.stack([normal((64,)) for _ in range(num_tfs)], 0),
              w2=jnp.stack([normal((1, 64)) for _ in range(num_tfs)], 0),
              b2=jnp.stack([normal((1,)) for _ in range(num_tfs)], 0))
    return dict(conv=conv_layers, lstm=lstm, attn2=attn2, fc=fc)


# ----------------------------------------------------------------------------
# Pure-JAX reference (built from the raw PyTorch-layout params)
# ----------------------------------------------------------------------------
def tfnet3_reference(params, dna_x):
    _HP = lax.Precision.HIGHEST
    _mm = functools.partial(jnp.matmul, precision=_HP)
    B = dna_x.shape[0]
    temp = dna_x                                      # NLC (channels last)
    n_conv = len(params["conv"])
    for idx, layer in enumerate(params["conv"]):
        w = layer["w"]
        cout = w.shape[0]
        L = temp.shape[1]
        Lo = L - _KS + 1
        patches = jnp.stack([temp[:, k:k + Lo, :] for k in range(_KS)], axis=3)
        y = jnp.einsum("blck,ock->blo", patches, w, precision=_HP) + layer["b"]
        scale = layer["bn_gamma"] / jnp.sqrt(layer["bn_var"] + _BN_EPS)
        y = jnp.maximum((y - layer["bn_mean"]) * scale + layer["bn_beta"], 0.0)
        if idx != n_conv - 1:
            Lk = (Lo // _POOL) * _POOL
            y = y[:, :Lk, :].reshape(B, Lk // _POOL, _POOL, cout).max(axis=2)
        temp = y

    H = temp.shape[-1]
    lstm = params["lstm"]

    def run(d, reverse):
        xs = temp[:, ::-1, :] if reverse else temp
        wih, whh = lstm["w_ih"][d], lstm["w_hh"][d]
        bih, bhh = lstm["b_ih"][d], lstm["b_hh"][d]
        h = jnp.zeros((B, H), jnp.float32)
        c = jnp.zeros((B, H), jnp.float32)
        hs = []
        for t in range(xs.shape[1]):
            g = _mm(xs[:, t, :], wih.T) + bih + _mm(h, whh.T) + bhh
            i = jax.nn.sigmoid(g[:, 0:H])
            f = jax.nn.sigmoid(g[:, H:2 * H])
            gg = jnp.tanh(g[:, 2 * H:3 * H])
            o = jax.nn.sigmoid(g[:, 3 * H:4 * H])
            c = f * c + i * gg
            h = o * jnp.tanh(c)
            hs.append(h)
        hs = jnp.stack(hs, axis=1)
        if reverse:
            hs = hs[:, ::-1, :]
        return hs, h

    hs_f, hf = run(0, False)
    hs_b, hb = run(1, True)
    out = jnp.concatenate([hs_f, hs_b], axis=-1)       # (B, L, 2H)
    h_n = jnp.stack([hf, hb], axis=0)                  # (2, B, H)
    hidden = h_n.reshape(B, 2 * H)                     # faithful to h_n.view

    att = params["attn2"]
    s = jnp.tanh(_mm(out, att["w1"].T) + att["b1"]
                 + (_mm(hidden, att["w2"].T) + att["b2"])[:, None, :])
    score = _mm(s, att["v"].T) + att["bv"]             # (B, L, T)
    aw = jax.nn.softmax(score, axis=1)
    ctx = jnp.einsum("blt,bld->btd", aw, out, precision=_HP)

    fc = params["fc"]
    outs = []
    for t in range(ctx.shape[1]):
        x = ctx[:, t, :]
        h1 = jnp.maximum(_mm(x, fc["w1"][t].T) + fc["b1"][t], 0.0)
        outs.append(_mm(h1, fc["w2"][t].T) + fc["b2"][t])
    return jnp.concatenate(outs, axis=1)


if __name__ == "__main__":
    emb_size = 4
    linear_size = [16, 32]          # conv channels 4 -> 16 -> 32
    all_tfs = ["TF%d" % i for i in range(5)]
    batch, seq_len = 2, 63          # 63 -conv8-> 56 -pool4-> 14 -conv8-> 7

    params = init_params(emb_size, linear_size, len(all_tfs))
    kparams = prepare_params(params)
    dna_x = jax.random.normal(jax.random.PRNGKey(0),
                              (batch, seq_len, emb_size), dtype=jnp.float32)

    fwd = jax.jit(tfnet3_forward)
    out = fwd(kparams, dna_x)
    jax.block_until_ready(out)

    assert out.shape == (batch, len(all_tfs)), out.shape
    assert bool(jnp.all(jnp.isfinite(out)))
    ref = tfnet3_reference(params, dna_x)
    err = float(jnp.max(jnp.abs(out - ref)))
    assert err < 5e-3, f"max abs err vs reference: {err}"
    print("KERNEL_OK")
</pallas_src>

<mosaic_0001>
module attributes {stable_mosaic.version = 11 : i64} {
  func.func @_tfnet3_kernel(%arg0: memref<2x63x4xf32, #tpu.memory_space<vmem>>, %arg1: memref<32x16xf32, #tpu.memory_space<vmem>>, %arg2: memref<1x16xf32, #tpu.memory_space<vmem>>, %arg3: memref<128x32xf32, #tpu.memory_space<vmem>>, %arg4: memref<1x32xf32, #tpu.memory_space<vmem>>, %arg5: memref<32x256xf32, #tpu.memory_space<vmem>>, %arg6: memref<1x256xf32, #tpu.memory_space<vmem>>, %arg7: memref<64x256xf32, #tpu.memory_space<vmem>>, %arg8: memref<64x64xf32, #tpu.memory_space<vmem>>, %arg9: memref<1x64xf32, #tpu.memory_space<vmem>>, %arg10: memref<64x64xf32, #tpu.memory_space<vmem>>, %arg11: memref<1x64xf32, #tpu.memory_space<vmem>>, %arg12: memref<64x5xf32, #tpu.memory_space<vmem>>, %arg13: memref<1x5xf32, #tpu.memory_space<vmem>>, %arg14: memref<320x320xf32, #tpu.memory_space<vmem>>, %arg15: memref<1x320xf32, #tpu.memory_space<vmem>>, %arg16: memref<320x5xf32, #tpu.memory_space<vmem>>, %arg17: memref<1x5xf32, #tpu.memory_space<vmem>>, %arg18: memref<2x5xf32, #tpu.memory_space<vmem>>, %arg19: memref<7x2x64xf32, #tpu.memory_space<vmem>>) attributes {dimension_semantics = [], scalar_prefetch = 0 : i64, scratch_operands = 1 : i64, tpu.core_type = #tpu.core_type<tc>} {
    %c0 = arith.constant 0 : index
    %c0_0 = arith.constant 0 : index
    %c0_1 = arith.constant 0 : index
    %0 = vector.load %arg0[%c0, %c0_0, %c0_1] : memref<2x63x4xf32, #tpu.memory_space<vmem>>, vector<2x63x4xf32>
    %c0_2 = arith.constant 0 : index
    %c0_3 = arith.constant 0 : index
    %1 = vector.load %arg1[%c0_2, %c0_3] : memref<32x16xf32, #tpu.memory_space<vmem>>, vector<32x16xf32>
    %c0_4 = arith.constant 0 : index
    %c0_5 = arith.constant 0 : index
    %2 = vector.load %arg2[%c0_4, %c0_5] : memref<1x16xf32, #tpu.memory_space<vmem>>, vector<1x16xf32>
    %3 = vector.extract_strided_slice %0 {offsets = [0, 0, 0], sizes = [2, 56, 4], strides = [1, 1, 1]} : vector<2x63x4xf32> to vector<2x56x4xf32>
    %4 = vector.extract_strided_slice %0 {offsets = [0, 1, 0], sizes = [2, 56, 4], strides = [1, 1, 1]} : vector<2x63x4xf32> to vector<2x56x4xf32>
    %5 = vector.extract_strided_slice %0 {offsets = [0, 2, 0], sizes = [2, 56, 4], strides = [1, 1, 1]} : vector<2x63x4xf32> to vector<2x56x4xf32>
    %6 = vector.extract_strided_slice %0 {offsets = [0, 3, 0], sizes = [2, 56, 4], strides = [1, 1, 1]} : vector<2x63x4xf32> to vector<2x56x4xf32>
    %7 = vector.extract_strided_slice %0 {offsets = [0, 4, 0], sizes = [2, 56, 4], strides = [1, 1, 1]} : vector<2x63x4xf32> to vector<2x56x4xf32>
    %8 = vector.extract_strided_slice %0 {offsets = [0, 5, 0], sizes = [2, 56, 4], strides = [1, 1, 1]} : vector<2x63x4xf32> to vector<2x56x4xf32>
    %9 = vector.extract_strided_slice %0 {offsets = [0, 6, 0], sizes = [2, 56, 4], strides = [1, 1, 1]} : vector<2x63x4xf32> to vector<2x56x4xf32>
    %10 = vector.extract_strided_slice %0 {offsets = [0, 7, 0], sizes = [2, 56, 4], strides = [1, 1, 1]} : vector<2x63x4xf32> to vector<2x56x4xf32>
    %11 = tpu.concatenate %3, %4, %5, %6, %7, %8, %9, %10 in 2 : vector<2x56x4xf32>, vector<2x56x4xf32>, vector<2x56x4xf32>, vector<2x56x4xf32>, vector<2x56x4xf32>, vector<2x56x4xf32>, vector<2x56x4xf32>, vector<2x56x4xf32> -> vector<2x56x32xf32>
    %12 = vector.shape_cast %11 : vector<2x56x32xf32> to vector<112x32xf32>
    %cst = arith.constant dense<0.000000e+00> : vector<112x16xf32>
    %13 = tpu.matmul %12, %1, %cst {dimension_numbers = #tpu.dot_dimension_numbers<[1], [0], [0], [1], [0, 0, 1, 1], [], []>} : vector<112x32xf32>, vector<32x16xf32>, vector<112x16xf32> -> vector<112x16xf32>
    %14 = vector.broadcast %2 : vector<1x16xf32> to vector<112x16xf32>
    %15 = arith.addf %13, %14 : vector<112x16xf32>
    %cst_6 = arith.constant 0.000000e+00 : f32
    %16 = vector.broadcast %cst_6 : f32 to vector<112x16xf32>
    %17 = arith.maximumf %15, %16 : vector<112x16xf32>
    %18 = vector.shape_cast %17 : vector<112x16xf32> to vector<2x56x16xf32>
    %19 = vector.shape_cast %18 : vector<2x56x16xf32> to vector<28x4x16xf32>
    %20 = vector.extract_strided_slice %19 {offsets = [0, 0, 0], sizes = [28, 1, 16], strides = [1, 1, 1]} : vector<28x4x16xf32> to vector<28x1x16xf32>
    %21 = vector.shape_cast %20 : vector<28x1x16xf32> to vector<28x16xf32>
    %22 = vector.extract_strided_slice %19 {offsets = [0, 1, 0], sizes = [28, 1, 16], strides = [1, 1, 1]} : vector<28x4x16xf32> to vector<28x1x16xf32>
    %23 = vector.shape_cast %22 : vector<28x1x16xf32> to vector<28x16xf32>
    %24 = vector.extract_strided_slice %19 {offsets = [0, 2, 0], sizes = [28, 1, 16], strides = [1, 1, 1]} : vector<28x4x16xf32> to vector<28x1x16xf32>
    %25 = vector.shape_cast %24 : vector<28x1x16xf32> to vector<28x16xf32>
    %26 = vector.extract_strided_slice %19 {offsets = [0, 3, 0], sizes = [28, 1, 16], strides = [1, 1, 1]} : vector<28x4x16xf32> to vector<28x1x16xf32>
    %27 = vector.shape_cast %26 : vector<28x1x16xf32> to vector<28x16xf32>
    %28 = arith.maximumf %21, %23 : vector<28x16xf32>
    %29 = arith.maximumf %28, %25 : vector<28x16xf32>
    %30 = arith.maximumf %29, %27 : vector<28x16xf32>
    %31 = vector.shape_cast %30 : vector<28x16xf32> to vector<2x14x16xf32>
    %c0_7 = arith.constant 0 : index
    %c0_8 = arith.constant 0 : index
    %32 = vector.load %arg3[%c0_7, %c0_8] : memref<128x32xf32, #tpu.memory_space<vmem>>, vector<128x32xf32>
    %c0_9 = arith.constant 0 : index
    %c0_10 = arith.constant 0 : index
    %33 = vector.load %arg4[%c0_9, %c0_10] : memref<1x32xf32, #tpu.memory_space<vmem>>, vector<1x32xf32>
    %34 = vector.extract_strided_slice %31 {offsets = [0, 0, 0], sizes = [2, 7, 16], strides = [1, 1, 1]} : vector<2x14x16xf32> to vector<2x7x16xf32>
    %35 = vector.extract_strided_slice %31 {offsets = [0, 1, 0], sizes = [2, 7, 16], strides = [1, 1, 1]} : vector<2x14x16xf32> to vector<2x7x16xf32>
    %36 = vector.extract_strided_slice %31 {offsets = [0, 2, 0], sizes = [2, 7, 16], strides = [1, 1, 1]} : vector<2x14x16xf32> to vector<2x7x16xf32>
    %37 = vector.extract_strided_slice %31 {offsets = [0, 3, 0], sizes = [2, 7, 16], strides = [1, 1, 1]} : vector<2x14x16xf32> to vector<2x7x16xf32>
    %38 = vector.extract_strided_slice %31 {offsets = [0, 4, 0], sizes = [2, 7, 16], strides = [1, 1, 1]} : vector<2x14x16xf32> to vector<2x7x16xf32>
    %39 = vector.extract_strided_slice %31 {offsets = [0, 5, 0], sizes = [2, 7, 16], strides = [1, 1, 1]} : vector<2x14x16xf32> to vector<2x7x16xf32>
    %40 = vector.extract_strided_slice %31 {offsets = [0, 6, 0], sizes = [2, 7, 16], strides = [1, 1, 1]} : vector<2x14x16xf32> to vector<2x7x16xf32>
    %41 = vector.extract_strided_slice %31 {offsets = [0, 7, 0], sizes = [2, 7, 16], strides = [1, 1, 1]} : vector<2x14x16xf32> to vector<2x7x16xf32>
    %42 = tpu.concatenate %34, %35, %36, %37, %38, %39, %40, %41 in 2 : vector<2x7x16xf32>, vector<2x7x16xf32>, vector<2x7x16xf32>, vector<2x7x16xf32>, vector<2x7x16xf32>, vector<2x7x16xf32>, vector<2x7x16xf32>, vector<2x7x16xf32> -> vector<2x7x128xf32>
    %43 = vector.shape_cast %42 : vector<2x7x128xf32> to vector<14x128xf32>
    %cst_11 = arith.constant dense<0.000000e+00> : vector<14x32xf32>
    %44 = tpu.matmul %43, %32, %cst_11 {dimension_numbers = #tpu.dot_dimension_numbers<[1], [0], [0], [1], [0, 0, 1, 1], [], []>} : vector<14x128xf32>, vector<128x32xf32>, vector<14x32xf32> -> vector<14x32xf32>
    %45 = vector.broadcast %33 : vector<1x32xf32> to vector<14x32xf32>
    %46 = arith.addf %44, %45 : vector<14x32xf32>
    %cst_12 = arith.constant 0.000000e+00 : f32
    %47 = vector.broadcast %cst_12 : f32 to vector<14x32xf32>
    %48 = arith.maximumf %46, %47 : vector<14x32xf32>
    %49 = vector.shape_cast %48 : vector<14x32xf32> to vector<2x7x32xf32>
    %50 = vector.shape_cast %49 : vector<2x7x32xf32> to vector<14x32xf32>
    %c0_13 = arith.constant 0 : index
    %c0_14 = arith.constant 0 : index
    %51 = vector.load %arg5[%c0_13, %c0_14] : memref<32x256xf32, #tpu.memory_space<vmem>>, vector<32x256xf32>
    %cst_15 = arith.constant dense<0.000000e+00> : vector<14x256xf32>
    %52 = tpu.matmul %50, %51, %cst_15 {dimension_numbers = #tpu.dot_dimension_numbers<[1], [0], [0], [1], [0, 0, 1, 1], [], []>} : vector<14x32xf32>, vector<32x256xf32>, vector<14x256xf32> -> vector<14x256xf32>
    %c0_16 = arith.constant 0 : index
    %c0_17 = arith.constant 0 : index
    %53 = vector.load %arg6[%c0_16, %c0_17] : memref<1x256xf32, #tpu.memory_space<vmem>>, vector<1x256xf32>
    %54 = vector.broadcast %53 : vector<1x256xf32> to vector<14x256xf32>
    %55 = arith.addf %52, %54 : vector<14x256xf32>
    %56 = vector.shape_cast %55 : vector<14x256xf32> to vector<2x7x256xf32>
    %57 = vector.extract_strided_slice %56 {offsets = [0, 0, 0], sizes = [2, 1, 128], strides = [1, 1, 1]} : vector<2x7x256xf32> to vector<2x1x128xf32>
    %58 = vector.shape_cast %57 : vector<2x1x128xf32> to vector<2x128xf32>
    %59 = vector.extract_strided_slice %56 {offsets = [0, 6, 128], sizes = [2, 1, 128], strides = [1, 1, 1]} : vector<2x7x256xf32> to vector<2x1x128xf32>
    %60 = vector.shape_cast %59 : vector<2x1x128xf32> to vector<2x128xf32>
    %61 = tpu.concatenate %58, %60 in 1 : vector<2x128xf32>, vector<2x128xf32> -> vector<2x256xf32>
    %62 = vector.extract_strided_slice %56 {offsets = [0, 1, 0], sizes = [2, 1, 128], strides = [1, 1, 1]} : vector<2x7x256xf32> to vector<2x1x128xf32>
    %63 = vector.shape_cast %62 : vector<2x1x128xf32> to vector<2x128xf32>
    %64 = vector.extract_strided_slice %56 {offsets = [0, 5, 128], sizes = [2, 1, 128], strides = [1, 1, 1]} : vector<2x7x256xf32> to vector<2x1x128xf32>
    %65 = vector.shape_cast %64 : vector<2x1x128xf32> to vector<2x128xf32>
    %66 = tpu.concatenate %63, %65 in 1 : vector<2x128xf32>, vector<2x128xf32> -> vector<2x256xf32>
    %67 = vector.extract_strided_slice %56 {offsets = [0, 2, 0], sizes = [2, 1, 128], strides = [1, 1, 1]} : vector<2x7x256xf32> to vector<2x1x128xf32>
    %68 = vector.shape_cast %67 : vector<2x1x128xf32> to vector<2x128xf32>
    %69 = vector.extract_strided_slice %56 {offsets = [0, 4, 128], sizes = [2, 1, 128], strides = [1, 1, 1]} : vector<2x7x256xf32> to vector<2x1x128xf32>
    %70 = vector.shape_cast %69 : vector<2x1x128xf32> to vector<2x128xf32>
    %71 = tpu.concatenate %68, %70 in 1 : vector<2x128xf32>, vector<2x128xf32> -> vector<2x256xf32>
    %72 = vector.extract_strided_slice %56 {offsets = [0, 3, 0], sizes = [2, 1, 128], strides = [1, 1, 1]} : vector<2x7x256xf32> to vector<2x1x128xf32>
    %73 = vector.shape_cast %72 : vector<2x1x128xf32> to vector<2x128xf32>
    %74 = vector.extract_strided_slice %56 {offsets = [0, 3, 128], sizes = [2, 1, 128], strides = [1, 1, 1]} : vector<2x7x256xf32> to vector<2x1x128xf32>
    %75 = vector.shape_cast %74 : vector<2x1x128xf32> to vector<2x128xf32>
    %76 = tpu.concatenate %73, %75 in 1 : vector<2x128xf32>, vector<2x128xf32> -> vector<2x256xf32>
    %77 = vector.extract_strided_slice %56 {offsets = [0, 4, 0], sizes = [2, 1, 128], strides = [1, 1, 1]} : vector<2x7x256xf32> to vector<2x1x128xf32>
    %78 = vector.shape_cast %77 : vector<2x1x128xf32> to vector<2x128xf32>
    %79 = vector.extract_strided_slice %56 {offsets = [0, 2, 128], sizes = [2, 1, 128], strides = [1, 1, 1]} : vector<2x7x256xf32> to vector<2x1x128xf32>
    %80 = vector.shape_cast %79 : vector<2x1x128xf32> to vector<2x128xf32>
    %81 = tpu.concatenate %78, %80 in 1 : vector<2x128xf32>, vector<2x128xf32> -> vector<2x256xf32>
    %82 = vector.extract_strided_slice %56 {offsets = [0, 5, 0], sizes = [2, 1, 128], strides = [1, 1, 1]} : vector<2x7x256xf32> to vector<2x1x128xf32>
    %83 = vector.shape_cast %82 : vector<2x1x128xf32> to vector<2x128xf32>
    %84 = vector.extract_strided_slice %56 {offsets = [0, 1, 128], sizes = [2, 1, 128], strides = [1, 1, 1]} : vector<2x7x256xf32> to vector<2x1x128xf32>
    %85 = vector.shape_cast %84 : vector<2x1x128xf32> to vector<2x128xf32>
    %86 = tpu.concatenate %83, %85 in 1 : vector<2x128xf32>, vector<2x128xf32> -> vector<2x256xf32>
    %87 = vector.extract_strided_slice %56 {offsets = [0, 6, 0], sizes = [2, 1, 128], strides = [1, 1, 1]} : vector<2x7x256xf32> to vector<2x1x128xf32>
    %88 = vector.shape_cast %87 : vector<2x1x128xf32> to vector<2x128xf32>
    %89 = vector.extract_strided_slice %56 {offsets = [0, 0, 128], sizes = [2, 1, 128], strides = [1, 1, 1]} : vector<2x7x256xf32> to vector<2x1x128xf32>
    %90 = vector.shape_cast %89 : vector<2x1x128xf32> to vector<2x128xf32>
    %91 = tpu.concatenate %88, %90 in 1 : vector<2x128xf32>, vector<2x128xf32> -> vector<2x256xf32>
    %c0_18 = arith.constant 0 : index
    %c0_19 = arith.constant 0 : index
    %92 = vector.load %arg7[%c0_18, %c0_19] : memref<64x256xf32, #tpu.memory_space<vmem>>, vector<64x256xf32>
    %cst_20 = arith.constant 0.000000e+00 : f32
    %93 = vector.broadcast %cst_20 : f32 to vector<2x64xf32>
    %cst_21 = arith.constant 0.000000e+00 : f32
    %94 = vector.broadcast %cst_21 : f32 to vector<2x32xf32>
    %cst_22 = arith.constant 0.000000e+00 : f32
    %95 = vector.broadcast %cst_22 : f32 to vector<2x32xf32>
    %cst_23 = arith.constant dense<0.000000e+00> : vector<2x256xf32>
    %96 = tpu.matmul %93, %92, %cst_23 {dimension_numbers = #tpu.dot_dimension_numbers<[1], [0], [0], [1], [0, 0, 1, 1], [], []>} : vector<2x64xf32>, vector<64x256xf32>, vector<2x256xf32> -> vector<2x256xf32>
    %97 = arith.addf %61, %96 : vector<2x256xf32>
    %98 = arith.negf %97 : vector<2x256xf32>
    %99 = math.exp %98 : vector<2x256xf32>
    %cst_24 = arith.constant 1.000000e+00 : f32
    %100 = vector.broadcast %cst_24 : f32 to vector<2x256xf32>
    %101 = arith.addf %100, %99 : vector<2x256xf32>
    %102 = arith.divf %100, %101 : vector<2x256xf32>
    %103 = math.tanh %97 : vector<2x256xf32>
    %104 = vector.extract_strided_slice %102 {offsets = [0, 0], sizes = [2, 32], strides = [1, 1]} : vector<2x256xf32> to vector<2x32xf32>
    %105 = vector.extract_strided_slice %102 {offsets = [0, 32], sizes = [2, 32], strides = [1, 1]} : vector<2x256xf32> to vector<2x32xf32>
    %106 = vector.extract_strided_slice %103 {offsets = [0, 64], sizes = [2, 32], strides = [1, 1]} : vector<2x256xf32> to vector<2x32xf32>
    %107 = vector.extract_strided_slice %102 {offsets = [0, 96], sizes = [2, 32], strides = [1, 1]} : vector<2x256xf32> to vector<2x32xf32>
    %108 = vector.extract_strided_slice %102 {offsets = [0, 128], sizes = [2, 32], strides = [1, 1]} : vector<2x256xf32> to vector<2x32xf32>
    %109 = vector.extract_strided_slice %102 {offsets = [0, 160], sizes = [2, 32], strides = [1, 1]} : vector<2x256xf32> to vector<2x32xf32>
    %110 = vector.extract_strided_slice %103 {offsets = [0, 192], sizes = [2, 32], strides = [1, 1]} : vector<2x256xf32> to vector<2x32xf32>
    %111 = vector.extract_strided_slice %102 {offsets = [0, 224], sizes = [2, 32], strides = [1, 1]} : vector<2x256xf32> to vector<2x32xf32>
    %112 = arith.mulf %105, %94 : vector<2x32xf32>
    %113 = arith.mulf %104, %106 : vector<2x32xf32>
    %114 = arith.addf %112, %113 : vector<2x32xf32>
    %115 = arith.mulf %109, %95 : vector<2x32xf32>
    %116 = arith.mulf %108, %110 : vector<2x32xf32>
    %117 = arith.addf %115, %116 : vector<2x32xf32>
    %118 = math.tanh %114 : vector<2x32xf32>
    %119 = arith.mulf %107, %118 : vector<2x32xf32>
    %120 = math.tanh %117 : vector<2x32xf32>
    %121 = arith.mulf %111, %120 : vector<2x32xf32>
    %122 = tpu.concatenate %119, %121 in 1 : vector<2x32xf32>, vector<2x32xf32> -> vector<2x64xf32>
    %c0_25 = arith.constant 0 : index
    %c0_26 = arith.constant 0 : index
    %c0_27 = arith.constant 0 : index
    %123 = vector.load %arg19[%c0_25, %c0_26, %c0_27] : memref<7x2x64xf32, #tpu.memory_space<vmem>>, vector<1x2x32xf32>
    %124 = vector.shape_cast %123 : vector<1x2x32xf32> to vector<2x32xf32>
    %125 = vector.shape_cast %119 : vector<2x32xf32> to vector<1x2x32xf32>
    tpu.vector_store %arg19[%c0_25, %c0_26, %c0_27], %125 {strides = array<i32>} : memref<7x2x64xf32, #tpu.memory_space<vmem>>, vector<1x2x32xf32>,
    %c6 = arith.constant 6 : index
    %c0_28 = arith.constant 0 : index
    %c32 = arith.constant 32 : index
    %126 = vector.load %arg19[%c6, %c0_28, %c32] : memref<7x2x64xf32, #tpu.memory_space<vmem>>, vector<1x2x32xf32>
    %127 = vector.shape_cast %126 : vector<1x2x32xf32> to vector<2x32xf32>
    %128 = vector.shape_cast %121 : vector<2x32xf32> to vector<1x2x32xf32>
    tpu.vector_store %arg19[%c6, %c0_28, %c32], %128 {strides = array<i32>} : memref<7x2x64xf32, #tpu.memory_space<vmem>>, vector<1x2x32xf32>,
    %cst_29 = arith.constant dense<0.000000e+00> : vector<2x256xf32>
    %129 = tpu.matmul %122, %92, %cst_29 {dimension_numbers = #tpu.dot_dimension_numbers<[1], [0], [0], [1], [0, 0, 1, 1], [], []>} : vector<2x64xf32>, vector<64x256xf32>, vector<2x256xf32> -> vector<2x256xf32>
    %130 = arith.addf %66, %129 : vector<2x256xf32>
    %131 = arith.negf %130 : vector<2x256xf32>
    %132 = math.exp %131 : vector<2x256xf32>
    %cst_30 = arith.constant 1.000000e+00 : f32
    %133 = vector.broadcast %cst_30 : f32 to vector<2x256xf32>
    %134 = arith.addf %133, %132 : vector<2x256xf32>
    %135 = arith.divf %133, %134 : vector<2x256xf32>
    %136 = math.tanh %130 : vector<2x256xf32>
    %137 = vector.extract_strided_slice %135 {offsets = [0, 0], sizes = [2, 32], strides = [1, 1]} : vector<2x256xf32> to vector<2x32xf32>
    %138 = vector.extract_strided_slice %135 {offsets = [0, 32], sizes = [2, 32], strides = [1, 1]} : vector<2x256xf32> to vector<2x32xf32>
    %139 = vector.extract_strided_slice %136 {offsets = [0, 64], sizes = [2, 32], strides = [1, 1]} : vector<2x256xf32> to vector<2x32xf32>
    %140 = vector.extract_strided_slice %135 {offsets = [0, 96], sizes = [2, 32], strides = [1, 1]} : vector<2x256xf32> to vector<2x32xf32>
    %141 = vector.extract_strided_slice %135 {offsets = [0, 128], sizes = [2, 32], strides = [1, 1]} : vector<2x256xf32> to vector<2x32xf32>
    %142 = vector.extract_strided_slice %135 {offsets = [0, 160], sizes = [2, 32], strides = [1, 1]} : vector<2x256xf32> to vector<2x32xf32>
    %143 = vector.extract_strided_slice %136 {offsets = [0, 192], sizes = [2, 32], strides = [1, 1]} : vector<2x256xf32> to vector<2x32xf32>
    %144 = vector.extract_strided_slice %135 {offsets = [0, 224], sizes = [2, 32], strides = [1, 1]} : vector<2x256xf32> to vector<2x32xf32>
    %145 = arith.mulf %138, %114 : vector<2x32xf32>
    %146 = arith.mulf %137, %139 : vector<2x32xf32>
    %147 = arith.addf %145, %146 : vector<2x32xf32>
    %148 = arith.mulf %142, %117 : vector<2x32xf32>
    %149 = arith.mulf %141, %143 : vector<2x32xf32>
    %150 = arith.addf %148, %149 : vector<2x32xf32>
    %151 = math.tanh %147 : vector<2x32xf32>
    %152 = arith.mulf %140, %151 : vector<2x32xf32>
    %153 = math.tanh %150 : vector<2x32xf32>
    %154 = arith.mulf %144, %153 : vector<2x32xf32>
    %155 = tpu.concatenate %152, %154 in 1 : vector<2x32xf32>, vector<2x32xf32> -> vector<2x64xf32>
    %c1 = arith.constant 1 : index
    %c0_31 = arith.constant 0 : index
    %c0_32 = arith.constant 0 : index
    %156 = vector.load %arg19[%c1, %c0_31, %c0_32] : memref<7x2x64xf32, #tpu.memory_space<vmem>>, vector<1x2x32xf32>
    %157 = vector.shape_cast %156 : vector<1x2x32xf32> to vector<2x32xf32>
    %158 = vector.shape_cast %152 : vector<2x32xf32> to vector<1x2x32xf32>
    tpu.vector_store %arg19[%c1, %c0_31, %c0_32], %158 {strides = array<i32>} : memref<7x2x64xf32, #tpu.memory_space<vmem>>, vector<1x2x32xf32>,
    %c5 = arith.constant 5 : index
    %c0_33 = arith.constant 0 : index
    %c32_34 = arith.constant 32 : index
    %159 = vector.load %arg19[%c5, %c0_33, %c32_34] : memref<7x2x64xf32, #tpu.memory_space<vmem>>, vector<1x2x32xf32>
    %160 = vector.shape_cast %159 : vector<1x2x32xf32> to vector<2x32xf32>
    %161 = vector.shape_cast %154 : vector<2x32xf32> to vector<1x2x32xf32>
    tpu.vector_store %arg19[%c5, %c0_33, %c32_34], %161 {strides = array<i32>} : memref<7x2x64xf32, #tpu.memory_space<vmem>>, vector<1x2x32xf32>,
    %cst_35 = arith.constant dense<0.000000e+00> : vector<2x256xf32>
    %162 = tpu.matmul %155, %92, %cst_35 {dimension_numbers = #tpu.dot_dimension_numbers<[1], [0], [0], [1], [0, 0, 1, 1], [], []>} : vector<2x64xf32>, vector<64x256xf32>, vector<2x256xf32> -> vector<2x256xf32>
    %163 = arith.addf %71, %162 : vector<2x256xf32>
    %164 = arith.negf %163 : vector<2x256xf32>
    %165 = math.exp %164 : vector<2x256xf32>
    %cst_36 = arith.constant 1.000000e+00 : f32
    %166 = vector.broadcast %cst_36 : f32 to vector<2x256xf32>
    %167 = arith.addf %166, %165 : vector<2x256xf32>
    %168 = arith.divf %166, %167 : vector<2x256xf32>
    %169 = math.tanh %163 : vector<2x256xf32>
    %170 = vector.extract_strided_slice %168 {offsets = [0, 0], sizes = [2, 32], strides = [1, 1]} : vector<2x256xf32> to vector<2x32xf32>
    %171 = vector.extract_strided_slice %168 {offsets = [0, 32], sizes = [2, 32], strides = [1, 1]} : vector<2x256xf32> to vector<2x32xf32>
    %172 = vector.extract_strided_slice %169 {offsets = [0, 64], sizes = [2, 32], strides = [1, 1]} : vector<2x256xf32> to vector<2x32xf32>
    %173 = vector.extract_strided_slice %168 {offsets = [0, 96], sizes = [2, 32], strides = [1, 1]} : vector<2x256xf32> to vector<2x32xf32>
    %174 = vector.extract_strided_slice %168 {offsets = [0, 128], sizes = [2, 32], strides = [1, 1]} : vector<2x256xf32> to vector<2x32xf32>
    %175 = vector.extract_strided_slice %168 {offsets = [0, 160], sizes = [2, 32], strides = [1, 1]} : vector<2x256xf32> to vector<2x32xf32>
    %176 = vector.extract_strided_slice %169 {offsets = [0, 192], sizes = [2, 32], strides = [1, 1]} : vector<2x256xf32> to vector<2x32xf32>
    %177 = vector.extract_strided_slice %168 {offsets = [0, 224], sizes = [2, 32], strides = [1, 1]} : vector<2x256xf32> to vector<2x32xf32>
    %178 = arith.mulf %171, %147 : vector<2x32xf32>
    %179 = arith.mulf %170, %172 : vector<2x32xf32>
    %180 = arith.addf %178, %179 : vector<2x32xf32>
    %181 = arith.mulf %175, %150 : vector<2x32xf32>
    %182 = arith.mulf %174, %176 : vector<2x32xf32>
    %183 = arith.addf %181, %182 : vector<2x32xf32>
    %184 = math.tanh %180 : vector<2x32xf32>
    %185 = arith.mulf %173, %184 : vector<2x32xf32>
    %186 = math.tanh %183 : vector<2x32xf32>
    %187 = arith.mulf %177, %186 : vector<2x32xf32>
    %188 = tpu.concatenate %185, %187 in 1 : vector<2x32xf32>, vector<2x32xf32> -> vector<2x64xf32>
    %c2 = arith.constant 2 : index
    %c0_37 = arith.constant 0 : index
    %c0_38 = arith.constant 0 : index
    %189 = vector.load %arg19[%c2, %c0_37, %c0_38] : memref<7x2x64xf32, #tpu.memory_space<vmem>>, vector<1x2x32xf32>
    %190 = vector.shape_cast %189 : vector<1x2x32xf32> to vector<2x32xf32>
    %191 = vector.shape_cast %185 : vector<2x32xf32> to vector<1x2x32xf32>
    tpu.vector_store %arg19[%c2, %c0_37, %c0_38], %191 {strides = array<i32>} : memref<7x2x64xf32, #tpu.memory_space<vmem>>, vector<1x2x32xf32>,
    %c4 = arith.constant 4 : index
    %c0_39 = arith.constant 0 : index
    %c32_40 = arith.constant 32 : index
    %192 = vector.load %arg19[%c4, %c0_39, %c32_40] : memref<7x2x64xf32, #tpu.memory_space<vmem>>, vector<1x2x32xf32>
    %193 = vector.shape_cast %192 : vector<1x2x32xf32> to vector<2x32xf32>
    %194 = vector.shape_cast %187 : vector<2x32xf32> to vector<1x2x32xf32>
    tpu.vector_store %arg19[%c4, %c0_39, %c32_40], %194 {strides = array<i32>} : memref<7x2x64xf32, #tpu.memory_space<vmem>>, vector<1x2x32xf32>,
    %cst_41 = arith.constant dense<0.000000e+00> : vector<2x256xf32>
    %195 = tpu.matmul %188, %92, %cst_41 {dimension_numbers = #tpu.dot_dimension_numbers<[1], [0], [0], [1], [0, 0, 1, 1], [], []>} : vector<2x64xf32>, vector<64x256xf32>, vector<2x256xf32> -> vector<2x256xf32>
    %196 = arith.addf %76, %195 : vector<2x256xf32>
    %197 = arith.negf %196 : vector<2x256xf32>
    %198 = math.exp %197 : vector<2x256xf32>
    %cst_42 = arith.constant 1.000000e+00 : f32
    %199 = vector.broadcast %cst_42 : f32 to vector<2x256xf32>
    %200 = arith.addf %199, %198 : vector<2x256xf32>
    %201 = arith.divf %199, %200 : vector<2x256xf32>
    %202 = math.tanh %196 : vector<2x256xf32>
    %203 = vector.extract_strided_slice %201 {offsets = [0, 0], sizes = [2, 32], strides = [1, 1]} : vector<2x256xf32> to vector<2x32xf32>
    %204 = vector.extract_strided_slice %201 {offsets = [0, 32], sizes = [2, 32], strides = [1, 1]} : vector<2x256xf32> to vector<2x32xf32>
    %205 = vector.extract_strided_slice %202 {offsets = [0, 64], sizes = [2, 32], strides = [1, 1]} : vector<2x256xf32> to vector<2x32xf32>
    %206 = vector.extract_strided_slice %201 {offsets = [0, 96], sizes = [2, 32], strides = [1, 1]} : vector<2x256xf32> to vector<2x32xf32>
    %207 = vector.extract_strided_slice %201 {offsets = [0, 128], sizes = [2, 32], strides = [1, 1]} : vector<2x256xf32> to vector<2x32xf32>
    %208 = vector.extract_strided_slice %201 {offsets = [0, 160], sizes = [2, 32], strides = [1, 1]} : vector<2x256xf32> to vector<2x32xf32>
    %209 = vector.extract_strided_slice %202 {offsets = [0, 192], sizes = [2, 32], strides = [1, 1]} : vector<2x256xf32> to vector<2x32xf32>
    %210 = vector.extract_strided_slice %201 {offsets = [0, 224], sizes = [2, 32], strides = [1, 1]} : vector<2x256xf32> to vector<2x32xf32>
    %211 = arith.mulf %204, %180 : vector<2x32xf32>
    %212 = arith.mulf %203, %205 : vector<2x32xf32>
    %213 = arith.addf %211, %212 : vector<2x32xf32>
    %214 = arith.mulf %208, %183 : vector<2x32xf32>
    %215 = arith.mulf %207, %209 : vector<2x32xf32>
    %216 = arith.addf %214, %215 : vector<2x32xf32>
    %217 = math.tanh %213 : vector<2x32xf32>
    %218 = arith.mulf %206, %217 : vector<2x32xf32>
    %219 = math.tanh %216 : vector<2x32xf32>
    %220 = arith.mulf %210, %219 : vector<2x32xf32>
    %221 = tpu.concatenate %218, %220 in 1 : vector<2x32xf32>, vector<2x32xf32> -> vector<2x64xf32>
    %c3 = arith.constant 3 : index
    %c0_43 = arith.constant 0 : index
    %c0_44 = arith.constant 0 : index
    %222 = vector.load %arg19[%c3, %c0_43, %c0_44] : memref<7x2x64xf32, #tpu.memory_space<vmem>>, vector<1x2x32xf32>
    %223 = vector.shape_cast %222 : vector<1x2x32xf32> to vector<2x32xf32>
    %224 = vector.shape_cast %218 : vector<2x32xf32> to vector<1x2x32xf32>
    tpu.vector_store %arg19[%c3, %c0_43, %c0_44], %224 {strides = array<i32>} : memref<7x2x64xf32, #tpu.memory_space<vmem>>, vector<1x2x32xf32>,
    %c3_45 = arith.constant 3 : index
    %c0_46 = arith.constant 0 : index
    %c32_47 = arith.constant 32 : index
    %225 = vector.load %arg19[%c3_45, %c0_46, %c32_47] : memref<7x2x64xf32, #tpu.memory_space<vmem>>, vector<1x2x32xf32>
    %226 = vector.shape_cast %225 : vector<1x2x32xf32> to vector<2x32xf32>
    %227 = vector.shape_cast %220 : vector<2x32xf32> to vector<1x2x32xf32>
    tpu.vector_store %arg19[%c3_45, %c0_46, %c32_47], %227 {strides = array<i32>} : memref<7x2x64xf32, #tpu.memory_space<vmem>>, vector<1x2x32xf32>,
    %cst_48 = arith.constant dense<0.000000e+00> : vector<2x256xf32>
    %228 = tpu.matmul %221, %92, %cst_48 {dimension_numbers = #tpu.dot_dimension_numbers<[1], [0], [0], [1], [0, 0, 1, 1], [], []>} : vector<2x64xf32>, vector<64x256xf32>, vector<2x256xf32> -> vector<2x256xf32>
    %229 = arith.addf %81, %228 : vector<2x256xf32>
    %230 = arith.negf %229 : vector<2x256xf32>
    %231 = math.exp %230 : vector<2x256xf32>
    %cst_49 = arith.constant 1.000000e+00 : f32
    %232 = vector.broadcast %cst_49 : f32 to vector<2x256xf32>
    %233 = arith.addf %232, %231 : vector<2x256xf32>
    %234 = arith.divf %232, %233 : vector<2x256xf32>
    %235 = math.tanh %229 : vector<2x256xf32>
    %236 = vector.extract_strided_slice %234 {offsets = [0, 0], sizes = [2, 32], strides = [1, 1]} : vector<2x256xf32> to vector<2x32xf32>
    %237 = vector.extract_strided_slice %234 {offsets = [0, 32], sizes = [2, 32], strides = [1, 1]} : vector<2x256xf32> to vector<2x32xf32>
    %238 = vector.extract_strided_slice %235 {offsets = [0, 64], sizes = [2, 32], strides = [1, 1]} : vector<2x256xf32> to vector<2x32xf32>
    %239 = vector.extract_strided_slice %234 {offsets = [0, 96], sizes = [2, 32], strides = [1, 1]} : vector<2x256xf32> to vector<2x32xf32>
    %240 = vector.extract_strided_slice %234 {offsets = [0, 128], sizes = [2, 32], strides = [1, 1]} : vector<2x256xf32> to vector<2x32xf32>
    %241 = vector.extract_strided_slice %234 {offsets = [0, 160], sizes = [2, 32], strides = [1, 1]} : vector<2x256xf32> to vector<2x32xf32>
    %242 = vector.extract_strided_slice %235 {offsets = [0, 192], sizes = [2, 32], strides = [1, 1]} : vector<2x256xf32> to vector<2x32xf32>
    %243 = vector.extract_strided_slice %234 {offsets = [0, 224], sizes = [2, 32], strides = [1, 1]} : vector<2x256xf32> to vector<2x32xf32>
    %244 = arith.mulf %237, %213 : vector<2x32xf32>
    %245 = arith.mulf %236, %238 : vector<2x32xf32>
    %246 = arith.addf %244, %245 : vector<2x32xf32>
    %247 = arith.mulf %241, %216 : vector<2x32xf32>
    %248 = arith.mulf %240, %242 : vector<2x32xf32>
    %249 = arith.addf %247, %248 : vector<2x32xf32>
    %250 = math.tanh %246 : vector<2x32xf32>
    %251 = arith.mulf %239, %250 : vector<2x32xf32>
    %252 = math.tanh %249 : vector<2x32xf32>
    %253 = arith.mulf %243, %252 : vector<2x32xf32>
    %254 = tpu.concatenate %251, %253 in 1 : vector<2x32xf32>, vector<2x32xf32> -> vector<2x64xf32>
    %c4_50 = arith.constant 4 : index
    %c0_51 = arith.constant 0 : index
    %c0_52 = arith.constant 0 : index
    %255 = vector.load %arg19[%c4_50, %c0_51, %c0_52] : memref<7x2x64xf32, #tpu.memory_space<vmem>>, vector<1x2x32xf32>
    %256 = vector.shape_cast %255 : vector<1x2x32xf32> to vector<2x32xf32>
    %257 = vector.shape_cast %251 : vector<2x32xf32> to vector<1x2x32xf32>
    tpu.vector_store %arg19[%c4_50, %c0_51, %c0_52], %257 {strides = array<i32>} : memref<7x2x64xf32, #tpu.memory_space<vmem>>, vector<1x2x32xf32>,
    %c2_53 = arith.constant 2 : index
    %c0_54 = arith.constant 0 : index
    %c32_55 = arith.constant 32 : index
    %258 = vector.load %arg19[%c2_53, %c0_54, %c32_55] : memref<7x2x64xf32, #tpu.memory_space<vmem>>, vector<1x2x32xf32>
    %259 = vector.shape_cast %258 : vector<1x2x32xf32> to vector<2x32xf32>
    %260 = vector.shape_cast %253 : vector<2x32xf32> to vector<1x2x32xf32>
    tpu.vector_store %arg19[%c2_53, %c0_54, %c32_55], %260 {strides = array<i32>} : memref<7x2x64xf32, #tpu.memory_space<vmem>>, vector<1x2x32xf32>,
    %cst_56 = arith.constant dense<0.000000e+00> : vector<2x256xf32>
    %261 = tpu.matmul %254, %92, %cst_56 {dimension_numbers = #tpu.dot_dimension_numbers<[1], [0], [0], [1], [0, 0, 1, 1], [], []>} : vector<2x64xf32>, vector<64x256xf32>, vector<2x256xf32> -> vector<2x256xf32>
    %262 = arith.addf %86, %261 : vector<2x256xf32>
    %263 = arith.negf %262 : vector<2x256xf32>
    %264 = math.exp %263 : vector<2x256xf32>
    %cst_57 = arith.constant 1.000000e+00 : f32
    %265 = vector.broadcast %cst_57 : f32 to vector<2x256xf32>
    %266 = arith.addf %265, %264 : vector<2x256xf32>
    %267 = arith.divf %265, %266 : vector<2x256xf32>
    %268 = math.tanh %262 : vector<2x256xf32>
    %269 = vector.extract_strided_slice %267 {offsets = [0, 0], sizes = [2, 32], strides = [1, 1]} : vector<2x256xf32> to vector<2x32xf32>
    %270 = vector.extract_strided_slice %267 {offsets = [0, 32], sizes = [2, 32], strides = [1, 1]} : vector<2x256xf32> to vector<2x32xf32>
    %271 = vector.extract_strided_slice %268 {offsets = [0, 64], sizes = [2, 32], strides = [1, 1]} : vector<2x256xf32> to vector<2x32xf32>
    %272 = vector.extract_strided_slice %267 {offsets = [0, 96], sizes = [2, 32], strides = [1, 1]} : vector<2x256xf32> to vector<2x32xf32>
    %273 = vector.extract_strided_slice %267 {offsets = [0, 128], sizes = [2, 32], strides = [1, 1]} : vector<2x256xf32> to vector<2x32xf32>
    %274 = vector.extract_strided_slice %267 {offsets = [0, 160], sizes = [2, 32], strides = [1, 1]} : vector<2x256xf32> to vector<2x32xf32>
    %275 = vector.extract_strided_slice %268 {offsets = [0, 192], sizes = [2, 32], strides = [1, 1]} : vector<2x256xf32> to vector<2x32xf32>
    %276 = vector.extract_strided_slice %267 {offsets = [0, 224], sizes = [2, 32], strides = [1, 1]} : vector<2x256xf32> to vector<2x32xf32>
    %277 = arith.mulf %270, %246 : vector<2x32xf32>
    %278 = arith.mulf %269, %271 : vector<2x32xf32>
    %279 = arith.addf %277, %278 : vector<2x32xf32>
    %280 = arith.mulf %274, %249 : vector<2x32xf32>
    %281 = arith.mulf %273, %275 : vector<2x32xf32>
    %282 = arith.addf %280, %281 : vector<2x32xf32>
    %283 = math.tanh %279 : vector<2x32xf32>
    %284 = arith.mulf %272, %283 : vector<2x32xf32>
    %285 = math.tanh %282 : vector<2x32xf32>
    %286 = arith.mulf %276, %285 : vector<2x32xf32>
    %287 = tpu.concatenate %284, %286 in 1 : vector<2x32xf32>, vector<2x32xf32> -> vector<2x64xf32>
    %c5_58 = arith.constant 5 : index
    %c0_59 = arith.constant 0 : index
    %c0_60 = arith.constant 0 : index
    %288 = vector.load %arg19[%c5_58, %c0_59, %c0_60] : memref<7x2x64xf32, #tpu.memory_space<vmem>>, vector<1x2x32xf32>
    %289 = vector.shape_cast %288 : vector<1x2x32xf32> to vector<2x32xf32>
    %290 = vector.shape_cast %284 : vector<2x32xf32> to vector<1x2x32xf32>
    tpu.vector_store %arg19[%c5_58, %c0_59, %c0_60], %290 {strides = array<i32>} : memref<7x2x64xf32, #tpu.memory_space<vmem>>, vector<1x2x32xf32>,
    %c1_61 = arith.constant 1 : index
    %c0_62 = arith.constant 0 : index
    %c32_63 = arith.constant 32 : index
    %291 = vector.load %arg19[%c1_61, %c0_62, %c32_63] : memref<7x2x64xf32, #tpu.memory_space<vmem>>, vector<1x2x32xf32>
    %292 = vector.shape_cast %291 : vector<1x2x32xf32> to vector<2x32xf32>
    %293 = vector.shape_cast %286 : vector<2x32xf32> to vector<1x2x32xf32>
    tpu.vector_store %arg19[%c1_61, %c0_62, %c32_63], %293 {strides = array<i32>} : memref<7x2x64xf32, #tpu.memory_space<vmem>>, vector<1x2x32xf32>,
    %cst_64 = arith.constant dense<0.000000e+00> : vector<2x256xf32>
    %294 = tpu.matmul %287, %92, %cst_64 {dimension_numbers = #tpu.dot_dimension_numbers<[1], [0], [0], [1], [0, 0, 1, 1], [], []>} : vector<2x64xf32>, vector<64x256xf32>, vector<2x256xf32> -> vector<2x256xf32>
    %295 = arith.addf %91, %294 : vector<2x256xf32>
    %296 = arith.negf %295 : vector<2x256xf32>
    %297 = math.exp %296 : vector<2x256xf32>
    %cst_65 = arith.constant 1.000000e+00 : f32
    %298 = vector.broadcast %cst_65 : f32 to vector<2x256xf32>
    %299 = arith.addf %298, %297 : vector<2x256xf32>
    %300 = arith.divf %298, %299 : vector<2x256xf32>
    %301 = math.tanh %295 : vector<2x256xf32>
    %302 = vector.extract_strided_slice %300 {offsets = [0, 0], sizes = [2, 32], strides = [1, 1]} : vector<2x256xf32> to vector<2x32xf32>
    %303 = vector.extract_strided_slice %300 {offsets = [0, 32], sizes = [2, 32], strides = [1, 1]} : vector<2x256xf32> to vector<2x32xf32>
    %304 = vector.extract_strided_slice %301 {offsets = [0, 64], sizes = [2, 32], strides = [1, 1]} : vector<2x256xf32> to vector<2x32xf32>
    %305 = vector.extract_strided_slice %300 {offsets = [0, 96], sizes = [2, 32], strides = [1, 1]} : vector<2x256xf32> to vector<2x32xf32>
    %306 = vector.extract_strided_slice %300 {offsets = [0, 128], sizes = [2, 32], strides = [1, 1]} : vector<2x256xf32> to vector<2x32xf32>
    %307 = vector.extract_strided_slice %300 {offsets = [0, 160], sizes = [2, 32], strides = [1, 1]} : vector<2x256xf32> to vector<2x32xf32>
    %308 = vector.extract_strided_slice %301 {offsets = [0, 192], sizes = [2, 32], strides = [1, 1]} : vector<2x256xf32> to vector<2x32xf32>
    %309 = vector.extract_strided_slice %300 {offsets = [0, 224], sizes = [2, 32], strides = [1, 1]} : vector<2x256xf32> to vector<2x32xf32>
    %310 = arith.mulf %303, %279 : vector<2x32xf32>
    %311 = arith.mulf %302, %304 : vector<2x32xf32>
    %312 = arith.addf %310, %311 : vector<2x32xf32>
    %313 = arith.mulf %307, %282 : vector<2x32xf32>
    %314 = arith.mulf %306, %308 : vector<2x32xf32>
    %315 = arith.addf %313, %314 : vector<2x32xf32>
    %316 = math.tanh %312 : vector<2x32xf32>
    %317 = arith.mulf %305, %316 : vector<2x32xf32>
    %318 = math.tanh %315 : vector<2x32xf32>
    %319 = arith.mulf %309, %318 : vector<2x32xf32>
    %c6_66 = arith.constant 6 : index
    %c0_67 = arith.constant 0 : index
    %c0_68 = arith.constant 0 : index
    %320 = vector.load %arg19[%c6_66, %c0_67, %c0_68] : memref<7x2x64xf32, #tpu.memory_space<vmem>>, vector<1x2x32xf32>
    %321 = vector.shape_cast %320 : vector<1x2x32xf32> to vector<2x32xf32>
    %322 = vector.shape_cast %317 : vector<2x32xf32> to vector<1x2x32xf32>
    tpu.vector_store %arg19[%c6_66, %c0_67, %c0_68], %322 {strides = array<i32>} : memref<7x2x64xf32, #tpu.memory_space<vmem>>, vector<1x2x32xf32>,
    %c0_69 = arith.constant 0 : index
    %c0_70 = arith.constant 0 : index
    %c32_71 = arith.constant 32 : index
    %323 = vector.load %arg19[%c0_69, %c0_70, %c32_71] : memref<7x2x64xf32, #tpu.memory_space<vmem>>, vector<1x2x32xf32>
    %324 = vector.shape_cast %323 : vector<1x2x32xf32> to vector<2x32xf32>
    %325 = vector.shape_cast %319 : vector<2x32xf32> to vector<1x2x32xf32>
    tpu.vector_store %arg19[%c0_69, %c0_70, %c32_71], %325 {strides = array<i32>} : memref<7x2x64xf32, #tpu.memory_space<vmem>>, vector<1x2x32xf32>,
    %326 = vector.shape_cast %317 : vector<2x32xf32> to vector<1x2x32xf32>
    %327 = vector.shape_cast %319 : vector<2x32xf32> to vector<1x2x32xf32>
    %328 = tpu.concatenate %326, %327 in 0 : vector<1x2x32xf32>, vector<1x2x32xf32> -> vector<2x2x32xf32>
    %329 = vector.shape_cast %328 : vector<2x2x32xf32> to vector<2x64xf32>
    %c0_72 = arith.constant 0 : index
    %c0_73 = arith.constant 0 : index
    %c0_74 = arith.constant 0 : index
    %330 = vector.load %arg19[%c0_72, %c0_73, %c0_74] : memref<7x2x64xf32, #tpu.memory_space<vmem>>, vector<7x2x64xf32>
    %331 = vector.shape_cast %330 : vector<7x2x64xf32> to vector<14x64xf32>
    %c0_75 = arith.constant 0 : index
    %c0_76 = arith.constant 0 : index
    %332 = vector.load %arg8[%c0_75, %c0_76] : memref<64x64xf32, #tpu.memory_space<vmem>>, vector<64x64xf32>
    %cst_77 = arith.constant dense<0.000000e+00> : vector<14x64xf32>
    %333 = tpu.matmul %331, %332, %cst_77 {dimension_numbers = #tpu.dot_dimension_numbers<[1], [0], [0], [1], [0, 0, 1, 1], [], []>} : vector<14x64xf32>, vector<64x64xf32>, vector<14x64xf32> -> vector<14x64xf32>
    %c0_78 = arith.constant 0 : index
    %c0_79 = arith.constant 0 : index
    %334 = vector.load %arg9[%c0_78, %c0_79] : memref<1x64xf32, #tpu.memory_space<vmem>>, vector<1x64xf32>
    %335 = vector.broadcast %334 : vector<1x64xf32> to vector<14x64xf32>
    %336 = arith.addf %333, %335 : vector<14x64xf32>
    %337 = vector.shape_cast %336 : vector<14x64xf32> to vector<7x2x64xf32>
    %c0_80 = arith.constant 0 : index
    %c0_81 = arith.constant 0 : index
    %338 = vector.load %arg10[%c0_80, %c0_81] : memref<64x64xf32, #tpu.memory_space<vmem>>, vector<64x64xf32>
    %cst_82 = arith.constant dense<0.000000e+00> : vector<2x64xf32>
    %339 = tpu.matmul %329, %338, %cst_82 {dimension_numbers = #tpu.dot_dimension_numbers<[1], [0], [0], [1], [0, 0, 1, 1], [], []>} : vector<2x64xf32>, vector<64x64xf32>, vector<2x64xf32> -> vector<2x64xf32>
    %c0_83 = arith.constant 0 : index
    %c0_84 = arith.constant 0 : index
    %340 = vector.load %arg11[%c0_83, %c0_84] : memref<1x64xf32, #tpu.memory_space<vmem>>, vector<1x64xf32>
    %341 = vector.broadcast %340 : vector<1x64xf32> to vector<2x64xf32>
    %342 = arith.addf %339, %341 : vector<2x64xf32>
    %343 = vector.shape_cast %342 : vector<2x64xf32> to vector<1x2x64xf32>
    %344 = vector.broadcast %343 : vector<1x2x64xf32> to vector<7x2x64xf32>
    %345 = arith.addf %337, %344 : vector<7x2x64xf32>
    %346 = math.tanh %345 : vector<7x2x64xf32>
    %347 = vector.shape_cast %346 : vector<7x2x64xf32> to vector<14x64xf32>
    %c0_85 = arith.constant 0 : index
    %c0_86 = arith.constant 0 : index
    %348 = vector.load %arg12[%c0_85, %c0_86] : memref<64x5xf32, #tpu.memory_space<vmem>>, vector<64x5xf32>
    %cst_87 = arith.constant dense<0.000000e+00> : vector<14x5xf32>
    %349 = tpu.matmul %347, %348, %cst_87 {dimension_numbers = #tpu.dot_dimension_numbers<[1], [0], [0], [1], [0, 0, 1, 1], [], []>} : vector<14x64xf32>, vector<64x5xf32>, vector<14x5xf32> -> vector<14x5xf32>
    %c0_88 = arith.constant 0 : index
    %c0_89 = arith.constant 0 : index
    %350 = vector.load %arg13[%c0_88, %c0_89] : memref<1x5xf32, #tpu.memory_space<vmem>>, vector<1x5xf32>
    %351 = vector.broadcast %350 : vector<1x5xf32> to vector<14x5xf32>
    %352 = arith.addf %349, %351 : vector<14x5xf32>
    %353 = vector.shape_cast %352 : vector<14x5xf32> to vector<7x2x5xf32>
    %cst_90 = arith.constant dense<0xFF800000> : vector<2x5xf32>
    %354 = vector.multi_reduction <maximumf>, %353, %cst_90 [0] : vector<7x2x5xf32> to vector<2x5xf32>
    %355 = vector.shape_cast %354 : vector<2x5xf32> to vector<1x2x5xf32>
    %356 = vector.broadcast %355 : vector<1x2x5xf32> to vector<7x2x5xf32>
    %357 = arith.subf %353, %356 : vector<7x2x5xf32>
    %358 = math.exp %357 : vector<7x2x5xf32>
    %cst_91 = arith.constant dense<0.000000e+00> : vector<2x5xf32>
    %359 = vector.multi_reduction <add>, %358, %cst_91 [0] : vector<7x2x5xf32> to vector<2x5xf32>
    %360 = vector.shape_cast %359 : vector<2x5xf32> to vector<1x2x5xf32>
    %361 = tpu.reciprocal %360 {approx = true} : vector<1x2x5xf32> -> vector<1x2x5xf32>
    %362 = vector.broadcast %361 : vector<1x2x5xf32> to vector<7x2x5xf32>
    %363 = arith.mulf %358, %362 : vector<7x2x5xf32>
    "tpu.trace_start"() <{level = 10 : i32, message = "lbt,lbd->btd"}> : () -> ()
    %cst_92 = arith.constant dense<0.000000e+00> : vector<2x5x64xf32>
    %364 = tpu.matmul %363, %330, %cst_92 {dimension_numbers = #tpu.dot_dimension_numbers<[0], [0], [2], [2], [0, 1, 0, 2, 1, 2], [1], [1]>} : vector<7x2x5xf32>, vector<7x2x64xf32>, vector<2x5x64xf32> -> vector<2x5x64xf32>
    "tpu.trace_stop"() : () -> ()
    %365 = vector.shape_cast %364 : vector<2x5x64xf32> to vector<2x320xf32>
    %c0_93 = arith.constant 0 : index
    %c0_94 = arith.constant 0 : index
    %366 = vector.load %arg14[%c0_93, %c0_94] : memref<320x320xf32, #tpu.memory_space<vmem>>, vector<320x320xf32>
    %cst_95 = arith.constant dense<0.000000e+00> : vector<2x320xf32>
    %367 = tpu.matmul %365, %366, %cst_95 {dimension_numbers = #tpu.dot_dimension_numbers<[1], [0], [0], [1], [0, 0, 1, 1], [], []>} : vector<2x320xf32>, vector<320x320xf32>, vector<2x320xf32> -> vector<2x320xf32>
    %c0_96 = arith.constant 0 : index
    %c0_97 = arith.constant 0 : index
    %368 = vector.load %arg15[%c0_96, %c0_97] : memref<1x320xf32, #tpu.memory_space<vmem>>, vector<1x320xf32>
    %369 = vector.broadcast %368 : vector<1x320xf32> to vector<2x320xf32>
    %370 = arith.addf %367, %369 : vector<2x320xf32>
    %cst_98 = arith.constant 0.000000e+00 : f32
    %371 = vector.broadcast %cst_98 : f32 to vector<2x320xf32>
    %372 = arith.maximumf %370, %371 : vector<2x320xf32>
    %c0_99 = arith.constant 0 : index
    %c0_100 = arith.constant 0 : index
    %373 = vector.load %arg16[%c0_99, %c0_100] : memref<320x5xf32, #tpu.memory_space<vmem>>, vector<320x5xf32>
    %cst_101 = arith.constant dense<0.000000e+00> : vector<2x5xf32>
    %374 = tpu.matmul %372, %373, %cst_101 {dimension_numbers = #tpu.dot_dimension_numbers<[1], [0], [0], [1], [0, 0, 1, 1], [], []>} : vector<2x320xf32>, vector<320x5xf32>, vector<2x5xf32> -> vector<2x5xf32>
    %c0_102 = arith.constant 0 : index
    %c0_103 = arith.constant 0 : index
    %375 = vector.load %arg17[%c0_102, %c0_103] : memref<1x5xf32, #tpu.memory_space<vmem>>, vector<1x5xf32>
    %376 = vector.broadcast %375 : vector<1x5xf32> to vector<2x5xf32>
    %377 = arith.addf %374, %376 : vector<2x5xf32>
    %c0_104 = arith.constant 0 : index
    %c0_105 = arith.constant 0 : index
    %378 = vector.load %arg18[%c0_104, %c0_105] : memref<2x5xf32, #tpu.memory_space<vmem>>, vector<2x5xf32>
    tpu.vector_store %arg18[%c0_104, %c0_105], %377 {strides = array<i32>} : memref<2x5xf32, #tpu.memory_space<vmem>>, vector<2x5xf32>,
    return
  }
}

</mosaic_0001>

<llo_original>
// kernel: tfnet3_forward.1
$region0: #{tfnet3_forward.1}
  #allocation0 [shape = 'u32[]', space=smem, size = 0x4, offset = 0x4, fixed_abs, tag = 'smem constant byte address 0x4 - core index']
  #allocation1 [shape = 'u32[144,128]{1,0:T(1,128)}', space=vmem, size = 0x12000, scoped, tag = 'internal scratch']
  #allocation2 [shape = 'f32[7,2,64]{2,1,0:T(2,128)}', space=vmem, size = 0x1c00, scoped, tag = 'scratch operand']
  %s0 = inlined_call_operand.vmem [shape: f32[2,63,4], index: 0, kind: input, shape index: {}]
  %s1 = inlined_call_operand.vmem [shape: f32[32,16], index: 1, kind: input, shape index: {}]
  %s2 = inlined_call_operand.vmem [shape: f32[1,16], index: 2, kind: input, shape index: {}]
  %s3 = inlined_call_operand.vmem [shape: f32[128,32], index: 3, kind: input, shape index: {}]
  %s4 = inlined_call_operand.vmem [shape: f32[1,32], index: 4, kind: input, shape index: {}]
  %s5 = inlined_call_operand.vmem [shape: f32[32,256], index: 5, kind: input, shape index: {}]
  %s6 = inlined_call_operand.vmem [shape: f32[1,256], index: 6, kind: input, shape index: {}]
  %s7 = inlined_call_operand.vmem [shape: f32[64,256], index: 7, kind: input, shape index: {}]
  %s8 = inlined_call_operand.vmem [shape: f32[64,64], index: 8, kind: input, shape index: {}]
  %s9 = inlined_call_operand.vmem [shape: f32[1,64], index: 9, kind: input, shape index: {}]
  %s10 = inlined_call_operand.vmem [shape: f32[64,64], index: 10, kind: input, shape index: {}]
  %s11 = inlined_call_operand.vmem [shape: f32[1,64], index: 11, kind: input, shape index: {}]
  %s12 = inlined_call_operand.vmem [shape: f32[64,5], index: 12, kind: input, shape index: {}]
  %s13 = inlined_call_operand.vmem [shape: f32[1,5], index: 13, kind: input, shape index: {}]
  %s14 = inlined_call_operand.hbm [shape: f32[320,320], index: 14, kind: input, shape index: {}]
  %s15 = inlined_call_operand.vmem [shape: f32[1,320], index: 15, kind: input, shape index: {}]
  %s16 = inlined_call_operand.vmem [shape: f32[320,5], index: 16, kind: input, shape index: {}]
  %s17 = inlined_call_operand.vmem [shape: f32[1,5], index: 17, kind: input, shape index: {}]
  %s18 = inlined_call_operand.hbm [shape: f32[2,5], index: 18, kind: output, shape index: {}]
  %s19 = sld [smem:[#allocation0]]
  $region86: #{tfnet3_forward.1} parent=0
    _
  %s21 = ssub.s32 1, %s19
  %s22 = scalar_select 0, %s21, %s19
  $region1: #{tfnet3_forward.1} parent=0
    #allocation3 [shape = 'u8[491520]{0}', space=vmem, size = 0x78000, scoped, tag = 'input window, operand 14, single buffered']
    #allocation4 [shape = 's32[1]{0}', space=sflag, size = 0x4, scoped, tag = 'scoped memory for tfnet3_forward.1']
    #allocation5 [shape = 's32[1]{0}', space=sflag, size = 0x4, scoped, tag = 'scoped memory for tfnet3_forward.1']
    #allocation6 [shape = 'u8[1024]{0}', space=vmem, size = 0x400, scoped, tag = 'output window, operand 0, single buffered']
    %23 = vsyncpa [#allocation4], 0
    %24 = vsyncpa [#allocation5], 0
    // Predicated region
    $region2: #{tfnet3_forward.1} parent=1 // pred_check
      _
    $region3: #{tfnet3_forward.1} parent=1 // pred_check_branch
      %26 = sbr.rel (0) target = $region5
    $region4: #{tfnet3_forward.1} parent=1 // pred_region
      _
    $region5: #{tfnet3_forward.1} parent=1 // pred_fallthru
      _
    // Predicated region
    $region6: #{tfnet3_forward.1} parent=1 // pred_check
      _
    $region7: #{tfnet3_forward.1} parent=1 // pred_check_branch
      %28 = sbr.rel (0) target = $region9
    $region8: #{tfnet3_forward.1} parent=1 // pred_region
      _
    $region9: #{tfnet3_forward.1} parent=1 // pred_fallthru
      _
    // Predicated region
    $region10: #{tfnet3_forward.1} parent=1 // pred_check
      _
    $region11: #{tfnet3_forward.1} parent=1 // pred_check_branch
      %30 = sbr.rel (0) target = $region13
    $region12: #{tfnet3_forward.1} parent=1 // pred_region
      _
    $region13: #{tfnet3_forward.1} parent=1 // pred_fallthru
      _
    // Predicated region
    $region14: #{tfnet3_forward.1} parent=1 // pred_check
      _
    $region15: #{tfnet3_forward.1} parent=1 // pred_check_branch
      %32 = sbr.rel (0) target = $region17
    $region16: #{tfnet3_forward.1} parent=1 // pred_region
      _
    $region17: #{tfnet3_forward.1} parent=1 // pred_fallthru
      _
    // Predicated region
    $region18: #{tfnet3_forward.1} parent=1 // pred_check
      _
    $region19: #{tfnet3_forward.1} parent=1 // pred_check_branch
      %34 = sbr.rel (0) target = $region21
    $region20: #{tfnet3_forward.1} parent=1 // pred_region
      _
    $region21: #{tfnet3_forward.1} parent=1 // pred_fallthru
      _
    // Predicated region
    $region22: #{tfnet3_forward.1} parent=1 // pred_check
      _
    $region23: #{tfnet3_forward.1} parent=1 // pred_check_branch
      %36 = sbr.rel (0) target = $region25
    $region24: #{tfnet3_forward.1} parent=1 // pred_region
      _
    $region25: #{tfnet3_forward.1} parent=1 // pred_fallthru
      _
    // Predicated region
    $region26: #{tfnet3_forward.1} parent=1 // pred_check
      _
    $region27: #{tfnet3_forward.1} parent=1 // pred_check_branch
      %38 = sbr.rel (0) target = $region29
    $region28: #{tfnet3_forward.1} parent=1 // pred_region
      _
    $region29: #{tfnet3_forward.1} parent=1 // pred_fallthru
      _
    // Predicated region
    $region30: #{tfnet3_forward.1} parent=1 // pred_check
      _
    $region31: #{tfnet3_forward.1} parent=1 // pred_check_branch
      %40 = sbr.rel (0) target = $region33
    $region32: #{tfnet3_forward.1} parent=1 // pred_region
      _
    $region33: #{tfnet3_forward.1} parent=1 // pred_fallthru
      _
    // Predicated region
    $region34: #{tfnet3_forward.1} parent=1 // pred_check
      _
    $region35: #{tfnet3_forward.1} parent=1 // pred_check_branch
      %42 = sbr.rel (0) target = $region37
    $region36: #{tfnet3_forward.1} parent=1 // pred_region
      _
    $region37: #{tfnet3_forward.1} parent=1 // pred_fallthru
      _
    // Predicated region
    $region38: #{tfnet3_forward.1} parent=1 // pred_check
      _
    $region39: #{tfnet3_forward.1} parent=1 // pred_check_branch
      %44 = sbr.rel (0) target = $region41
    $region40: #{tfnet3_forward.1} parent=1 // pred_region
      _
    $region41: #{tfnet3_forward.1} parent=1 // pred_fallthru
      _
    // Predicated region
    $region42: #{tfnet3_forward.1} parent=1 // pred_check
      _
    $region43: #{tfnet3_forward.1} parent=1 // pred_check_branch
      %46 = sbr.rel (0) target = $region45
    $region44: #{tfnet3_forward.1} parent=1 // pred_region
      _
    $region45: #{tfnet3_forward.1} parent=1 // pred_fallthru
      _
    // Predicated region
    $region46: #{tfnet3_forward.1} parent=1 // pred_check
      _
    $region47: #{tfnet3_forward.1} parent=1 // pred_check_branch
      %48 = sbr.rel (0) target = $region49
    $region48: #{tfnet3_forward.1} parent=1 // pred_region
      _
    $region49: #{tfnet3_forward.1} parent=1 // pred_fallthru
      _
    // Predicated region
    $region50: #{tfnet3_forward.1} parent=1 // pred_check
      _
    $region51: #{tfnet3_forward.1} parent=1 // pred_check_branch
      %50 = sbr.rel (0) target = $region53
    $region52: #{tfnet3_forward.1} parent=1 // pred_region
      _
    $region53: #{tfnet3_forward.1} parent=1 // pred_fallthru
      _
    // Predicated region
    $region54: #{tfnet3_forward.1} parent=1 // pred_check
      _
    $region55: #{tfnet3_forward.1} parent=1 // pred_check_branch
      %52 = sbr.rel (0) target = $region57
    $region56: #{tfnet3_forward.1} parent=1 // pred_region
      _
    $region57: #{tfnet3_forward.1} parent=1 // pred_fallthru
      _
    // Predicated region
    $region58: #{tfnet3_forward.1} parent=1 // pred_check
      _
    $region59: #{tfnet3_forward.1} parent=1 // pred_check_branch
      %54 = sbr.rel (0) target = $region61
    $region60: #{tfnet3_forward.1} parent=1 // pred_region
      %s56 = ssub.s32 15360, 15360
      %57 = vsyncadd [#allocation4], %s56
      %s58 = sshll.u32 [#allocation3], 4
      %s59 = int_to_ptr.vmem [resolvable:$true] %s58
      %64 = dma.hbm_to_vmem [thread:$0]  %s14, 15360, %s59, [#allocation4], 384, 384, 24
    $region61: #{tfnet3_forward.1} parent=1 // pred_fallthru
      _
    // Predicated region
    $region62: #{tfnet3_forward.1} parent=1 // pred_check
      _
    $region63: #{tfnet3_forward.1} parent=1 // pred_check_branch
      %66 = sbr.rel (0) target = $region65
    $region64: #{tfnet3_forward.1} parent=1 // pred_region
      _
    $region65: #{tfnet3_forward.1} parent=1 // pred_fallthru
      _
    // Predicated region
    $region66: #{tfnet3_forward.1} parent=1 // pred_check
      _
    $region67: #{tfnet3_forward.1} parent=1 // pred_check_branch
      %68 = sbr.rel (0) target = $region69
    $region68: #{tfnet3_forward.1} parent=1 // pred_region
      _
    $region69: #{tfnet3_forward.1} parent=1 // pred_fallthru
      _
    // Predicated region
    $region70: #{tfnet3_forward.1} parent=1 // pred_check
      _
    $region71: #{tfnet3_forward.1} parent=1 // pred_check_branch
      %70 = sbr.rel (0) target = $region73
    $region72: #{tfnet3_forward.1} parent=1 // pred_region
      _
    $region73: #{tfnet3_forward.1} parent=1 // pred_fallthru
      _
    // Predicated region
    $region74: #{tfnet3_forward.1} parent=1 // pred_check
      _
    $region75: #{tfnet3_forward.1} parent=1 // pred_check_branch
      %72 = sbr.rel (0) target = $region77
    $region76: #{tfnet3_forward.1} parent=1 // pred_region
      %73 = dma.done [#allocation4], 15360
    $region77: #{tfnet3_forward.1} parent=1 // pred_fallthru
      _
    %v74 = vld [vmem:[%s0] sm:$0xff]
    %v75 = vld [vmem:[%s0 + $0x8] sm:$0xff]
    %v76 = vld [vmem:[%s0 + $0x10] sm:$0xff]
    %v77 = vld [vmem:[%s0 + $0x18] sm:$0xff]
    %v78 = vld [vmem:[%s0 + $0x20] sm:$0xff]
    %v79 = vld [vmem:[%s0 + $0x28] sm:$0xff]
    %v80 = vld [vmem:[%s0 + $0x30] sm:$0xff]
    %v81 = vld [vmem:[%s0 + $0x38] sm:$0x7f]
    %v82 = vld [vmem:[%s0 + $0x40] sm:$0xff]
    %v83 = vld [vmem:[%s0 + $0x48] sm:$0xff]
    %v84 = vld [vmem:[%s0 + $0x50] sm:$0xff]
    %v85 = vld [vmem:[%s0 + $0x58] sm:$0xff]
    %v86 = vld [vmem:[%s0 + $0x60] sm:$0xff]
    %v87 = vld [vmem:[%s0 + $0x68] sm:$0xff]
    %v88 = vld [vmem:[%s0 + $0x70] sm:$0xff]
    %v89 = vld [vmem:[%s0 + $0x78] sm:$0x7f]
    %v90 = vld [vmem:[%s1] sm:$0xff]
    %v91 = vld [vmem:[%s1 + $0x8] sm:$0xff]
    %v92 = vld [vmem:[%s1 + $0x10] sm:$0xff]
    %v93 = vld [vmem:[%s1 + $0x18] sm:$0xff]
    %v94 = vld [vmem:[%s2] sm:$0x1]
    %vm111 = vcmask 1046528
    %v112 = vrot.slane %v74, 1
    %v113 = vrot.slane %v75, 1
    %v114 = vsel %vm111, %v112, %v113
    %v115 = vrot.slane %v76, 1
    %v116 = vsel %vm111, %v113, %v115
    %v117 = vrot.slane %v77, 1
    %v118 = vsel %vm111, %v115, %v117
    %v119 = vrot.slane %v78, 1
    %v120 = vsel %vm111, %v117, %v119
    %v121 = vrot.slane %v79, 1
    %v122 = vsel %vm111, %v119, %v121
    %v123 = vrot.slane %v80, 1
    %v124 = vsel %vm111, %v121, %v123
    %v125 = vrot.slane %v81, 1
    %v126 = vsel %vm111, %v123, %v125
    %v127 = vrot.slane %v82, 1
    %v128 = vrot.slane %v83, 1
    %v129 = vsel %vm111, %v127, %v128
    %v130 = vrot.slane %v84, 1
    %v131 = vsel %vm111, %v128, %v130
    %v132 = vrot.slane %v85, 1
    %v133 = vsel %vm111, %v130, %v132
    %v134 = vrot.slane %v86, 1
    %v135 = vsel %vm111, %v132, %v134
    %v136 = vrot.slane %v87, 1
    %v137 = vsel %vm111, %v134, %v136
    %v138 = vrot.slane %v88, 1
    %v139 = vsel %vm111, %v136, %v138
    %v140 = vrot.slane %v89, 1
    %v141 = vsel %vm111, %v138, %v140
    %142 = vrot.lane.b32.xlu0 %v114, 4
    %v143 = vpop.permute.xlu0 %142
    %144 = vrot.lane.b32.xlu0 %v116, 4
    %v145 = vpop.permute.xlu0 %144
    %146 = vrot.lane.b32.xlu0 %v118, 4
    %v147 = vpop.permute.xlu0 %146
    %148 = vrot.lane.b32.xlu0 %v120, 4
    %v149 = vpop.permute.xlu0 %148
    %150 = vrot.lane.b32.xlu0 %v122, 4
    %v151 = vpop.permute.xlu0 %150
    %152 = vrot.lane.b32.xlu0 %v124, 4
    %v153 = vpop.permute.xlu0 %152
    %154 = vrot.lane.b32.xlu0 %v126, 4
    %v155 = vpop.permute.xlu0 %154
    %156 = vrot.lane.b32.xlu0 %v129, 4
    %v157 = vpop.permute.xlu0 %156
    %158 = vrot.lane.b32.xlu0 %v131, 4
    %v159 = vpop.permute.xlu0 %158
    %160 = vrot.lane.b32.xlu0 %v133, 4
    %v161 = vpop.permute.xlu0 %160
    %162 = vrot.lane.b32.xlu0 %v135, 4
    %v163 = vpop.permute.xlu0 %162
    %164 = vrot.lane.b32.xlu0 %v137, 4
    %v165 = vpop.permute.xlu0 %164
    %166 = vrot.lane.b32.xlu0 %v139, 4
    %v167 = vpop.permute.xlu0 %166
    %168 = vrot.lane.b32.xlu0 %v141, 4
    %v169 = vpop.permute.xlu0 %168
    %vm184 = vcmask 1045504
    %v185 = vrot.slane %v74, 2
    %v186 = vrot.slane %v75, 2
    %v187 = vsel %vm184, %v185, %v186
    %v188 = vrot.slane %v76, 2
    %v189 = vsel %vm184, %v186, %v188
    %v190 = vrot.slane %v77, 2
    %v191 = vsel %vm184, %v188, %v190
    %v192 = vrot.slane %v78, 2
    %v193 = vsel %vm184, %v190, %v192
    %v194 = vrot.slane %v79, 2
    %v195 = vsel %vm184, %v192, %v194
    %v196 = vrot.slane %v80, 2
    %v197 = vsel %vm184, %v194, %v196
    %v198 = vrot.slane %v81, 2
    %v199 = vsel %vm184, %v196, %v198
    %v200 = vrot.slane %v82, 2
    %v201 = vrot.slane %v83, 2
    %v202 = vsel %vm184, %v200, %v201
    %v203 = vrot.slane %v84, 2
    %v204 = vsel %vm184, %v201, %v203
    %v205 = vrot.slane %v85, 2
    %v206 = vsel %vm184, %v203, %v205
    %v207 = vrot.slane %v86, 2
    %v208 = vsel %vm184, %v205, %v207
    %v209 = vrot.slane %v87, 2
    %v210 = vsel %vm184, %v207, %v209
    %v211 = vrot.slane %v88, 2
    %v212 = vsel %vm184, %v209, %v211
    %v213 = vrot.slane %v89, 2
    %v214 = vsel %vm184, %v211, %v213
    %215 = vrot.lane.b32.xlu0 %v187, 8
    %v216 = vpop.permute.xlu0 %215
    %217 = vrot.lane.b32.xlu0 %v189, 8
    %v218 = vpop.permute.xlu0 %217
    %219 = vrot.lane.b32.xlu0 %v191, 8
    %v220 = vpop.permute.xlu0 %219
    %221 = vrot.lane.b32.xlu0 %v193, 8
    %v222 = vpop.permute.xlu0 %221
    %223 = vrot.lane.b32.xlu0 %v195, 8
    %v224 = vpop.permute.xlu0 %223
    %225 = vrot.lane.b32.xlu0 %v197, 8
    %v226 = vpop.permute.xlu0 %225
    %227 = vrot.lane.b32.xlu0 %v199, 8
    %v228 = vpop.permute.xlu0 %227
    %229 = vrot.lane.b32.xlu0 %v202, 8
    %v230 = vpop.permute.xlu0 %229
    %231 = vrot.lane.b32.xlu0 %v204, 8
    %v232 = vpop.permute.xlu0 %231
    %233 = vrot.lane.b32.xlu0 %v206, 8
    %v234 = vpop.permute.xlu0 %233
    %235 = vrot.lane.b32.xlu0 %v208, 8
    %v236 = vpop.permute.xlu0 %235
    %237 = vrot.lane.b32.xlu0 %v210, 8
    %v238 = vpop.permute.xlu0 %237
    %239 = vrot.lane.b32.xlu0 %v212, 8
    %v240 = vpop.permute.xlu0 %239
    %241 = vrot.lane.b32.xlu0 %v214, 8
    %v242 = vpop.permute.xlu0 %241
    %vm257 = vcmask 1044480
    %v258 = vrot.slane %v74, 3
    %v259 = vrot.slane %v75, 3
    %v260 = vsel %vm257, %v258, %v259
    %v261 = vrot.slane %v76, 3
    %v262 = vsel %vm257, %v259, %v261
    %v263 = vrot.slane %v77, 3
    %v264 = vsel %vm257, %v261, %v263
    %v265 = vrot.slane %v78, 3
    %v266 = vsel %vm257, %v263, %v265
    %v267 = vrot.slane %v79, 3
    %v268 = vsel %vm257, %v265, %v267
    %v269 = vrot.slane %v80, 3
    %v270 = vsel %vm257, %v267, %v269
    %v271 = vrot.slane %v81, 3
    %v272 = vsel %vm257, %v269, %v271
    %v273 = vrot.slane %v82, 3
    %v274 = vrot.slane %v83, 3
    %v275 = vsel %vm257, %v273, %v274
    %v276 = vrot.slane %v84, 3
    %v277 = vsel %vm257, %v274, %v276
    %v278 = vrot.slane %v85, 3
    %v279 = vsel %vm257, %v276, %v278
    %v280 = vrot.slane %v86, 3
    %v281 = vsel %vm257, %v278, %v280
    %v282 = vrot.slane %v87, 3
    %v283 = vsel %vm257, %v280, %v282
    %v284 = vrot.slane %v88, 3
    %v285 = vsel %vm257, %v282, %v284
    %v286 = vrot.slane %v89, 3
    %v287 = vsel %vm257, %v284, %v286
    %288 = vrot.lane.b32.xlu0 %v260, 12
    %v289 = vpop.permute.xlu0 %288
    %290 = vrot.lane.b32.xlu0 %v262, 12
    %v291 = vpop.permute.xlu0 %290
    %292 = vrot.lane.b32.xlu0 %v264, 12
    %v293 = vpop.permute.xlu0 %292
    %294 = vrot.lane.b32.xlu0 %v266, 12
    %v295 = vpop.permute.xlu0 %294
    %296 = vrot.lane.b32.xlu0 %v268, 12
    %v297 = vpop.permute.xlu0 %296
    %298 = vrot.lane.b32.xlu0 %v270, 12
    %v299 = vpop.permute.xlu0 %298
    %300 = vrot.lane.b32.xlu0 %v272, 12
    %v301 = vpop.permute.xlu0 %300
    %302 = vrot.lane.b32.xlu0 %v275, 12
    %v303 = vpop.permute.xlu0 %302
    %304 = vrot.lane.b32.xlu0 %v277, 12
    %v305 = vpop.permute.xlu0 %304
    %306 = vrot.lane.b32.xlu0 %v279, 12
    %v307 = vpop.permute.xlu0 %306
    %308 = vrot.lane.b32.xlu0 %v281, 12
    %v309 = vpop.permute.xlu0 %308
    %310 = vrot.lane.b32.xlu0 %v283, 12
    %v311 = vpop.permute.xlu0 %310
    %312 = vrot.lane.b32.xlu0 %v285, 12
    %v313 = vpop.permute.xlu0 %312
    %314 = vrot.lane.b32.xlu0 %v287, 12
    %v315 = vpop.permute.xlu0 %314
    %vm330 = vcmask 1043456
    %v331 = vrot.slane %v74, 4
    %v332 = vrot.slane %v75, 4
    %v333 = vsel %vm330, %v331, %v332
    %v334 = vrot.slane %v76, 4
    %v335 = vsel %vm330, %v332, %v334
    %v336 = vrot.slane %v77, 4
    %v337 = vsel %vm330, %v334, %v336
    %v338 = vrot.slane %v78, 4
    %v339 = vsel %vm330, %v336, %v338
    %v340 = vrot.slane %v79, 4
    %v341 = vsel %vm330, %v338, %v340
    %v342 = vrot.slane %v80, 4
    %v343 = vsel %vm330, %v340, %v342
    %v344 = vrot.slane %v81, 4
    %v345 = vsel %vm330, %v342, %v344
    %v346 = vrot.slane %v82, 4
    %v347 = vrot.slane %v83, 4
    %v348 = vsel %vm330, %v346, %v347
    %v349 = vrot.slane %v84, 4
    %v350 = vsel %vm330, %v347, %v349
    %v351 = vrot.slane %v85, 4
    %v352 = vsel %vm330, %v349, %v351
    %v353 = vrot.slane %v86, 4
    %v354 = vsel %vm330, %v351, %v353
    %v355 = vrot.slane %v87, 4
    %v356 = vsel %vm330, %v353, %v355
    %v357 = vrot.slane %v88, 4
    %v358 = vsel %vm330, %v355, %v357
    %v359 = vrot.slane %v89, 4
    %v360 = vsel %vm330, %v357, %v359
    %361 = vrot.lane.b32.xlu0 %v333, 16
    %v362 = vpop.permute.xlu0 %361
    %363 = vrot.lane.b32.xlu0 %v335, 16
    %v364 = vpop.permute.xlu0 %363
    %365 = vrot.lane.b32.xlu0 %v337, 16
    %v366 = vpop.permute.xlu0 %365
    %367 = vrot.lane.b32.xlu0 %v339, 16
    %v368 = vpop.permute.xlu0 %367
    %369 = vrot.lane.b32.xlu0 %v341, 16
    %v370 = vpop.permute.xlu0 %369
    %371 = vrot.lane.b32.xlu0 %v343, 16
    %v372 = vpop.permute.xlu0 %371
    %373 = vrot.lane.b32.xlu0 %v345, 16
    %v374 = vpop.permute.xlu0 %373
    %375 = vrot.lane.b32.xlu0 %v348, 16
    %v376 = vpop.permute.xlu0 %375
    %377 = vrot.lane.b32.xlu0 %v350, 16
    %v378 = vpop.permute.xlu0 %377
    %379 = vrot.lane.b32.xlu0 %v352, 16
    %v380 = vpop.permute.xlu0 %379
    %381 = vrot.lane.b32.xlu0 %v354, 16
    %v382 = vpop.permute.xlu0 %381
    %383 = vrot.lane.b32.xlu0 %v356, 16
    %v384 = vpop.permute.xlu0 %383
    %385 = vrot.lane.b32.xlu0 %v358, 16
    %v386 = vpop.permute.xlu0 %385
    %387 = vrot.lane.b32.xlu0 %v360, 16
    %v388 = vpop.permute.xlu0 %387
    %vm403 = vcmask 1042432
    %v404 = vrot.slane %v74, 5
    %v405 = vrot.slane %v75, 5
    %v406 = vsel %vm403, %v404, %v405
    %v407 = vrot.slane %v76, 5
    %v408 = vsel %vm403, %v405, %v407
    %v409 = vrot.slane %v77, 5
    %v410 = vsel %vm403, %v407, %v409
    %v411 = vrot.slane %v78, 5
    %v412 = vsel %vm403, %v409, %v411
    %v413 = vrot.slane %v79, 5
    %v414 = vsel %vm403, %v411, %v413
    %v415 = vrot.slane %v80, 5
    %v416 = vsel %vm403, %v413, %v415
    %v417 = vrot.slane %v81, 5
    %v418 = vsel %vm403, %v415, %v417
    %v419 = vrot.slane %v82, 5
    %v420 = vrot.slane %v83, 5
    %v421 = vsel %vm403, %v419, %v420
    %v422 = vrot.slane %v84, 5
    %v423 = vsel %vm403, %v420, %v422
    %v424 = vrot.slane %v85, 5
    %v425 = vsel %vm403, %v422, %v424
    %v426 = vrot.slane %v86, 5
    %v427 = vsel %vm403, %v424, %v426
    %v428 = vrot.slane %v87, 5
    %v429 = vsel %vm403, %v426, %v428
    %v430 = vrot.slane %v88, 5
    %v431 = vsel %vm403, %v428, %v430
    %v432 = vrot.slane %v89, 5
    %v433 = vsel %vm403, %v430, %v432
    %434 = vrot.lane.b32.xlu0 %v406, 20
    %v435 = vpop.permute.xlu0 %434
    %436 = vrot.lane.b32.xlu0 %v408, 20
    %v437 = vpop.permute.xlu0 %436
    %438 = vrot.lane.b32.xlu0 %v410, 20
    %v439 = vpop.permute.xlu0 %438
    %440 = vrot.lane.b32.xlu0 %v412, 20
    %v441 = vpop.permute.xlu0 %440
    %442 = vrot.lane.b32.xlu0 %v414, 20
    %v443 = vpop.permute.xlu0 %442
    %444 = vrot.lane.b32.xlu0 %v416, 20
    %v445 = vpop.permute.xlu0 %444
    %446 = vrot.lane.b32.xlu0 %v418, 20
    %v447 = vpop.permute.xlu0 %446
    %448 = vrot.lane.b32.xlu0 %v421, 20
    %v449 = vpop.permute.xlu0 %448
    %450 = vrot.lane.b32.xlu0 %v423, 20
    %v451 = vpop.permute.xlu0 %450
    %452 = vrot.lane.b32.xlu0 %v425, 20
    %v453 = vpop.permute.xlu0 %452
    %454 = vrot.lane.b32.xlu0 %v427, 20
    %v455 = vpop.permute.xlu0 %454
    %456 = vrot.lane.b32.xlu0 %v429, 20
    %v457 = vpop.permute.xlu0 %456
    %458 = vrot.lane.b32.xlu0 %v431, 20
    %v459 = vpop.permute.xlu0 %458
    %460 = vrot.lane.b32.xlu0 %v433, 20
    %v461 = vpop.permute.xlu0 %460
    %vm476 = vcmask 1041408
    %v477 = vrot.slane %v74, 6
    %v478 = vrot.slane %v75, 6
    %v479 = vsel %vm476, %v477, %v478
    %v480 = vrot.slane %v76, 6
    %v481 = vsel %vm476, %v478, %v480
    %v482 = vrot.slane %v77, 6
    %v483 = vsel %vm476, %v480, %v482
    %v484 = vrot.slane %v78, 6
    %v485 = vsel %vm476, %v482, %v484
    %v486 = vrot.slane %v79, 6
    %v487 = vsel %vm476, %v484, %v486
    %v488 = vrot.slane %v80, 6
    %v489 = vsel %vm476, %v486, %v488
    %v490 = vrot.slane %v81, 6
    %v491 = vsel %vm476, %v488, %v490
    %v492 = vrot.slane %v82, 6
    %v493 = vrot.slane %v83, 6
    %v494 = vsel %vm476, %v492, %v493
    %v495 = vrot.slane %v84, 6
    %v496 = vsel %vm476, %v493, %v495
    %v497 = vrot.slane %v85, 6
    %v498 = vsel %vm476, %v495, %v497
    %v499 = vrot.slane %v86, 6
    %v500 = vsel %vm476, %v497, %v499
    %v501 = vrot.slane %v87, 6
    %v502 = vsel %vm476, %v499, %v501
    %v503 = vrot.slane %v88, 6
    %v504 = vsel %vm476, %v501, %v503
    %v505 = vrot.slane %v89, 6
    %v506 = vsel %vm476, %v503, %v505
    %507 = vrot.lane.b32.xlu0 %v479, 24
    %v508 = vpop.permute.xlu0 %507
    %509 = vrot.lane.b32.xlu0 %v481, 24
    %v510 = vpop.permute.xlu0 %509
    %511 = vrot.lane.b32.xlu0 %v483, 24
    %v512 = vpop.permute.xlu0 %511
    %513 = vrot.lane.b32.xlu0 %v485, 24
    %v514 = vpop.permute.xlu0 %513
    %515 = vrot.lane.b32.xlu0 %v487, 24
    %v516 = vpop.permute.xlu0 %515
    %517 = vrot.lane.b32.xlu0 %v489, 24
    %v518 = vpop.permute.xlu0 %517
    %519 = vrot.lane.b32.xlu0 %v491, 24
    %v520 = vpop.permute.xlu0 %519
    %521 = vrot.lane.b32.xlu0 %v494, 24
    %v522 = vpop.permute.xlu0 %521
    %523 = vrot.lane.b32.xlu0 %v496, 24
    %v524 = vpop.permute.xlu0 %523
    %525 = vrot.lane.b32.xlu0 %v498, 24
    %v526 = vpop.permute.xlu0 %525
    %527 = vrot.lane.b32.xlu0 %v500, 24
    %v528 = vpop.permute.xlu0 %527
    %529 = vrot.lane.b32.xlu0 %v502, 24
    %v530 = vpop.permute.xlu0 %529
    %531 = vrot.lane.b32.xlu0 %v504, 24
    %v532 = vpop.permute.xlu0 %531
    %533 = vrot.lane.b32.xlu0 %v506, 24
    %v534 = vpop.permute.xlu0 %533
    %vm549 = vcmask 1040384
    %v550 = vrot.slane %v74, 7
    %v551 = vrot.slane %v75, 7
    %v552 = vsel %vm549, %v550, %v551
    %v553 = vrot.slane %v76, 7
    %v554 = vsel %vm549, %v551, %v553
    %v555 = vrot.slane %v77, 7
    %v556 = vsel %vm549, %v553, %v555
    %v557 = vrot.slane %v78, 7
    %v558 = vsel %vm549, %v555, %v557
    %v559 = vrot.slane %v79, 7
    %v560 = vsel %vm549, %v557, %v559
    %v561 = vrot.slane %v80, 7
    %v562 = vsel %vm549, %v559, %v561
    %v563 = vrot.slane %v81, 7
    %v564 = vsel %vm549, %v561, %v563
    %v565 = vrot.slane %v82, 7
    %v566 = vrot.slane %v83, 7
    %v567 = vsel %vm549, %v565, %v566
    %v568 = vrot.slane %v84, 7
    %v569 = vsel %vm549, %v566, %v568
    %v570 = vrot.slane %v85, 7
    %v571 = vsel %vm549, %v568, %v570
    %v572 = vrot.slane %v86, 7
    %v573 = vsel %vm549, %v570, %v572
    %v574 = vrot.slane %v87, 7
    %v575 = vsel %vm549, %v572, %v574
    %v576 = vrot.slane %v88, 7
    %v577 = vsel %vm549, %v574, %v576
    %v578 = vrot.slane %v89, 7
    %v579 = vsel %vm549, %v576, %v578
    %580 = vrot.lane.b32.xlu0 %v552, 28
    %v581 = vpop.permute.xlu0 %580
    %582 = vrot.lane.b32.xlu0 %v554, 28
    %v583 = vpop.permute.xlu0 %582
    %584 = vrot.lane.b32.xlu0 %v556, 28
    %v585 = vpop.permute.xlu0 %584
    %586 = vrot.lane.b32.xlu0 %v558, 28
    %v587 = vpop.permute.xlu0 %586
    %588 = vrot.lane.b32.xlu0 %v560, 28
    %v589 = vpop.permute.xlu0 %588
    %590 = vrot.lane.b32.xlu0 %v562, 28
    %v591 = vpop.permute.xlu0 %590
    %592 = vrot.lane.b32.xlu0 %v564, 28
    %v593 = vpop.permute.xlu0 %592
    %594 = vrot.lane.b32.xlu0 %v567, 28
    %v595 = vpop.permute.xlu0 %594
    %596 = vrot.lane.b32.xlu0 %v569, 28
    %v597 = vpop.permute.xlu0 %596
    %598 = vrot.lane.b32.xlu0 %v571, 28
    %v599 = vpop.permute.xlu0 %598
    %600 = vrot.lane.b32.xlu0 %v573, 28
    %v601 = vpop.permute.xlu0 %600
    %602 = vrot.lane.b32.xlu0 %v575, 28
    %v603 = vpop.permute.xlu0 %602
    %604 = vrot.lane.b32.xlu0 %v577, 28
    %v605 = vpop.permute.xlu0 %604
    %606 = vrot.lane.b32.xlu0 %v579, 28
    %v607 = vpop.permute.xlu0 %606
    %vm622 = vcmask 31744
    %v623 = vsel %vm622, %v74, %v143
    %v624 = vsel %vm622, %v75, %v145
    %v625 = vsel %vm622, %v76, %v147
    %v626 = vsel %vm622, %v77, %v149
    %v627 = vsel %vm622, %v78, %v151
    %v628 = vsel %vm622, %v79, %v153
    %v629 = vsel %vm622, %v80, %v155
    %v630 = vsel %vm622, %v82, %v157
    %v631 = vsel %vm622, %v83, %v159
    %v632 = vsel %vm622, %v84, %v161
    %v633 = vsel %vm622, %v85, %v163
    %v634 = vsel %vm622, %v86, %v165
    %v635 = vsel %vm622, %v87, %v167
    %v636 = vsel %vm622, %v88, %v169
    %vm637 = vcmask 64512
    %v638 = vsel %vm637, %v623, %v216
    %v639 = vsel %vm637, %v624, %v218
    %v640 = vsel %vm637, %v625, %v220
    %v641 = vsel %vm637, %v626, %v222
    %v642 = vsel %vm637, %v627, %v224
    %v643 = vsel %vm637, %v628, %v226
    %v644 = vsel %vm637, %v629, %v228
    %v645 = vsel %vm637, %v630, %v230
    %v646 = vsel %vm637, %v631, %v232
    %v647 = vsel %vm637, %v632, %v234
    %v648 = vsel %vm637, %v633, %v236
    %v649 = vsel %vm637, %v634, %v238
    %v650 = vsel %vm637, %v635, %v240
    %v651 = vsel %vm637, %v636, %v242
    %vm652 = vcmask 97280
    %v653 = vsel %vm652, %v638, %v289
    %v654 = vsel %vm652, %v639, %v291
    %v655 = vsel %vm652, %v640, %v293
    %v656 = vsel %vm652, %v641, %v295
    %v657 = vsel %vm652, %v642, %v297
    %v658 = vsel %vm652, %v643, %v299
    %v659 = vsel %vm652, %v644, %v301
    %v660 = vsel %vm652, %v645, %v303
    %v661 = vsel %vm652, %v646, %v305
    %v662 = vsel %vm652, %v647, %v307
    %v663 = vsel %vm652, %v648, %v309
    %v664 = vsel %vm652, %v649, %v311
    %v665 = vsel %vm652, %v650, %v313
    %v666 = vsel %vm652, %v651, %v315
    %vm667 = vcmask 130048
    %v668 = vsel %vm667, %v653, %v362
    %v669 = vsel %vm667, %v654, %v364
    %v670 = vsel %vm667, %v655, %v366
    %v671 = vsel %vm667, %v656, %v368
    %v672 = vsel %vm667, %v657, %v370
    %v673 = vsel %vm667, %v658, %v372
    %v674 = vsel %vm667, %v659, %v374
    %v675 = vsel %vm667, %v660, %v376
    %v676 = vsel %vm667, %v661, %v378
    %v677 = vsel %vm667, %v662, %v380
    %v678 = vsel %vm667, %v663, %v382
    %v679 = vsel %vm667, %v664, %v384
    %v680 = vsel %vm667, %v665, %v386
    %v681 = vsel %vm667, %v666, %v388
    %vm682 = vcmask 162816
    %v683 = vsel %vm682, %v668, %v435
    %v684 = vsel %vm682, %v669, %v437
    %v685 = vsel %vm682, %v670, %v439
    %v686 = vsel %vm682, %v671, %v441
    %v687 = vsel %vm682, %v672, %v443
    %v688 = vsel %vm682, %v673, %v445
    %v689 = vsel %vm682, %v674, %v447
    %v690 = vsel %vm682, %v675, %v449
    %v691 = vsel %vm682, %v676, %v451
    %v692 = vsel %vm682, %v677, %v453
    %v693 = vsel %vm682, %v678, %v455
    %v694 = vsel %vm682, %v679, %v457
    %v695 = vsel %vm682, %v680, %v459
    %v696 = vsel %vm682, %v681, %v461
    %vm697 = vcmask 195584
    %v698 = vsel %vm697, %v683, %v508
    %v699 = vsel %vm697, %v684, %v510
    %v700 = vsel %vm697, %v685, %v512
    %v701 = vsel %vm697, %v686, %v514
    %v702 = vsel %vm697, %v687, %v516
    %v703 = vsel %vm697, %v688, %v518
    %v704 = vsel %vm697, %v689, %v520
    %v705 = vsel %vm697, %v690, %v522
    %v706 = vsel %vm697, %v691, %v524
    %v707 = vsel %vm697, %v692, %v526
    %v708 = vsel %vm697, %v693, %v528
    %v709 = vsel %vm697, %v694, %v530
    %v710 = vsel %vm697, %v695, %v532
    %v711 = vsel %vm697, %v696, %v534
    %vm712 = vcmask 228352
    %v713 = vsel %vm712, %v698, %v581
    %v714 = vsel %vm712, %v699, %v583
    %v715 = vsel %vm712, %v700, %v585
    %v716 = vsel %vm712, %v701, %v587
    %v717 = vsel %vm712, %v702, %v589
    %v718 = vsel %vm712, %v703, %v591
    %v719 = vsel %vm712, %v704, %v593
    %v720 = vsel %vm712, %v705, %v595
    %v721 = vsel %vm712, %v706, %v597
    %v722 = vsel %vm712, %v707, %v599
    %v723 = vsel %vm712, %v708, %v601
    %v724 = vsel %vm712, %v709, %v603
    %v725 = vsel %vm712, %v710, %v605
    %v726 = vsel %vm712, %v711, %v607
    %v728 = vlaneseq
    %v729 = vshrl.u32 %v728, 7
    %v730 = vsub.s32 0, %v729
    %v731 = vrot.slane %v94, %v730
    %vm733 = vcmask 261120
    %v735 = vsel %vm733, %v713, 0
    %v738 = vsel %vm733, %v714, 0
    %v741 = vsel %vm733, %v715, 0
    %v744 = vsel %vm733, %v716, 0
    %v747 = vsel %vm733, %v717, 0
    %v750 = vsel %vm733, %v718, 0
    %v753 = vsel %vm733, %v719, 0
    %v756 = vsel %vm733, %v720, 0
    %v759 = vsel %vm733, %v721, 0
    %v762 = vsel %vm733, %v722, 0
    %v765 = vsel %vm733, %v723, 0
    %v768 = vsel %vm733, %v724, 0
    %v771 = vsel %vm733, %v725, 0
    %v774 = vsel %vm733, %v726, 0
    %776 = vmatprep.subr.mxu0 0.0
    %777 = vmatpush1.msra.mxu0 %v90
    %778 = vmatprep.subr.mxu0 0.0
    %779 = vmatpush1.msra.mxu0 %v91
    %780 = vmatprep.subr.mxu0 0.0
    %781 = vmatpush1.msra.mxu0 %v92
    %782 = vmatprep.subr.mxu0 0.0
    %783 = vmatpush1.msra.mxu0 %v93
    %784 = vmatprep.subr.mxu0 0.0
    %785 = vmatpush1.msra.mxu0 0.0
    %786 = vmatprep.subr.mxu0 0.0
    %787 = vmatpush1.msra.mxu0 0.0
    %788 = vmatprep.subr.mxu0 0.0
    %789 = vmatpush1.msra.mxu0 0.0
    %790 = vmatprep.subr.mxu0 0.0
    %791 = vmatpush1.msra.mxu0 0.0
    %792 = vmatprep.subr.mxu0 0.0
    %793 = vmatpush1.msra.mxu0 0.0
    %794 = vmatprep.subr.mxu0 0.0
    %795 = vmatpush1.msra.mxu0 0.0
    %796 = vmatprep.subr.mxu0 0.0
    %797 = vmatpush1.msra.mxu0 0.0
    %798 = vmatprep.subr.mxu0 0.0
    %799 = vmatpush1.msra.mxu0 0.0
    %800 = vmatprep.subr.mxu0 0.0
    %801 = vmatpush1.msra.mxu0 0.0
    %802 = vmatprep.subr.mxu0 0.0
    %803 = vmatpush1.msra.mxu0 0.0
    %804 = vmatprep.subr.mxu0 0.0
    %805 = vmatpush1.msra.mxu0 0.0
    %806 = vmatprep.subr.mxu0 0.0
    %807 = vmatpush1.msra.mxu0 0.0
    %808 = vmatprep.subr.mxu0 0.0
    %809 = vmatpush1.msra.mxu0 0.0
    %810 = vmatprep.subr.mxu0 0.0
    %811 = vmatpush1.msra.mxu0 0.0
    %812 = vmatprep.subr.mxu0 0.0
    %813 = vmatpush1.msra.mxu0 0.0
    %814 = vmatprep.subr.mxu0 0.0
    %815 = vmatpush1.msra.mxu0 0.0
    %816 = vmatprep.subr.mxu0 0.0
    %817 = vmatpush1.msra.mxu0 0.0
    %818 = vmatprep.subr.mxu0 0.0
    %819 = vmatpush1.msra.mxu0 0.0
    %820 = vmatprep.subr.mxu0 0.0
    %821 = vmatpush1.msra.mxu0 0.0
    %822 = vmatprep.subr.mxu0 0.0
    %823 = vmatpush1.msra.mxu0 0.0
    %824 = vmatprep.subr.mxu0 0.0
    %825 = vmatpush1.msra.mxu0 0.0
    %826 = vmatprep.subr.mxu0 0.0
    %827 = vmatpush1.msra.mxu0 0.0
    %828 = vmatprep.subr.mxu0 0.0
    %829 = vmatpush1.msra.mxu0 0.0
    %830 = vmatprep.subr.mxu0 0.0
    %831 = vmatpush1.msra.mxu0 0.0
    %832 = vmatprep.subr.mxu0 0.0
    %833 = vmatpush1.msra.mxu0 0.0
    %834 = vmatprep.subr.mxu0 0.0
    %835 = vmatpush1.msra.mxu0 0.0
    %836 = vmatprep.subr.mxu0 0.0
    %837 = vmatpush1.msra.mxu0 0.0
    %838 = vmatprep.subr.mxu0 0.0
    %839 = vmatpush1.msra.mxu0 0.0
    %840 = vmatprep.mubr.f32.mxu0 0.0
    %841 = vmatmul.mubr.f32.gmra.mrb[0].mxu0 %v735
    %v842 = vpop.f32.mrb[0].mxu0
    %v843 = vadd.f32 %v731, %v842
    %v844 = vpop.f32.mrb[0].mxu0
    %845 = vmatprep.mubr.f32.mxu0 0.0
    %846 = vmatmul.mubr.f32.gmra.mrb[0].mxu0 %v738
    %v847 = vpop.f32.mrb[0].mxu0
    %v848 = vadd.f32 %v731, %v847
    %v849 = vpop.f32.mrb[0].mxu0
    %850 = vmatprep.mubr.f32.mxu0 0.0
    %851 = vmatmul.mubr.f32.gmra.mrb[0].mxu0 %v741
    %v852 = vpop.f32.mrb[0].mxu0
    %v853 = vadd.f32 %v731, %v852
    %v854 = vpop.f32.mrb[0].mxu0
    %855 = vmatprep.mubr.f32.mxu0 0.0
    %856 = vmatmul.mubr.f32.gmra.mrb[0].mxu0 %v744
    %v857 = vpop.f32.mrb[0].mxu0
    %v858 = vadd.f32 %v731, %v857
    %v859 = vpop.f32.mrb[0].mxu0
    %860 = vmatprep.mubr.f32.mxu0 0.0
    %861 = vmatmul.mubr.f32.gmra.mrb[0].mxu0 %v747
    %v862 = vpop.f32.mrb[0].mxu0
    %v863 = vadd.f32 %v731, %v862
    %v864 = vpop.f32.mrb[0].mxu0
    %865 = vmatprep.mubr.f32.mxu0 0.0
    %866 = vmatmul.mubr.f32.gmra.mrb[0].mxu0 %v750
    %v867 = vpop.f32.mrb[0].mxu0
    %v868 = vadd.f32 %v731, %v867
    %v869 = vpop.f32.mrb[0].mxu0
    %870 = vmatprep.mubr.f32.mxu0 0.0
    %871 = vmatmul.mubr.f32.gmra.mrb[0].mxu0 %v753
    %v872 = vpop.f32.mrb[0].mxu0
    %v873 = vadd.f32 %v731, %v872
    %v874 = vpop.f32.mrb[0].mxu0
    %875 = vmatprep.mubr.f32.mxu0 0.0
    %876 = vmatmul.mubr.f32.gmra.mrb[0].mxu0 %v756
    %v877 = vpop.f32.mrb[0].mxu0
    %v878 = vadd.f32 %v731, %v877
    %v879 = vpop.f32.mrb[0].mxu0
    %880 = vmatprep.mubr.f32.mxu0 0.0
    %881 = vmatmul.mubr.f32.gmra.mrb[0].mxu0 %v759
    %v882 = vpop.f32.mrb[0].mxu0
    %v883 = vadd.f32 %v731, %v882
    %v884 = vpop.f32.mrb[0].mxu0
    %885 = vmatprep.mubr.f32.mxu0 0.0
    %886 = vmatmul.mubr.f32.gmra.mrb[0].mxu0 %v762
    %v887 = vpop.f32.mrb[0].mxu0
    %v888 = vadd.f32 %v731, %v887
    %v889 = vpop.f32.mrb[0].mxu0
    %890 = vmatprep.mubr.f32.mxu0 0.0
    %891 = vmatmul.mubr.f32.gmra.mrb[0].mxu0 %v765
    %v892 = vpop.f32.mrb[0].mxu0
    %v893 = vadd.f32 %v731, %v892
    %v894 = vpop.f32.mrb[0].mxu0
    %895 = vmatprep.mubr.f32.mxu0 0.0
    %896 = vmatmul.mubr.f32.gmra.mrb[0].mxu0 %v768
    %v897 = vpop.f32.mrb[0].mxu0
    %v898 = vadd.f32 %v731, %v897
    %v899 = vpop.f32.mrb[0].mxu0
    %900 = vmatprep.mubr.f32.mxu0 0.0
    %901 = vmatmul.mubr.f32.gmra.mrb[0].mxu0 %v771
    %v902 = vpop.f32.mrb[0].mxu0
    %v903 = vadd.f32 %v731, %v902
    %v904 = vpop.f32.mrb[0].mxu0
    %905 = vmatprep.mubr.f32.mxu0 0.0
    %906 = vmatmul.mubr.f32.gmra.mrb[0].mxu0 %v774
    %v907 = vpop.f32.mrb[0].mxu0
    %v908 = vadd.f32 %v731, %v907
    %v909 = vpop.f32.mrb[0].mxu0
    %910 = vdwg.mxu0
    %v911 = vmax.f32 %v843, 0.0
    %v912 = vmax.f32 %v848, 0.0
    %v913 = vmax.f32 %v853, 0.0
    %v914 = vmax.f32 %v858, 0.0
    %v915 = vmax.f32 %v863, 0.0
    %v916 = vmax.f32 %v868, 0.0
    %v917 = vmax.f32 %v873, 0.0
    %v918 = vmax.f32 %v878, 0.0
    %v919 = vmax.f32 %v883, 0.0
    %v920 = vmax.f32 %v888, 0.0
    %v921 = vmax.f32 %v893, 0.0
    %v922 = vmax.f32 %v898, 0.0
    %v923 = vmax.f32 %v903, 0.0
    %v924 = vmax.f32 %v908, 0.0
    %v939 = vcombine.high %v911, %v911
    %v940 = vcombine.high %v912, %v912
    %v941 = vcombine.high %v913, %v913
    %v942 = vcombine.high %v914, %v914
    %v943 = vcombine.high %v915, %v915
    %v944 = vcombine.high %v916, %v916
    %v945 = vcombine.high %v917, %v917
    %v946 = vcombine.high %v918, %v918
    %v947 = vcombine.high %v919, %v919
    %v948 = vcombine.high %v920, %v920
    %v949 = vcombine.high %v921, %v921
    %v950 = vcombine.high %v922, %v922
    %v951 = vcombine.high %v923, %v923
    %v952 = vcombine.high %v924, %v924
    %v967 = vrot.slane %v911, 5
    %v968 = vrot.slane %v967, 4
    %v969 = vrot.slane %v939, 5
    %v970 = vrot.slane %v969, 4
    %v971 = vrot.slane %v912, 5
    %v972 = vrot.slane %v971, 4
    %v973 = vrot.slane %v940, 5
    %v974 = vrot.slane %v973, 4
    %v975 = vrot.slane %v913, 5
    %v976 = vrot.slane %v975, 4
    %v977 = vrot.slane %v941, 5
    %v978 = vrot.slane %v977, 4
    %v979 = vrot.slane %v914, 5
    %v980 = vrot.slane %v979, 4
    %v981 = vrot.slane %v942, 5
    %v982 = vrot.slane %v981, 4
    %v983 = vrot.slane %v915, 5
    %v984 = vrot.slane %v983, 4
    %v985 = vrot.slane %v943, 5
    %v986 = vrot.slane %v985, 4
    %v987 = vrot.slane %v916, 5
    %v988 = vrot.slane %v987, 4
    %v989 = vrot.slane %v944, 5
    %v990 = vrot.slane %v989, 4
    %v991 = vrot.slane %v917, 5
    %v992 = vrot.slane %v991, 4
    %v993 = vrot.slane %v945, 5
    %v994 = vrot.slane %v993, 4
    %v995 = vrot.slane %v918, 5
    %v996 = vrot.slane %v995, 4
    %v997 = vrot.slane %v946, 5
    %v998 = vrot.slane %v997, 4
    %v999 = vrot.slane %v919, 5
    %v1000 = vrot.slane %v999, 4
    %v1001 = vrot.slane %v947, 5
    %v1002 = vrot.slane %v1001, 4
    %v1003 = vrot.slane %v920, 5
    %v1004 = vrot.slane %v1003, 4
    %v1005 = vrot.slane %v948, 5
    %v1006 = vrot.slane %v1005, 4
    %v1007 = vrot.slane %v921, 5
    %v1008 = vrot.slane %v1007, 4
    %v1009 = vrot.slane %v949, 5
    %v1010 = vrot.slane %v1009, 4
    %v1011 = vrot.slane %v922, 5
    %v1012 = vrot.slane %v1011, 4
    %v1013 = vrot.slane %v950, 5
    %v1014 = vrot.slane %v1013, 4
    %v1015 = vrot.slane %v923, 5
    %v1016 = vrot.slane %v1015, 4
    %v1017 = vrot.slane %v951, 5
    %v1018 = vrot.slane %v1017, 4
    %v1019 = vrot.slane %v924, 5
    %v1020 = vrot.slane %v1019, 4
    %v1021 = vrot.slane %v952, 5
    %v1022 = vrot.slane %v1021, 4
    %v1051 = vmax.f32 %v911, %v968
    %v1052 = vmax.f32 %v939, %v970
    %v1053 = vmax.f32 %v912, %v972
    %v1054 = vmax.f32 %v940, %v974
    %v1055 = vmax.f32 %v913, %v976
    %v1056 = vmax.f32 %v941, %v978
    %v1057 = vmax.f32 %v914, %v980
    %v1058 = vmax.f32 %v942, %v982
    %v1059 = vmax.f32 %v915, %v984
    %v1060 = vmax.f32 %v943, %v986
    %v1061 = vmax.f32 %v916, %v988
    %v1062 = vmax.f32 %v944, %v990
    %v1063 = vmax.f32 %v917, %v992
    %v1064 = vmax.f32 %v945, %v994
    %v1065 = vmax.f32 %v918, %v996
    %v1066 = vmax.f32 %v946, %v998
    %v1067 = vmax.f32 %v919, %v1000
    %v1068 = vmax.f32 %v947, %v1002
    %v1069 = vmax.f32 %v920, %v1004
    %v1070 = vmax.f32 %v948, %v1006
    %v1071 = vmax.f32 %v921, %v1008
    %v1072 = vmax.f32 %v949, %v1010
    %v1073 = vmax.f32 %v922, %v1012
    %v1074 = vmax.f32 %v950, %v1014
    %v1075 = vmax.f32 %v923, %v1016
    %v1076 = vmax.f32 %v951, %v1018
    %v1077 = vmax.f32 %v924, %v1020
    %v1078 = vmax.f32 %v952, %v1022
    %v1079 = vrot.slane %v911, 6
    %v1080 = vrot.slane %v1079, 4
    %v1081 = vrot.slane %v939, 6
    %v1082 = vrot.slane %v1081, 4
    %v1083 = vrot.slane %v912, 6
    %v1084 = vrot.slane %v1083, 4
    %v1085 = vrot.slane %v940, 6
    %v1086 = vrot.slane %v1085, 4
    %v1087 = vrot.slane %v913, 6
    %v1088 = vrot.slane %v1087, 4
    %v1089 = vrot.slane %v941, 6
    %v1090 = vrot.slane %v1089, 4
    %v1091 = vrot.slane %v914, 6
    %v1092 = vrot.slane %v1091, 4
    %v1093 = vrot.slane %v942, 6
    %v1094 = vrot.slane %v1093, 4
    %v1095 = vrot.slane %v915, 6
    %v1096 = vrot.slane %v1095, 4
    %v1097 = vrot.slane %v943, 6
    %v1098 = vrot.slane %v1097, 4
    %v1099 = vrot.slane %v916, 6
    %v1100 = vrot.slane %v1099, 4
    %v1101 = vrot.slane %v944, 6
    %v1102 = vrot.slane %v1101, 4
    %v1103 = vrot.slane %v917, 6
    %v1104 = vrot.slane %v1103, 4
    %v1105 = vrot.slane %v945, 6
    %v1106 = vrot.slane %v1105, 4
    %v1107 = vrot.slane %v918, 6
    %v1108 = vrot.slane %v1107, 4
    %v1109 = vrot.slane %v946, 6
    %v1110 = vrot.slane %v1109, 4
    %v1111 = vrot.slane %v919, 6
    %v1112 = vrot.slane %v1111, 4
    %v1113 = vrot.slane %v947, 6
    %v1114 = vrot.slane %v1113, 4
    %v1115 = vrot.slane %v920, 6
    %v1116 = vrot.slane %v1115, 4
    %v1117 = vrot.slane %v948, 6
    %v1118 = vrot.slane %v1117, 4
    %v1119 = vrot.slane %v921, 6
    %v1120 = vrot.slane %v1119, 4
    %v1121 = vrot.slane %v949, 6
    %v1122 = vrot.slane %v1121, 4
    %v1123 = vrot.slane %v922, 6
    %v1124 = vrot.slane %v1123, 4
    %v1125 = vrot.slane %v950, 6
    %v1126 = vrot.slane %v1125, 4
    %v1127 = vrot.slane %v923, 6
    %v1128 = vrot.slane %v1127, 4
    %v1129 = vrot.slane %v951, 6
    %v1130 = vrot.slane %v1129, 4
    %v1131 = vrot.slane %v924, 6
    %v1132 = vrot.slane %v1131, 4
    %v1133 = vrot.slane %v952, 6
    %v1134 = vrot.slane %v1133, 4
    %v1163 = vmax.f32 %v1051, %v1080
    %v1164 = vmax.f32 %v1052, %v1082
    %v1165 = vmax.f32 %v1053, %v1084
    %v1166 = vmax.f32 %v1054, %v1086
    %v1167 = vmax.f32 %v1055, %v1088
    %v1168 = vmax.f32 %v1056, %v1090
    %v1169 = vmax.f32 %v1057, %v1092
    %v1170 = vmax.f32 %v1058, %v1094
    %v1171 = vmax.f32 %v1059, %v1096
    %v1172 = vmax.f32 %v1060, %v1098
    %v1173 = vmax.f32 %v1061, %v1100
    %v1174 = vmax.f32 %v1062, %v1102
    %v1175 = vmax.f32 %v1063, %v1104
    %v1176 = vmax.f32 %v1064, %v1106
    %v1177 = vmax.f32 %v1065, %v1108
    %v1178 = vmax.f32 %v1066, %v1110
    %v1179 = vmax.f32 %v1067, %v1112
    %v1180 = vmax.f32 %v1068, %v1114
    %v1181 = vmax.f32 %v1069, %v1116
    %v1182 = vmax.f32 %v1070, %v1118
    %v1183 = vmax.f32 %v1071, %v1120
    %v1184 = vmax.f32 %v1072, %v1122
    %v1185 = vmax.f32 %v1073, %v1124
    %v1186 = vmax.f32 %v1074, %v1126
    %v1187 = vmax.f32 %v1075, %v1128
    %v1188 = vmax.f32 %v1076, %v1130
    %v1189 = vmax.f32 %v1077, %v1132
    %v1190 = vmax.f32 %v1078, %v1134
    %v1191 = vrot.slane %v911, 7
    %v1192 = vrot.slane %v1191, 4
    %v1193 = vrot.slane %v939, 7
    %v1194 = vrot.slane %v1193, 4
    %v1195 = vrot.slane %v912, 7
    %v1196 = vrot.slane %v1195, 4
    %v1197 = vrot.slane %v940, 7
    %v1198 = vrot.slane %v1197, 4
    %v1199 = vrot.slane %v913, 7
    %v1200 = vrot.slane %v1199, 4
    %v1201 = vrot.slane %v941, 7
    %v1202 = vrot.slane %v1201, 4
    %v1203 = vrot.slane %v914, 7
    %v1204 = vrot.slane %v1203, 4
    %v1205 = vrot.slane %v942, 7
    %v1206 = vrot.slane %v1205, 4
    %v1207 = vrot.slane %v915, 7
    %v1208 = vrot.slane %v1207, 4
    %v1209 = vrot.slane %v943, 7
    %v1210 = vrot.slane %v1209, 4
    %v1211 = vrot.slane %v916, 7
    %v1212 = vrot.slane %v1211, 4
    %v1213 = vrot.slane %v944, 7
    %v1214 = vrot.slane %v1213, 4
    %v1215 = vrot.slane %v917, 7
    %v1216 = vrot.slane %v1215, 4
    %v1217 = vrot.slane %v945, 7
    %v1218 = vrot.slane %v1217, 4
    %v1219 = vrot.slane %v918, 7
    %v1220 = vrot.slane %v1219, 4
    %v1221 = vrot.slane %v946, 7
    %v1222 = vrot.slane %v1221, 4
    %v1223 = vrot.slane %v919, 7
    %v1224 = vrot.slane %v1223, 4
    %v1225 = vrot.slane %v947, 7
    %v1226 = vrot.slane %v1225, 4
    %v1227 = vrot.slane %v920, 7
    %v1228 = vrot.slane %v1227, 4
    %v1229 = vrot.slane %v948, 7
    %v1230 = vrot.slane %v1229, 4
    %v1231 = vrot.slane %v921, 7
    %v1232 = vrot.slane %v1231, 4
    %v1233 = vrot.slane %v949, 7
    %v1234 = vrot.slane %v1233, 4
    %v1235 = vrot.slane %v922, 7
    %v1236 = vrot.slane %v1235, 4
    %v1237 = vrot.slane %v950, 7
    %v1238 = vrot.slane %v1237, 4
    %v1239 = vrot.slane %v923, 7
    %v1240 = vrot.slane %v1239, 4
    %v1241 = vrot.slane %v951, 7
    %v1242 = vrot.slane %v1241, 4
    %v1243 = vrot.slane %v924, 7
    %v1244 = vrot.slane %v1243, 4
    %v1245 = vrot.slane %v952, 7
    %v1246 = vrot.slane %v1245, 4
    %v1275 = vmax.f32 %v1163, %v1192
    %v1276 = vmax.f32 %v1164, %v1194
    %v1277 = vmax.f32 %v1165, %v1196
    %v1278 = vmax.f32 %v1166, %v1198
    %v1279 = vmax.f32 %v1167, %v1200
    %v1280 = vmax.f32 %v1168, %v1202
    %v1281 = vmax.f32 %v1169, %v1204
    %v1282 = vmax.f32 %v1170, %v1206
    %v1283 = vmax.f32 %v1171, %v1208
    %v1284 = vmax.f32 %v1172, %v1210
    %v1285 = vmax.f32 %v1173, %v1212
    %v1286 = vmax.f32 %v1174, %v1214
    %v1287 = vmax.f32 %v1175, %v1216
    %v1288 = vmax.f32 %v1176, %v1218
    %v1289 = vmax.f32 %v1177, %v1220
    %v1290 = vmax.f32 %v1178, %v1222
    %v1291 = vmax.f32 %v1179, %v1224
    %v1292 = vmax.f32 %v1180, %v1226
    %v1293 = vmax.f32 %v1181, %v1228
    %v1294 = vmax.f32 %v1182, %v1230
    %v1295 = vmax.f32 %v1183, %v1232
    %v1296 = vmax.f32 %v1184, %v1234
    %v1297 = vmax.f32 %v1185, %v1236
    %v1298 = vmax.f32 %v1186, %v1238
    %v1299 = vmax.f32 %v1187, %v1240
    %v1300 = vmax.f32 %v1188, %v1242
    %v1301 = vmax.f32 %v1189, %v1244
    %v1302 = vmax.f32 %v1190, %v1246
    %v1303 = vld [vmem:[%s3] sm:$0xff]
    %v1304 = vld [vmem:[%s3 + $0x8] sm:$0xff]
    %v1305 = vld [vmem:[%s3 + $0x10] sm:$0xff]
    %v1306 = vld [vmem:[%s3 + $0x18] sm:$0xff]
    %v1307 = vld [vmem:[%s3 + $0x20] sm:$0xff]
    %v1308 = vld [vmem:[%s3 + $0x28] sm:$0xff]
    %v1309 = vld [vmem:[%s3 + $0x30] sm:$0xff]
    %v1310 = vld [vmem:[%s3 + $0x38] sm:$0xff]
    %v1311 = vld [vmem:[%s3 + $0x40] sm:$0xff]
    %v1312 = vld [vmem:[%s3 + $0x48] sm:$0xff]
    %v1313 = vld [vmem:[%s3 + $0x50] sm:$0xff]
    %v1314 = vld [vmem:[%s3 + $0x58] sm:$0xff]
    %v1315 = vld [vmem:[%s3 + $0x60] sm:$0xff]
    %v1316 = vld [vmem:[%s3 + $0x68] sm:$0xff]
    %v1317 = vld [vmem:[%s3 + $0x70] sm:$0xff]
    %v1318 = vld [vmem:[%s3 + $0x78] sm:$0xff]
    %v1319 = vld [vmem:[%s4] sm:$0x1]
    %v1334 = vlaneseq
    %v1335 = vshrl.u32 %v1334, 7
    %v1336 = vsub.s32 0, %v1335
    %v1337 = vrot.slane %v1275, %v1336
    %v1338 = vlaneseq
    %v1339 = vshrl.u32 %v1338, 7
    %v1340 = vsub.s32 0, %v1339
    %v1341 = vrot.slane %v1276, %v1340
    %v1342 = vlaneseq
    %v1343 = vshrl.u32 %v1342, 7
    %v1344 = vsub.s32 0, %v1343
    %v1345 = vrot.slane %v1277, %v1344
    %v1346 = vlaneseq
    %v1347 = vshrl.u32 %v1346, 7
    %v1348 = vsub.s32 0, %v1347
    %v1349 = vrot.slane %v1278, %v1348
    %v1350 = vlaneseq
    %v1351 = vshrl.u32 %v1350, 7
    %v1352 = vsub.s32 0, %v1351
    %v1353 = vrot.slane %v1279, %v1352
    %v1354 = vlaneseq
    %v1355 = vshrl.u32 %v1354, 7
    %v1356 = vsub.s32 0, %v1355
    %v1357 = vrot.slane %v1280, %v1356
    %v1358 = vlaneseq
    %v1359 = vshrl.u32 %v1358, 7
    %v1360 = vsub.s32 0, %v1359
    %v1361 = vrot.slane %v1281, %v1360
    %v1362 = vlaneseq
    %v1363 = vshrl.u32 %v1362, 7
    %v1364 = vsub.s32 0, %v1363
    %v1365 = vrot.slane %v1289, %v1364
    %v1366 = vlaneseq
    %v1367 = vshrl.u32 %v1366, 7
    %v1368 = vsub.s32 0, %v1367
    %v1369 = vrot.slane %v1290, %v1368
    %v1370 = vlaneseq
    %v1371 = vshrl.u32 %v1370, 7
    %v1372 = vsub.s32 0, %v1371
    %v1373 = vrot.slane %v1291, %v1372
    %v1374 = vlaneseq
    %v1375 = vshrl.u32 %v1374, 7
    %v1376 = vsub.s32 0, %v1375
    %v1377 = vrot.slane %v1292, %v1376
    %v1378 = vlaneseq
    %v1379 = vshrl.u32 %v1378, 7
    %v1380 = vsub.s32 0, %v1379
    %v1381 = vrot.slane %v1293, %v1380
    %v1382 = vlaneseq
    %v1383 = vshrl.u32 %v1382, 7
    %v1384 = vsub.s32 0, %v1383
    %v1385 = vrot.slane %v1294, %v1384
    %v1386 = vlaneseq
    %v1387 = vshrl.u32 %v1386, 7
    %v1388 = vsub.s32 0, %v1387
    %v1389 = vrot.slane %v1295, %v1388
    %vm1390 = vcmask 1041409
    %v1391 = vsel %vm1390, %v1341, %v1337
    %vm1392 = vcmask 1042434
    %v1393 = vsel %vm1392, %v1345, %v1391
    %vm1394 = vcmask 1043459
    %v1395 = vsel %vm1394, %v1349, %v1393
    %vm1396 = vcmask 1044484
    %v1397 = vsel %vm1396, %v1353, %v1395
    %vm1398 = vcmask 1045509
    %v1399 = vsel %vm1398, %v1357, %v1397
    %vm1400 = vcmask 1046534
    %v1401 = vsel %vm1400, %v1361, %v1399
    %v1402 = vsel %vm1390, %v1369, %v1365
    %v1403 = vsel %vm1392, %v1373, %v1402
    %v1404 = vsel %vm1394, %v1377, %v1403
    %v1405 = vsel %vm1396, %v1381, %v1404
    %v1406 = vsel %vm1398, %v1385, %v1405
    %v1407 = vsel %vm1400, %v1389, %v1406
    %v1412 = vlaneseq
    %v1413 = vshrl.u32 %v1412, 7
    %v1414 = vsub.s32 0, %v1413
    %v1415 = vrot.slane %v1282, %v1414
    %v1416 = vlaneseq
    %v1417 = vshrl.u32 %v1416, 7
    %v1418 = vsub.s32 0, %v1417
    %v1419 = vrot.slane %v1296, %v1418
    %v1420 = vsel %vm1390, %v1345, %v1341
    %v1421 = vsel %vm1392, %v1349, %v1420
    %v1422 = vsel %vm1394, %v1353, %v1421
    %v1423 = vsel %vm1396, %v1357, %v1422
    %v1424 = vsel %vm1398, %v1361, %v1423
    %v1425 = vsel %vm1400, %v1415, %v1424
    %v1426 = vsel %vm1390, %v1373, %v1369
    %v1427 = vsel %vm1392, %v1377, %v1426
    %v1428 = vsel %vm1394, %v1381, %v1427
    %v1429 = vsel %vm1396, %v1385, %v1428
    %v1430 = vsel %vm1398, %v1389, %v1429
    %v1431 = vsel %vm1400, %v1419, %v1430
    %1432 = vrot.lane.b32.xlu0 %v1425, 16
    %v1433 = vpop.permute.xlu0 %1432
    %1434 = vrot.lane.b32.xlu0 %v1431, 16
    %v1435 = vpop.permute.xlu0 %1434
    %v1440 = vlaneseq
    %v1441 = vshrl.u32 %v1440, 7
    %v1442 = vsub.s32 0, %v1441
    %v1443 = vrot.slane %v1283, %v1442
    %v1444 = vlaneseq
    %v1445 = vshrl.u32 %v1444, 7
    %v1446 = vsub.s32 0, %v1445
    %v1447 = vrot.slane %v1297, %v1446
    %v1448 = vsel %vm1390, %v1349, %v1345
    %v1449 = vsel %vm1392, %v1353, %v1448
    %v1450 = vsel %vm1394, %v1357, %v1449
    %v1451 = vsel %vm1396, %v1361, %v1450
    %v1452 = vsel %vm1398, %v1415, %v1451
    %v1453 = vsel %vm1400, %v1443, %v1452
    %v1454 = vsel %vm1390, %v1377, %v1373
    %v1455 = vsel %vm1392, %v1381, %v1454
    %v1456 = vsel %vm1394, %v1385, %v1455
    %v1457 = vsel %vm1396, %v1389, %v1456
    %v1458 = vsel %vm1398, %v1419, %v1457
    %v1459 = vsel %vm1400, %v1447, %v1458
    %1460 = vrot.lane.b32.xlu0 %v1453, 32
    %v1461 = vpop.permute.xlu0 %1460
    %1462 = vrot.lane.b32.xlu0 %v1459, 32
    %v1463 = vpop.permute.xlu0 %1462
    %v1468 = vlaneseq
    %v1469 = vshrl.u32 %v1468, 7
    %v1470 = vsub.s32 0, %v1469
    %v1471 = vrot.slane %v1284, %v1470
    %v1472 = vlaneseq
    %v1473 = vshrl.u32 %v1472, 7
    %v1474 = vsub.s32 0, %v1473
    %v1475 = vrot.slane %v1298, %v1474
    %v1476 = vsel %vm1390, %v1353, %v1349
    %v1477 = vsel %vm1392, %v1357, %v1476
    %v1478 = vsel %vm1394, %v1361, %v1477
    %v1479 = vsel %vm1396, %v1415, %v1478
    %v1480 = vsel %vm1398, %v1443, %v1479
    %v1481 = vsel %vm1400, %v1471, %v1480
    %v1482 = vsel %vm1390, %v1381, %v1377
    %v1483 = vsel %vm1392, %v1385, %v1482
    %v1484 = vsel %vm1394, %v1389, %v1483
    %v1485 = vsel %vm1396, %v1419, %v1484
    %v1486 = vsel %vm1398, %v1447, %v1485
    %v1487 = vsel %vm1400, %v1475, %v1486
    %1488 = vrot.lane.b32.xlu0 %v1481, 48
    %v1489 = vpop.permute.xlu0 %1488
    %1490 = vrot.lane.b32.xlu0 %v1487, 48
    %v1491 = vpop.permute.xlu0 %1490
    %v1496 = vlaneseq
    %v1497 = vshrl.u32 %v1496, 7
    %v1498 = vsub.s32 0, %v1497
    %v1499 = vrot.slane %v1285, %v1498
    %v1500 = vlaneseq
    %v1501 = vshrl.u32 %v1500, 7
    %v1502 = vsub.s32 0, %v1501
    %v1503 = vrot.slane %v1299, %v1502
    %v1504 = vsel %vm1390, %v1357, %v1353
    %v1505 = vsel %vm1392, %v1361, %v1504
    %v1506 = vsel %vm1394, %v1415, %v1505
    %v1507 = vsel %vm1396, %v1443, %v1506
    %v1508 = vsel %vm1398, %v1471, %v1507
    %v1509 = vsel %vm1400, %v1499, %v1508
    %v1510 = vsel %vm1390, %v1385, %v1381
    %v1511 = vsel %vm1392, %v1389, %v1510
    %v1512 = vsel %vm1394, %v1419, %v1511
    %v1513 = vsel %vm1396, %v1447, %v1512
    %v1514 = vsel %vm1398, %v1475, %v1513
    %v1515 = vsel %vm1400, %v1503, %v1514
    %1516 = vrot.lane.b32.xlu0 %v1509, 64
    %v1517 = vpop.permute.xlu0 %1516
    %1518 = vrot.lane.b32.xlu0 %v1515, 64
    %v1519 = vpop.permute.xlu0 %1518
    %v1524 = vlaneseq
    %v1525 = vshrl.u32 %v1524, 7
    %v1526 = vsub.s32 0, %v1525
    %v1527 = vrot.slane %v1286, %v1526
    %v1528 = vlaneseq
    %v1529 = vshrl.u32 %v1528, 7
    %v1530 = vsub.s32 0, %v1529
    %v1531 = vrot.slane %v1300, %v1530
    %v1532 = vsel %vm1390, %v1361, %v1357
    %v1533 = vsel %vm1392, %v1415, %v1532
    %v1534 = vsel %vm1394, %v1443, %v1533
    %v1535 = vsel %vm1396, %v1471, %v1534
    %v1536 = vsel %vm1398, %v1499, %v1535
    %v1537 = vsel %vm1400, %v1527, %v1536
    %v1538 = vsel %vm1390, %v1389, %v1385
    %v1539 = vsel %vm1392, %v1419, %v1538
    %v1540 = vsel %vm1394, %v1447, %v1539
    %v1541 = vsel %vm1396, %v1475, %v1540
    %v1542 = vsel %vm1398, %v1503, %v1541
    %v1543 = vsel %vm1400, %v1531, %v1542
    %1544 = vrot.lane.b32.xlu0 %v1537, 80
    %v1545 = vpop.permute.xlu0 %1544
    %1546 = vrot.lane.b32.xlu0 %v1543, 80
    %v1547 = vpop.permute.xlu0 %1546
    %v1552 = vlaneseq
    %v1553 = vshrl.u32 %v1552, 7
    %v1554 = vsub.s32 0, %v1553
    %v1555 = vrot.slane %v1287, %v1554
    %v1556 = vlaneseq
    %v1557 = vshrl.u32 %v1556, 7
    %v1558 = vsub.s32 0, %v1557
    %v1559 = vrot.slane %v1301, %v1558
    %v1560 = vsel %vm1390, %v1415, %v1361
    %v1561 = vsel %vm1392, %v1443, %v1560
    %v1562 = vsel %vm1394, %v1471, %v1561
    %v1563 = vsel %vm1396, %v1499, %v1562
    %v1564 = vsel %vm1398, %v1527, %v1563
    %v1565 = vsel %vm1400, %v1555, %v1564
    %v1566 = vsel %vm1390, %v1419, %v1389
    %v1567 = vsel %vm1392, %v1447, %v1566
    %v1568 = vsel %vm1394, %v1475, %v1567
    %v1569 = vsel %vm1396, %v1503, %v1568
    %v1570 = vsel %vm1398, %v1531, %v1569
    %v1571 = vsel %vm1400, %v1559, %v1570
    %1572 = vrot.lane.b32.xlu0 %v1565, 96
    %v1573 = vpop.permute.xlu0 %1572
    %1574 = vrot.lane.b32.xlu0 %v1571, 96
    %v1575 = vpop.permute.xlu0 %1574
    %v1580 = vlaneseq
    %v1581 = vshrl.u32 %v1580, 7
    %v1582 = vsub.s32 0, %v1581
    %v1583 = vrot.slane %v1288, %v1582
    %v1584 = vlaneseq
    %v1585 = vshrl.u32 %v1584, 7
    %v1586 = vsub.s32 0, %v1585
    %v1587 = vrot.slane %v1302, %v1586
    %v1588 = vsel %vm1390, %v1443, %v1415
    %v1589 = vsel %vm1392, %v1471, %v1588
    %v1590 = vsel %vm1394, %v1499, %v1589
    %v1591 = vsel %vm1396, %v1527, %v1590
    %v1592 = vsel %vm1398, %v1555, %v1591
    %v1593 = vsel %vm1400, %v1583, %v1592
    %v1594 = vsel %vm1390, %v1447, %v1419
    %v1595 = vsel %vm1392, %v1475, %v1594
    %v1596 = vsel %vm1394, %v1503, %v1595
    %v1597 = vsel %vm1396, %v1531, %v1596
    %v1598 = vsel %vm1398, %v1559, %v1597
    %v1599 = vsel %vm1400, %v1587, %v1598
    %1600 = vrot.lane.b32.xlu0 %v1593, 112
    %v1601 = vpop.permute.xlu0 %1600
    %1602 = vrot.lane.b32.xlu0 %v1599, 112
    %v1603 = vpop.permute.xlu0 %1602
    %v1606 = vsel %vm667, %v1401, %v1433
    %v1607 = vsel %vm667, %v1407, %v1435
    %v1608 = vsel %vm733, %v1606, %v1461
    %v1609 = vsel %vm733, %v1607, %v1463
    %vm1610 = vcmask 392192
    %v1611 = vsel %vm1610, %v1608, %v1489
    %v1612 = vsel %vm1610, %v1609, %v1491
    %vm1613 = vcmask 523264
    %v1614 = vsel %vm1613, %v1611, %v1517
    %v1615 = vsel %vm1613, %v1612, %v1519
    %vm1616 = vcmask 654336
    %v1617 = vsel %vm1616, %v1614, %v1545
    %v1618 = vsel %vm1616, %v1615, %v1547
    %vm1619 = vcmask 785408
    %v1620 = vsel %vm1619, %v1617, %v1573
    %v1621 = vsel %vm1619, %v1618, %v1575
    %vm1622 = vcmask 916480
    %v1623 = vsel %vm1622, %v1620, %v1601
    %v1624 = vsel %vm1622, %v1621, %v1603
    %v1627 = vcombine.high %v1623, %v1623
    %v1629 = vunpack.c.l.s4 1966171168
    %v1630 = vunpack.c.0.s8 %v1629
    %v1631 = vlaneseq
    %v1632 = vshrl.u32 %v1631, 7
    %v1633 = vsub.s32 %v1630, %v1632
    %v1634 = vrot.slane %v1623, %v1633
    %v1636 = vunpack.c.l.s4 1966171168
    %v1637 = vunpack.c.0.s8 %v1636
    %v1638 = vlaneseq
    %v1639 = vshrl.u32 %v1638, 7
    %v1640 = vsub.s32 %v1637, %v1639
    %v1641 = vrot.slane %v1627, %v1640
    %v1642 = vcombine.high %v1634, %v1634
    %v1643 = vcombine.high %v1641, %v1641
    %v1645 = vunpack.c.l.s4 1966171168
    %v1646 = vunpack.c.0.s8 %v1645
    %v1647 = vlaneseq
    %v1648 = vshrl.u32 %v1647, 7
    %v1649 = vsub.s32 %v1646, %v1648
    %v1650 = vrot.slane %v1634, %v1649
    %v1652 = vunpack.c.l.s4 1966171168
    %v1653 = vunpack.c.0.s8 %v1652
    %v1654 = vlaneseq
    %v1655 = vshrl.u32 %v1654, 7
    %v1656 = vsub.s32 %v1653, %v1655
    %v1657 = vrot.slane %v1641, %v1656
    %v1659 = vunpack.c.l.s4 1966171168
    %v1660 = vunpack.c.0.s8 %v1659
    %v1661 = vlaneseq
    %v1662 = vshrl.u32 %v1661, 7
    %v1663 = vsub.s32 %v1660, %v1662
    %v1664 = vrot.slane %v1642, %v1663
    %v1666 = vunpack.c.l.s4 1966171168
    %v1667 = vunpack.c.0.s8 %v1666
    %v1668 = vlaneseq
    %v1669 = vshrl.u32 %v1668, 7
    %v1670 = vsub.s32 %v1667, %v1669
    %v1671 = vrot.slane %v1643, %v1670
    %v1672 = vcombine.high %v1650, %v1650
    %v1673 = vcombine.high %v1657, %v1657
    %v1674 = vcombine.high %v1664, %v1664
    %v1675 = vcombine.high %v1624, %v1624
    %v1677 = vunpack.c.l.s4 1966171168
    %v1678 = vunpack.c.0.s8 %v1677
    %v1679 = vlaneseq
    %v1680 = vshrl.u32 %v1679, 7
    %v1681 = vsub.s32 %v1678, %v1680
    %v1682 = vrot.slane %v1624, %v1681
    %v1684 = vunpack.c.l.s4 1966171168
    %v1685 = vunpack.c.0.s8 %v1684
    %v1686 = vlaneseq
    %v1687 = vshrl.u32 %v1686, 7
    %v1688 = vsub.s32 %v1685, %v1687
    %v1689 = vrot.slane %v1675, %v1688
    %v1690 = vcombine.high %v1682, %v1682
    %v1691 = vcombine.high %v1689, %v1689
    %v1693 = vunpack.c.l.s4 1966171168
    %v1694 = vunpack.c.0.s8 %v1693
    %v1695 = vlaneseq
    %v1696 = vshrl.u32 %v1695, 7
    %v1697 = vsub.s32 %v1694, %v1696
    %v1698 = vrot.slane %v1682, %v1697
    %v1700 = vunpack.c.l.s4 1966171168
    %v1701 = vunpack.c.0.s8 %v1700
    %v1702 = vlaneseq
    %v1703 = vshrl.u32 %v1702, 7
    %v1704 = vsub.s32 %v1701, %v1703
    %v1705 = vrot.slane %v1689, %v1704
    %v1707 = vunpack.c.l.s4 1966171168
    %v1708 = vunpack.c.0.s8 %v1707
    %v1709 = vlaneseq
    %v1710 = vshrl.u32 %v1709, 7
    %v1711 = vsub.s32 %v1708, %v1710
    %v1712 = vrot.slane %v1690, %v1711
    %v1714 = vunpack.c.l.s4 1966171168
    %v1715 = vunpack.c.0.s8 %v1714
    %v1716 = vlaneseq
    %v1717 = vshrl.u32 %v1716, 7
    %v1718 = vsub.s32 %v1715, %v1717
    %v1719 = vrot.slane %v1691, %v1718
    %v1720 = vcombine.high %v1698, %v1698
    %v1721 = vcombine.high %v1705, %v1705
    %v1722 = vcombine.high %v1712, %v1712
    %v1724 = vlaneseq
    %v1725 = vshrl.u32 %v1724, 7
    %v1726 = vsub.s32 0, %v1725
    %v1727 = vrot.slane %v1319, %v1726
    %v1729 = vcombine.low %v1650, %v1664
    %v1730 = vcombine.low %v1672, %v1674
    %v1731 = vcombine.low %v1657, %v1671
    %v1732 = vcombine.low %v1673, %v1698
    %v1734 = vunpack.c.l.s4 1966171168
    %v1735 = vunpack.c.0.s8 %v1734
    %v1736 = vlaneseq
    %v1737 = vshrl.u32 %v1736, 7
    %v1738 = vsub.s32 %v1735, %v1737
    %v1739 = vrot.slane %v1729, %v1738
    %v1741 = vunpack.c.l.s4 1966171168
    %v1742 = vunpack.c.0.s8 %v1741
    %v1743 = vlaneseq
    %v1744 = vshrl.u32 %v1743, 7
    %v1745 = vsub.s32 %v1742, %v1744
    %v1746 = vrot.slane %v1730, %v1745
    %v1748 = vunpack.c.l.s4 1966171168
    %v1749 = vunpack.c.0.s8 %v1748
    %v1750 = vlaneseq
    %v1751 = vshrl.u32 %v1750, 7
    %v1752 = vsub.s32 %v1749, %v1751
    %v1753 = vrot.slane %v1731, %v1752
    %v1755 = vunpack.c.l.s4 1966171168
    %v1756 = vunpack.c.0.s8 %v1755
    %v1757 = vlaneseq
    %v1758 = vshrl.u32 %v1757, 7
    %v1759 = vsub.s32 %v1756, %v1758
    %v1760 = vrot.slane %v1732, %v1759
    %v1761 = vcombine.low %v1739, %v1746
    %v1762 = vcombine.low %v1753, %v1760
    %v1764 = vunpack.c.l.s4 1966171168
    %v1765 = vunpack.c.0.s8 %v1764
    %v1766 = vlaneseq
    %v1767 = vshrl.u32 %v1766, 7
    %v1768 = vsub.s32 %v1765, %v1767
    %v1769 = vrot.slane %v1761, %v1768
    %v1771 = vunpack.c.l.s4 1966171168
    %v1772 = vunpack.c.0.s8 %v1771
    %v1773 = vlaneseq
    %v1774 = vshrl.u32 %v1773, 7
    %v1775 = vsub.s32 %v1772, %v1774
    %v1776 = vrot.slane %v1762, %v1775
    %v1777 = vcombine.low %v1769, %v1776
    %v1778 = vcombine.low %v1712, %v1720
    %v1779 = vcombine.low %v1722, %v1705
    %v1780 = vcombine.low %v1719, %v1721
    %v1782 = vunpack.c.l.s4 1966171168
    %v1783 = vunpack.c.0.s8 %v1782
    %v1784 = vlaneseq
    %v1785 = vshrl.u32 %v1784, 7
    %v1786 = vsub.s32 %v1783, %v1785
    %v1787 = vrot.slane %v1778, %v1786
    %v1789 = vunpack.c.l.s4 1966171168
    %v1790 = vunpack.c.0.s8 %v1789
    %v1791 = vlaneseq
    %v1792 = vshrl.u32 %v1791, 7
    %v1793 = vsub.s32 %v1790, %v1792
    %v1794 = vrot.slane %v1779, %v1793
    %v1796 = vunpack.c.l.s4 1966171168
    %v1797 = vunpack.c.0.s8 %v1796
    %v1798 = vlaneseq
    %v1799 = vshrl.u32 %v1798, 7
    %v1800 = vsub.s32 %v1797, %v1799
    %v1801 = vrot.slane %v1780, %v1800
    %v1802 = vcombine.low %v1787, %v1794
    %v1804 = vunpack.c.l.s4 1966171168
    %v1805 = vunpack.c.0.s8 %v1804
    %v1806 = vlaneseq
    %v1807 = vshrl.u32 %v1806, 7
    %v1808 = vsub.s32 %v1805, %v1807
    %v1809 = vrot.slane %v1802, %v1808
    %v1811 = vunpack.c.l.s4 1966171168
    %v1812 = vunpack.c.0.s8 %v1811
    %v1813 = vlaneseq
    %v1814 = vshrl.u32 %v1813, 7
    %v1815 = vsub.s32 %v1812, %v1814
    %v1816 = vrot.slane %v1801, %v1815
    %v1817 = vcombine.low %v1809, %v1816
    %1820 = vmatprep.subr.mxu0 0.0
    %1821 = vmatpush1.msra.mxu0 %v1303
    %1822 = vmatprep.subr.mxu0 0.0
    %1823 = vmatpush1.msra.mxu0 %v1304
    %1824 = vmatprep.subr.mxu0 0.0
    %1825 = vmatpush1.msra.mxu0 %v1305
    %1826 = vmatprep.subr.mxu0 0.0
    %1827 = vmatpush1.msra.mxu0 %v1306
    %1828 = vmatprep.subr.mxu0 0.0
    %1829 = vmatpush1.msra.mxu0 %v1307
    %1830 = vmatprep.subr.mxu0 0.0
    %1831 = vmatpush1.msra.mxu0 %v1308
    %1832 = vmatprep.subr.mxu0 0.0
    %1833 = vmatpush1.msra.mxu0 %v1309
    %1834 = vmatprep.subr.mxu0 0.0
    %1835 = vmatpush1.msra.mxu0 %v1310
    %1836 = vmatprep.subr.mxu0 0.0
    %1837 = vmatpush1.msra.mxu0 %v1311
    %1838 = vmatprep.subr.mxu0 0.0
    %1839 = vmatpush1.msra.mxu0 %v1312
    %1840 = vmatprep.subr.mxu0 0.0
    %1841 = vmatpush1.msra.mxu0 %v1313
    %1842 = vmatprep.subr.mxu0 0.0
    %1843 = vmatpush1.msra.mxu0 %v1314
    %1844 = vmatprep.subr.mxu0 0.0
    %1845 = vmatpush1.msra.mxu0 %v1315
    %1846 = vmatprep.subr.mxu0 0.0
    %1847 = vmatpush1.msra.mxu0 %v1316
    %1848 = vmatprep.subr.mxu0 0.0
    %1849 = vmatpush1.msra.mxu0 %v1317
    %1850 = vmatprep.subr.mxu0 0.0
    %1851 = vmatpush1.msra.mxu0 %v1318
    %1852 = vmatprep.subr.mxu0 0.0
    %1853 = vmatpush1.msra.mxu0 0.0
    %1854 = vmatprep.subr.mxu0 0.0
    %1855 = vmatpush1.msra.mxu0 0.0
    %1856 = vmatprep.subr.mxu0 0.0
    %1857 = vmatpush1.msra.mxu0 0.0
    %1858 = vmatprep.subr.mxu0 0.0
    %1859 = vmatpush1.msra.mxu0 0.0
    %1860 = vmatprep.subr.mxu0 0.0
    %1861 = vmatpush1.msra.mxu0 0.0
    %1862 = vmatprep.subr.mxu0 0.0
    %1863 = vmatpush1.msra.mxu0 0.0
    %1864 = vmatprep.subr.mxu0 0.0
    %1865 = vmatpush1.msra.mxu0 0.0
    %1866 = vmatprep.subr.mxu0 0.0
    %1867 = vmatpush1.msra.mxu0 0.0
    %1868 = vmatprep.subr.mxu0 0.0
    %1869 = vmatpush1.msra.mxu0 0.0
    %1870 = vmatprep.subr.mxu0 0.0
    %1871 = vmatpush1.msra.mxu0 0.0
    %1872 = vmatprep.subr.mxu0 0.0
    %1873 = vmatpush1.msra.mxu0 0.0
    %1874 = vmatprep.subr.mxu0 0.0
    %1875 = vmatpush1.msra.mxu0 0.0
    %1876 = vmatprep.subr.mxu0 0.0
    %1877 = vmatpush1.msra.mxu0 0.0
    %1878 = vmatprep.subr.mxu0 0.0
    %1879 = vmatpush1.msra.mxu0 0.0
    %1880 = vmatprep.subr.mxu0 0.0
    %1881 = vmatpush1.msra.mxu0 0.0
    %1882 = vmatprep.subr.mxu0 0.0
    %1883 = vmatpush1.msra.mxu0 0.0
    %1884 = vmatprep.mubr.f32.mxu0 0.0
    %1885 = vmatmul.mubr.f32.gmra.mrb[0].mxu0 %v1777
    %v1886 = vpop.f32.mrb[0].mxu0
    %v1887 = vadd.f32 %v1727, %v1886
    %v1888 = vpop.f32.mrb[0].mxu0
    %1889 = vmatprep.mubr.f32.mxu0 0.0
    %1890 = vmatmul.mubr.f32.gmra.mrb[0].mxu0 %v1817
    %v1891 = vpop.f32.mrb[0].mxu0
    %v1892 = vadd.f32 %v1727, %v1891
    %v1893 = vpop.f32.mrb[0].mxu0
    %1894 = vdwg.mxu0
    %v1895 = vmax.f32 %v1887, 0.0
    %v1896 = vmax.f32 %v1892, 0.0
    %v1897 = vld [vmem:[%s5] sm:$0xff]
    %v1898 = vld [vmem:[%s5 + $0x8] sm:$0xff]
    %v1899 = vld [vmem:[%s5 + $0x10] sm:$0xff]
    %v1900 = vld [vmem:[%s5 + $0x18] sm:$0xff]
    %v1901 = vld [vmem:[%s5 + $0x20] sm:$0xff]
    %v1902 = vld [vmem:[%s5 + $0x28] sm:$0xff]
    %v1903 = vld [vmem:[%s5 + $0x30] sm:$0xff]
    %v1904 = vld [vmem:[%s5 + $0x38] sm:$0xff]
    %v1905 = vld [vmem:[%s6] sm:$0x3]
    %v1907 = vlaneseq
    %v1908 = vshrl.u32 %v1907, 7
    %v1909 = vsub.s32 0, %v1908
    %v1910 = vrot.slane %v1905, %v1909
    %v1911 = vlaneseq
    %v1912 = vshrl.u32 %v1911, 7
    %v1913 = vsub.s32 1, %v1912
    %v1914 = vrot.slane %v1905, %v1913
    %v1918 = vsel %vm733, %v1895, 0
    %v1921 = vsel %vm733, %v1896, 0
    %1923 = vmatprep.subr.mxu0 %v1898
    %1924 = vmatpush1.msra.mxu0 %v1897
    %1925 = vmatprep.subr.mxu0 %v1900
    %1926 = vmatpush1.msra.mxu0 %v1899
    %1927 = vmatprep.subr.mxu0 %v1902
    %1928 = vmatpush1.msra.mxu0 %v1901
    %1929 = vmatprep.subr.mxu0 %v1904
    %1930 = vmatpush1.msra.mxu0 %v1903
    %1931 = vmatprep.subr.mxu0 0.0
    %1932 = vmatpush1.msra.mxu0 0.0
    %1933 = vmatprep.subr.mxu0 0.0
    %1934 = vmatpush1.msra.mxu0 0.0
    %1935 = vmatprep.subr.mxu0 0.0
    %1936 = vmatpush1.msra.mxu0 0.0
    %1937 = vmatprep.subr.mxu0 0.0
    %1938 = vmatpush1.msra.mxu0 0.0
    %1939 = vmatprep.subr.mxu0 0.0
    %1940 = vmatpush1.msra.mxu0 0.0
    %1941 = vmatprep.subr.mxu0 0.0
    %1942 = vmatpush1.msra.mxu0 0.0
    %1943 = vmatprep.subr.mxu0 0.0
    %1944 = vmatpush1.msra.mxu0 0.0
    %1945 = vmatprep.subr.mxu0 0.0
    %1946 = vmatpush1.msra.mxu0 0.0
    %1947 = vmatprep.subr.mxu0 0.0
    %1948 = vmatpush1.msra.mxu0 0.0
    %1949 = vmatprep.subr.mxu0 0.0
    %1950 = vmatpush1.msra.mxu0 0.0
    %1951 = vmatprep.subr.mxu0 0.0
    %1952 = vmatpush1.msra.mxu0 0.0
    %1953 = vmatprep.subr.mxu0 0.0
    %1954 = vmatpush1.msra.mxu0 0.0
    %1955 = vmatprep.subr.mxu0 0.0
    %1956 = vmatpush1.msra.mxu0 0.0
    %1957 = vmatprep.subr.mxu0 0.0
    %1958 = vmatpush1.msra.mxu0 0.0
    %1959 = vmatprep.subr.mxu0 0.0
    %1960 = vmatpush1.msra.mxu0 0.0
    %1961 = vmatprep.subr.mxu0 0.0
    %1962 = vmatpush1.msra.mxu0 0.0
    %1963 = vmatprep.subr.mxu0 0.0
    %1964 = vmatpush1.msra.mxu0 0.0
    %1965 = vmatprep.subr.mxu0 0.0
    %1966 = vmatpush1.msra.mxu0 0.0
    %1967 = vmatprep.subr.mxu0 0.0
    %1968 = vmatpush1.msra.mxu0 0.0
    %1969 = vmatprep.subr.mxu0 0.0
    %1970 = vmatpush1.msra.mxu0 0.0
    %1971 = vmatprep.subr.mxu0 0.0
    %1972 = vmatpush1.msra.mxu0 0.0
    %1973 = vmatprep.subr.mxu0 0.0
    %1974 = vmatpush1.msra.mxu0 0.0
    %1975 = vmatprep.subr.mxu0 0.0
    %1976 = vmatpush1.msra.mxu0 0.0
    %1977 = vmatprep.subr.mxu0 0.0
    %1978 = vmatpush1.msra.mxu0 0.0
    %1979 = vmatprep.subr.mxu0 0.0
    %1980 = vmatpush1.msra.mxu0 0.0
    %1981 = vmatprep.subr.mxu0 0.0
    %1982 = vmatpush1.msra.mxu0 0.0
    %1983 = vmatprep.subr.mxu0 0.0
    %1984 = vmatpush1.msra.mxu0 0.0
    %1985 = vmatprep.subr.mxu0 0.0
    %1986 = vmatpush1.msra.mxu0 0.0
    %1987 = vmatprep.mubr.f32.mxu0 0.0
    %1988 = vmatmul.mubr.f32.gmra.mrb[0].mxu0 %v1918
    %v1989 = vpop.f32.mrb[0].mxu0
    %v1990 = vadd.f32 %v1910, %v1989
    %v1991 = vpop.f32.mrb[0].mxu0
    %v1992 = vadd.f32 %v1914, %v1991
    %1993 = vmatprep.mubr.f32.mxu0 0.0
    %1994 = vmatmul.mubr.f32.gmra.mrb[0].mxu0 %v1921
    %v1995 = vpop.f32.mrb[0].mxu0
    %v1996 = vadd.f32 %v1910, %v1995
    %v1997 = vpop.f32.mrb[0].mxu0
    %v1998 = vadd.f32 %v1914, %v1997
    %1999 = vdwg.mxu0
    %v2004 = vcombine.low %v1990, %v1992
    %v2005 = vcombine.high %v1990, %v1992
    %v2007 = vunpack.c.l.s4 1966171168
    %v2008 = vunpack.c.0.s8 %v2007
    %v2009 = vlaneseq
    %v2010 = vshrl.u32 %v2009, 7
    %v2011 = vsub.s32 %v2008, %v2010
    %v2012 = vrot.slane %v2004, %v2011
    %v2014 = vunpack.c.l.s4 1966171168
    %v2015 = vunpack.c.0.s8 %v2014
    %v2016 = vlaneseq
    %v2017 = vshrl.u32 %v2016, 7
    %v2018 = vsub.s32 %v2015, %v2017
    %v2019 = vrot.slane %v2005, %v2018
    %v2020 = vcombine.high %v2012, %v2012
    %v2021 = vcombine.high %v2019, %v2019
    %v2023 = vunpack.c.l.s4 1966171168
    %v2024 = vunpack.c.0.s8 %v2023
    %v2025 = vlaneseq
    %v2026 = vshrl.u32 %v2025, 7
    %v2027 = vsub.s32 %v2024, %v2026
    %v2028 = vrot.slane %v2012, %v2027
    %v2030 = vunpack.c.l.s4 1966171168
    %v2031 = vunpack.c.0.s8 %v2030
    %v2032 = vlaneseq
    %v2033 = vshrl.u32 %v2032, 7
    %v2034 = vsub.s32 %v2031, %v2033
    %v2035 = vrot.slane %v2019, %v2034
    %v2037 = vunpack.c.l.s4 1966171168
    %v2038 = vunpack.c.0.s8 %v2037
    %v2039 = vlaneseq
    %v2040 = vshrl.u32 %v2039, 7
    %v2041 = vsub.s32 %v2038, %v2040
    %v2042 = vrot.slane %v2020, %v2041
    %v2044 = vunpack.c.l.s4 1966171168
    %v2045 = vunpack.c.0.s8 %v2044
    %v2046 = vlaneseq
    %v2047 = vshrl.u32 %v2046, 7
    %v2048 = vsub.s32 %v2045, %v2047
    %v2049 = vrot.slane %v2021, %v2048
    %v2050 = vcombine.high %v2028, %v2028
    %v2051 = vcombine.high %v2035, %v2035
    %v2052 = vcombine.high %v2042, %v2042
    %v2053 = vcombine.high %v2049, %v2049
    %v2054 = vcombine.low %v1996, %v1998
    %v2055 = vcombine.high %v1996, %v1998
    %v2057 = vunpack.c.l.s4 1966171168
    %v2058 = vunpack.c.0.s8 %v2057
    %v2059 = vlaneseq
    %v2060 = vshrl.u32 %v2059, 7
    %v2061 = vsub.s32 %v2058, %v2060
    %v2062 = vrot.slane %v2054, %v2061
    %v2064 = vunpack.c.l.s4 1966171168
    %v2065 = vunpack.c.0.s8 %v2064
    %v2066 = vlaneseq
    %v2067 = vshrl.u32 %v2066, 7
    %v2068 = vsub.s32 %v2065, %v2067
    %v2069 = vrot.slane %v2055, %v2068
    %v2070 = vcombine.high %v2062, %v2062
    %v2071 = vcombine.high %v2069, %v2069
    %v2073 = vunpack.c.l.s4 1966171168
    %v2074 = vunpack.c.0.s8 %v2073
    %v2075 = vlaneseq
    %v2076 = vshrl.u32 %v2075, 7
    %v2077 = vsub.s32 %v2074, %v2076
    %v2078 = vrot.slane %v2062, %v2077
    %v2080 = vunpack.c.l.s4 1966171168
    %v2081 = vunpack.c.0.s8 %v2080
    %v2082 = vlaneseq
    %v2083 = vshrl.u32 %v2082, 7
    %v2084 = vsub.s32 %v2081, %v2083
    %v2085 = vrot.slane %v2069, %v2084
    %v2087 = vunpack.c.l.s4 1966171168
    %v2088 = vunpack.c.0.s8 %v2087
    %v2089 = vlaneseq
    %v2090 = vshrl.u32 %v2089, 7
    %v2091 = vsub.s32 %v2088, %v2090
    %v2092 = vrot.slane %v2070, %v2091
    %v2094 = vunpack.c.l.s4 1966171168
    %v2095 = vunpack.c.0.s8 %v2094
    %v2096 = vlaneseq
    %v2097 = vshrl.u32 %v2096, 7
    %v2098 = vsub.s32 %v2095, %v2097
    %v2099 = vrot.slane %v2071, %v2098
    %v2100 = vcombine.high %v2078, %v2078
    %v2101 = vcombine.high %v2092, %v2092
    %v2102 = vrot.slane %v2051, 1
    %v2103 = vrot.slane %v2099, 1
    %v2104 = vcombine.low %v2028, %v2053
    %v2106 = vunpack.c.l.s4 1966171168
    %v2107 = vunpack.c.0.s8 %v2106
    %v2108 = vlaneseq
    %v2109 = vshrl.u32 %v2108, 7
    %v2110 = vsub.s32 %v2107, %v2109
    %v2111 = vrot.slane %v2104, %v2110
    %v2113 = vunpack.c.l.s4 1966171168
    %v2114 = vunpack.c.0.s8 %v2113
    %v2115 = vlaneseq
    %v2116 = vshrl.u32 %v2115, 7
    %v2117 = vsub.s32 %v2114, %v2116
    %v2118 = vrot.slane %v2111, %v2117
    %v2120 = vcombine.low %v2102, %v2103
    %v2122 = vunpack.c.l.s4 1966171168
    %v2123 = vunpack.c.0.s8 %v2122
    %v2124 = vlaneseq
    %v2125 = vshrl.u32 %v2124, 7
    %v2126 = vsub.s32 %v2123, %v2125
    %v2127 = vrot.slane %v2120, %v2126
    %v2129 = vunpack.c.l.s4 1966171168
    %v2130 = vunpack.c.0.s8 %v2129
    %v2131 = vlaneseq
    %v2132 = vshrl.u32 %v2131, 7
    %v2133 = vsub.s32 %v2130, %v2132
    %v2134 = vrot.slane %v2127, %v2133
    %v2136 = vrot.slane %v2049, 1
    %v2137 = vrot.slane %v2085, 1
    %v2138 = vcombine.low %v2042, %v2078
    %v2140 = vunpack.c.l.s4 1966171168
    %v2141 = vunpack.c.0.s8 %v2140
    %v2142 = vlaneseq
    %v2143 = vshrl.u32 %v2142, 7
    %v2144 = vsub.s32 %v2141, %v2143
    %v2145 = vrot.slane %v2138, %v2144
    %v2147 = vunpack.c.l.s4 1966171168
    %v2148 = vunpack.c.0.s8 %v2147
    %v2149 = vlaneseq
    %v2150 = vshrl.u32 %v2149, 7
    %v2151 = vsub.s32 %v2148, %v2150
    %v2152 = vrot.slane %v2145, %v2151
    %v2154 = vcombine.low %v2136, %v2137
    %v2156 = vunpack.c.l.s4 1966171168
    %v2157 = vunpack.c.0.s8 %v2156
    %v2158 = vlaneseq
    %v2159 = vshrl.u32 %v2158, 7
    %v2160 = vsub.s32 %v2157, %v2159
    %v2161 = vrot.slane %v2154, %v2160
    %v2163 = vunpack.c.l.s4 1966171168
    %v2164 = vunpack.c.0.s8 %v2163
    %v2165 = vlaneseq
    %v2166 = vshrl.u32 %v2165, 7
    %v2167 = vsub.s32 %v2164, %v2166
    %v2168 = vrot.slane %v2161, %v2167
    %v2170 = vrot.slane %v2035, 1
    %v2171 = vrot.slane %v2101, 1
    %v2172 = vcombine.low %v2050, %v2092
    %v2174 = vunpack.c.l.s4 1966171168
    %v2175 = vunpack.c.0.s8 %v2174
    %v2176 = vlaneseq
    %v2177 = vshrl.u32 %v2176, 7
    %v2178 = vsub.s32 %v2175, %v2177
    %v2179 = vrot.slane %v2172, %v2178
    %v2181 = vunpack.c.l.s4 1966171168
    %v2182 = vunpack.c.0.s8 %v2181
    %v2183 = vlaneseq
    %v2184 = vshrl.u32 %v2183, 7
    %v2185 = vsub.s32 %v2182, %v2184
    %v2186 = vrot.slane %v2179, %v2185
    %v2188 = vcombine.low %v2170, %v2171
    %v2190 = vunpack.c.l.s4 1966171168
    %v2191 = vunpack.c.0.s8 %v2190
    %v2192 = vlaneseq
    %v2193 = vshrl.u32 %v2192, 7
    %v2194 = vsub.s32 %v2191, %v2193
    %v2195 = vrot.slane %v2188, %v2194
    %v2197 = vunpack.c.l.s4 1966171168
    %v2198 = vunpack.c.0.s8 %v2197
    %v2199 = vlaneseq
    %v2200 = vshrl.u32 %v2199, 7
    %v2201 = vsub.s32 %v2198, %v2200
    %v2202 = vrot.slane %v2195, %v2201
    %v2204 = vrot.slane %v2052, 1
    %v2205 = vrot.slane %v2100, 1
    %v2206 = vcombine.low %v2052, %v2100
    %v2208 = vunpack.c.l.s4 1966171168
    %v2209 = vunpack.c.0.s8 %v2208
    %v2210 = vlaneseq
    %v2211 = vshrl.u32 %v2210, 7
    %v2212 = vsub.s32 %v2209, %v2211
    %v2213 = vrot.slane %v2206, %v2212
    %v2215 = vunpack.c.l.s4 1966171168
    %v2216 = vunpack.c.0.s8 %v2215
    %v2217 = vlaneseq
    %v2218 = vshrl.u32 %v2217, 7
    %v2219 = vsub.s32 %v2216, %v2218
    %v2220 = vrot.slane %v2213, %v2219
    %v2222 = vcombine.low %v2204, %v2205
    %v2224 = vunpack.c.l.s4 1966171168
    %v2225 = vunpack.c.0.s8 %v2224
    %v2226 = vlaneseq
    %v2227 = vshrl.u32 %v2226, 7
    %v2228 = vsub.s32 %v2225, %v2227
    %v2229 = vrot.slane %v2222, %v2228
    %v2231 = vunpack.c.l.s4 1966171168
    %v2232 = vunpack.c.0.s8 %v2231
    %v2233 = vlaneseq
    %v2234 = vshrl.u32 %v2233, 7
    %v2235 = vsub.s32 %v2232, %v2234
    %v2236 = vrot.slane %v2229, %v2235
    %v2238 = vrot.slane %v2050, 1
    %v2239 = vrot.slane %v2092, 1
    %v2240 = vcombine.low %v2035, %v2101
    %v2242 = vunpack.c.l.s4 1966171168
    %v2243 = vunpack.c.0.s8 %v2242
    %v2244 = vlaneseq
    %v2245 = vshrl.u32 %v2244, 7
    %v2246 = vsub.s32 %v2243, %v2245
    %v2247 = vrot.slane %v2240, %v2246
    %v2249 = vunpack.c.l.s4 1966171168
    %v2250 = vunpack.c.0.s8 %v2249
    %v2251 = vlaneseq
    %v2252 = vshrl.u32 %v2251, 7
    %v2253 = vsub.s32 %v2250, %v2252
    %v2254 = vrot.slane %v2247, %v2253
    %v2256 = vcombine.low %v2238, %v2239
    %v2258 = vunpack.c.l.s4 1966171168
    %v2259 = vunpack.c.0.s8 %v2258
    %v2260 = vlaneseq
    %v2261 = vshrl.u32 %v2260, 7
    %v2262 = vsub.s32 %v2259, %v2261
    %v2263 = vrot.slane %v2256, %v2262
    %v2265 = vunpack.c.l.s4 1966171168
    %v2266 = vunpack.c.0.s8 %v2265
    %v2267 = vlaneseq
    %v2268 = vshrl.u32 %v2267, 7
    %v2269 = vsub.s32 %v2266, %v2268
    %v2270 = vrot.slane %v2263, %v2269
    %v2272 = vrot.slane %v2042, 1
    %v2273 = vrot.slane %v2078, 1
    %v2274 = vcombine.low %v2049, %v2085
    %v2276 = vunpack.c.l.s4 1966171168
    %v2277 = vunpack.c.0.s8 %v2276
    %v2278 = vlaneseq
    %v2279 = vshrl.u32 %v2278, 7
    %v2280 = vsub.s32 %v2277, %v2279
    %v2281 = vrot.slane %v2274, %v2280
    %v2283 = vunpack.c.l.s4 1966171168
    %v2284 = vunpack.c.0.s8 %v2283
    %v2285 = vlaneseq
    %v2286 = vshrl.u32 %v2285, 7
    %v2287 = vsub.s32 %v2284, %v2286
    %v2288 = vrot.slane %v2281, %v2287
    %v2290 = vcombine.low %v2272, %v2273
    %v2292 = vunpack.c.l.s4 1966171168
    %v2293 = vunpack.c.0.s8 %v2292
    %v2294 = vlaneseq
    %v2295 = vshrl.u32 %v2294, 7
    %v2296 = vsub.s32 %v2293, %v2295
    %v2297 = vrot.slane %v2290, %v2296
    %v2299 = vunpack.c.l.s4 1966171168
    %v2300 = vunpack.c.0.s8 %v2299
    %v2301 = vlaneseq
    %v2302 = vshrl.u32 %v2301, 7
    %v2303 = vsub.s32 %v2300, %v2302
    %v2304 = vrot.slane %v2297, %v2303
    %v2306 = vrot.slane %v2028, 1
    %v2307 = vrot.slane %v2053, 1
    %v2308 = vcombine.low %v2051, %v2099
    %v2310 = vunpack.c.l.s4 1966171168
    %v2311 = vunpack.c.0.s8 %v2310
    %v2312 = vlaneseq
    %v2313 = vshrl.u32 %v2312, 7
    %v2314 = vsub.s32 %v2311, %v2313
    %v2315 = vrot.slane %v2308, %v2314
    %v2317 = vunpack.c.l.s4 1966171168
    %v2318 = vunpack.c.0.s8 %v2317
    %v2319 = vlaneseq
    %v2320 = vshrl.u32 %v2319, 7
    %v2321 = vsub.s32 %v2318, %v2320
    %v2322 = vrot.slane %v2315, %v2321
    %v2324 = vcombine.low %v2306, %v2307
    %v2326 = vunpack.c.l.s4 1966171168
    %v2327 = vunpack.c.0.s8 %v2326
    %v2328 = vlaneseq
    %v2329 = vshrl.u32 %v2328, 7
    %v2330 = vsub.s32 %v2327, %v2329
    %v2331 = vrot.slane %v2324, %v2330
    %v2333 = vunpack.c.l.s4 1966171168
    %v2334 = vunpack.c.0.s8 %v2333
    %v2335 = vlaneseq
    %v2336 = vshrl.u32 %v2335, 7
    %v2337 = vsub.s32 %v2334, %v2336
    %v2338 = vrot.slane %v2331, %v2337
    %v2340 = vld [vmem:[%s7] sm:$0xff]
    %v2341 = vld [vmem:[%s7 + $0x8] sm:$0xff]
    %v2342 = vld [vmem:[%s7 + $0x10] sm:$0xff]
    %v2343 = vld [vmem:[%s7 + $0x18] sm:$0xff]
    %v2344 = vld [vmem:[%s7 + $0x20] sm:$0xff]
    %v2345 = vld [vmem:[%s7 + $0x28] sm:$0xff]
    %v2346 = vld [vmem:[%s7 + $0x30] sm:$0xff]
    %v2347 = vld [vmem:[%s7 + $0x38] sm:$0xff]
    %v2348 = vld [vmem:[%s7 + $0x40] sm:$0xff]
    %v2349 = vld [vmem:[%s7 + $0x48] sm:$0xff]
    %v2350 = vld [vmem:[%s7 + $0x50] sm:$0xff]
    %v2351 = vld [vmem:[%s7 + $0x58] sm:$0xff]
    %v2352 = vld [vmem:[%s7 + $0x60] sm:$0xff]
    %v2353 = vld [vmem:[%s7 + $0x68] sm:$0xff]
    %v2354 = vld [vmem:[%s7 + $0x70] sm:$0xff]
    %v2355 = vld [vmem:[%s7 + $0x78] sm:$0xff]
    %v2357 = vsel %vm1613, 0.0, 0
    %2359 = vmatprep.subr.mxu0 %v2341
    %2360 = vmatpush1.msra.mxu0 %v2340
    %2361 = vmatprep.subr.mxu0 %v2343
    %2362 = vmatpush1.msra.mxu0 %v2342
    %2363 = vmatprep.subr.mxu0 %v2345
    %2364 = vmatpush1.msra.mxu0 %v2344
    %2365 = vmatprep.subr.mxu0 %v2347
    %2366 = vmatpush1.msra.mxu0 %v2346
    %2367 = vmatprep.subr.mxu0 %v2349
    %2368 = vmatpush1.msra.mxu0 %v2348
    %2369 = vmatprep.subr.mxu0 %v2351
    %2370 = vmatpush1.msra.mxu0 %v2350
    %2371 = vmatprep.subr.mxu0 %v2353
    %2372 = vmatpush1.msra.mxu0 %v2352
    %2373 = vmatprep.subr.mxu0 %v2355
    %2374 = vmatpush1.msra.mxu0 %v2354
    %2375 = vmatprep.subr.mxu0 0.0
    %2376 = vmatpush1.msra.mxu0 0.0
    %2377 = vmatprep.subr.mxu0 0.0
    %2378 = vmatpush1.msra.mxu0 0.0
    %2379 = vmatprep.subr.mxu0 0.0
    %2380 = vmatpush1.msra.mxu0 0.0
    %2381 = vmatprep.subr.mxu0 0.0
    %2382 = vmatpush1.msra.mxu0 0.0
    %2383 = vmatprep.subr.mxu0 0.0
    %2384 = vmatpush1.msra.mxu0 0.0
    %2385 = vmatprep.subr.mxu0 0.0
    %2386 = vmatpush1.msra.mxu0 0.0
    %2387 = vmatprep.subr.mxu0 0.0
    %2388 = vmatpush1.msra.mxu0 0.0
    %2389 = vmatprep.subr.mxu0 0.0
    %2390 = vmatpush1.msra.mxu0 0.0
    %2391 = vmatprep.subr.mxu0 0.0
    %2392 = vmatpush1.msra.mxu0 0.0
    %2393 = vmatprep.subr.mxu0 0.0
    %2394 = vmatpush1.msra.mxu0 0.0
    %2395 = vmatprep.subr.mxu0 0.0
    %2396 = vmatpush1.msra.mxu0 0.0
    %2397 = vmatprep.subr.mxu0 0.0
    %2398 = vmatpush1.msra.mxu0 0.0
    %2399 = vmatprep.subr.mxu0 0.0
    %2400 = vmatpush1.msra.mxu0 0.0
    %2401 = vmatprep.subr.mxu0 0.0
    %2402 = vmatpush1.msra.mxu0 0.0
    %2403 = vmatprep.subr.mxu0 0.0
    %2404 = vmatpush1.msra.mxu0 0.0
    %2405 = vmatprep.subr.mxu0 0.0
    %2406 = vmatpush1.msra.mxu0 0.0
    %2407 = vmatprep.subr.mxu0 0.0
    %2408 = vmatpush1.msra.mxu0 0.0
    %2409 = vmatprep.subr.mxu0 0.0
    %2410 = vmatpush1.msra.mxu0 0.0
    %2411 = vmatprep.subr.mxu0 0.0
    %2412 = vmatpush1.msra.mxu0 0.0
    %2413 = vmatprep.subr.mxu0 0.0
    %2414 = vmatpush1.msra.mxu0 0.0
    %2415 = vmatprep.subr.mxu0 0.0
    %2416 = vmatpush1.msra.mxu0 0.0
    %2417 = vmatprep.subr.mxu0 0.0
    %2418 = vmatpush1.msra.mxu0 0.0
    %2419 = vmatprep.subr.mxu0 0.0
    %2420 = vmatpush1.msra.mxu0 0.0
    %2421 = vmatprep.subr.mxu0 0.0
    %2422 = vmatpush1.msra.mxu0 0.0
    %2423 = vmatprep.mubr.f32.mxu0 0.0
    %2424 = vmatmul.mubr.f32.gmra.mrb[0].mxu0 %v2357
    %v2425 = vpop.f32.mrb[0].mxu0
    %v2426 = vadd.f32 0.0, %v2425
    %v2427 = vpop.f32.mrb[0].mxu0
    %v2428 = vadd.f32 0.0, %v2427
    %2429 = vdwg.mxu0
    %v2430 = vadd.f32 %v2118, %v2426
    %v2431 = vadd.f32 %v2134, %v2428
    %v2432 = vxor.u32 %v2430, 2147483648
    %v2433 = vxor.u32 %v2431, 2147483648
    %v2434 = vmul.f32 %v2432, 1.442695
    %v2435 = vpow.pop %v2434
    %v2436 = vmul.f32 %v2433, 1.442695
    %v2437 = vpow.pop %v2436
    %v2438 = vadd.f32 %v2435, 1.0
    %v2439 = vadd.f32 %v2437, 1.0
    %v2440 = vrcp.pop %v2438
    %v2441 = vmul.f32 1.0, %v2440
    %v2442 = vrcp.pop %v2439
    %v2443 = vmul.f32 1.0, %v2442
    %v2444 = vtanh.pop %v2430
    %v2445 = vtanh.pop %v2431
    %v2446 = vmul.f32 %v2441, 0.0
    %2448 = vrot.lane.b32.xlu0 %v2444, 64
    %v2449 = vpop.permute.xlu0 %2448
    %v2451 = vmul.f32 %v2441, %v2449
    %2453 = vrot.lane.b32.xlu0 %v2451, 32
    %v2454 = vpop.permute.xlu0 %2453
    %v2456 = vadd.f32 %v2446, %v2454
    %v2457 = vmul.f32 %v2443, 0.0
    %2459 = vrot.lane.b32.xlu0 %v2445, 64
    %v2460 = vpop.permute.xlu0 %2459
    %v2462 = vmul.f32 %v2443, %v2460
    %2464 = vrot.lane.b32.xlu0 %v2462, 32
    %v2465 = vpop.permute.xlu0 %2464
    %v2467 = vadd.f32 %v2457, %v2465
    %v2468 = vtanh.pop %v2456
    %2470 = vrot.lane.b32.xlu0 %v2468, 64
    %v2471 = vpop.permute.xlu0 %2470
    %v2473 = vmul.f32 %v2441, %v2471
    %v2474 = vtanh.pop %v2467
    %2476 = vrot.lane.b32.xlu0 %v2474, 64
    %v2477 = vpop.permute.xlu0 %2476
    %v2479 = vmul.f32 %v2443, %v2477
    %2481 = vrot.lane.b32.xlu0 %v2473, 32
    %v2482 = vpop.permute.xlu0 %2481
    %2485 = vrot.lane.b32.xlu0 %v2479, 64
    %v2486 = vpop.permute.xlu0 %2485
    %v2488 = vsel %vm733, %v2482, %v2486
    %vm2489 = vcmask 254976
    %2490 = vst.msk [vmem:[#allocation2] sm:$0x3] %vm2489, %v2482
    %s2491 = scalar_lea.vmem [#allocation2], 12
    %vm2492 = vcmask 517376
    %2493 = vst.msk [vmem:[%s2491] sm:$0x3] %vm2492, %v2486
    %v2495 = vsel %vm1613, %v2488, 0
    %2497 = vmatprep.subr.mxu0 %v2341
    %2498 = vmatpush1.msra.mxu0 %v2340
    %2499 = vmatprep.subr.mxu0 %v2343
    %2500 = vmatpush1.msra.mxu0 %v2342
    %2501 = vmatprep.subr.mxu0 %v2345
    %2502 = vmatpush1.msra.mxu0 %v2344
    %2503 = vmatprep.subr.mxu0 %v2347
    %2504 = vmatpush1.msra.mxu0 %v2346
    %2505 = vmatprep.subr.mxu0 %v2349
    %2506 = vmatpush1.msra.mxu0 %v2348
    %2507 = vmatprep.subr.mxu0 %v2351
    %2508 = vmatpush1.msra.mxu0 %v2350
    %2509 = vmatprep.subr.mxu0 %v2353
    %2510 = vmatpush1.msra.mxu0 %v2352
    %2511 = vmatprep.subr.mxu0 %v2355
    %2512 = vmatpush1.msra.mxu0 %v2354
    %2513 = vmatprep.subr.mxu0 0.0
    %2514 = vmatpush1.msra.mxu0 0.0
    %2515 = vmatprep.subr.mxu0 0.0
    %2516 = vmatpush1.msra.mxu0 0.0
    %2517 = vmatprep.subr.mxu0 0.0
    %2518 = vmatpush1.msra.mxu0 0.0
    %2519 = vmatprep.subr.mxu0 0.0
    %2520 = vmatpush1.msra.mxu0 0.0
    %2521 = vmatprep.subr.mxu0 0.0
    %2522 = vmatpush1.msra.mxu0 0.0
    %2523 = vmatprep.subr.mxu0 0.0
    %2524 = vmatpush1.msra.mxu0 0.0
    %2525 = vmatprep.subr.mxu0 0.0
    %2526 = vmatpush1.msra.mxu0 0.0
    %2527 = vmatprep.subr.mxu0 0.0
    %2528 = vmatpush1.msra.mxu0 0.0
    %2529 = vmatprep.subr.mxu0 0.0
    %2530 = vmatpush1.msra.mxu0 0.0
    %2531 = vmatprep.subr.mxu0 0.0
    %2532 = vmatpush1.msra.mxu0 0.0
    %2533 = vmatprep.subr.mxu0 0.0
    %2534 = vmatpush1.msra.mxu0 0.0
    %2535 = vmatprep.subr.mxu0 0.0
    %2536 = vmatpush1.msra.mxu0 0.0
    %2537 = vmatprep.subr.mxu0 0.0
    %2538 = vmatpush1.msra.mxu0 0.0
    %2539 = vmatprep.subr.mxu0 0.0
    %2540 = vmatpush1.msra.mxu0 0.0
    %2541 = vmatprep.subr.mxu0 0.0
    %2542 = vmatpush1.msra.mxu0 0.0
    %2543 = vmatprep.subr.mxu0 0.0
    %2544 = vmatpush1.msra.mxu0 0.0
    %2545 = vmatprep.subr.mxu0 0.0
    %2546 = vmatpush1.msra.mxu0 0.0
    %2547 = vmatprep.subr.mxu0 0.0
    %2548 = vmatpush1.msra.mxu0 0.0
    %2549 = vmatprep.subr.mxu0 0.0
    %2550 = vmatpush1.msra.mxu0 0.0
    %2551 = vmatprep.subr.mxu0 0.0
    %2552 = vmatpush1.msra.mxu0 0.0
    %2553 = vmatprep.subr.mxu0 0.0
    %2554 = vmatpush1.msra.mxu0 0.0
    %2555 = vmatprep.subr.mxu0 0.0
    %2556 = vmatpush1.msra.mxu0 0.0
    %2557 = vmatprep.subr.mxu0 0.0
    %2558 = vmatpush1.msra.mxu0 0.0
    %2559 = vmatprep.subr.mxu0 0.0
    %2560 = vmatpush1.msra.mxu0 0.0
    %2561 = vmatprep.mubr.f32.mxu0 0.0
    %2562 = vmatmul.mubr.f32.gmra.mrb[0].mxu0 %v2495
    %v2563 = vpop.f32.mrb[0].mxu0
    %v2564 = vadd.f32 0.0, %v2563
    %v2565 = vpop.f32.mrb[0].mxu0
    %v2566 = vadd.f32 0.0, %v2565
    %2567 = vdwg.mxu0
    %v2568 = vadd.f32 %v2152, %v2564
    %v2569 = vadd.f32 %v2168, %v2566
    %v2570 = vxor.u32 %v2568, 2147483648
    %v2571 = vxor.u32 %v2569, 2147483648
    %v2572 = vmul.f32 %v2570, 1.442695
    %v2573 = vpow.pop %v2572
    %v2574 = vmul.f32 %v2571, 1.442695
    %v2575 = vpow.pop %v2574
    %v2576 = vadd.f32 %v2573, 1.0
    %v2577 = vadd.f32 %v2575, 1.0
    %v2578 = vrcp.pop %v2576
    %v2579 = vmul.f32 1.0, %v2578
    %v2580 = vrcp.pop %v2577
    %v2581 = vmul.f32 1.0, %v2580
    %v2582 = vtanh.pop %v2568
    %v2583 = vtanh.pop %v2569
    %v2584 = vmul.f32 %v2579, %v2456
    %2586 = vrot.lane.b32.xlu0 %v2582, 64
    %v2587 = vpop.permute.xlu0 %2586
    %v2589 = vmul.f32 %v2579, %v2587
    %2591 = vrot.lane.b32.xlu0 %v2589, 32
    %v2592 = vpop.permute.xlu0 %2591
    %v2594 = vadd.f32 %v2584, %v2592
    %v2595 = vmul.f32 %v2581, %v2467
    %2597 = vrot.lane.b32.xlu0 %v2583, 64
    %v2598 = vpop.permute.xlu0 %2597
    %v2600 = vmul.f32 %v2581, %v2598
    %2602 = vrot.lane.b32.xlu0 %v2600, 32
    %v2603 = vpop.permute.xlu0 %2602
    %v2605 = vadd.f32 %v2595, %v2603
    %v2606 = vtanh.pop %v2594
    %2608 = vrot.lane.b32.xlu0 %v2606, 64
    %v2609 = vpop.permute.xlu0 %2608
    %v2611 = vmul.f32 %v2579, %v2609
    %v2612 = vtanh.pop %v2605
    %2614 = vrot.lane.b32.xlu0 %v2612, 64
    %v2615 = vpop.permute.xlu0 %2614
    %v2617 = vmul.f32 %v2581, %v2615
    %2619 = vrot.lane.b32.xlu0 %v2611, 32
    %v2620 = vpop.permute.xlu0 %2619
    %2623 = vrot.lane.b32.xlu0 %v2617, 64
    %v2624 = vpop.permute.xlu0 %2623
    %v2626 = vsel %vm733, %v2620, %v2624
    %s2627 = scalar_lea.vmem [#allocation2], 2
    %2628 = vst.msk [vmem:[%s2627] sm:$0x3] %vm2489, %v2620
    %s2629 = scalar_lea.vmem [#allocation2], 10
    %2630 = vst.msk [vmem:[%s2629] sm:$0x3] %vm2492, %v2624
    %v2632 = vsel %vm1613, %v2626, 0
    %2634 = vmatprep.subr.mxu0 %v2341
    %2635 = vmatpush1.msra.mxu0 %v2340
    %2636 = vmatprep.subr.mxu0 %v2343
    %2637 = vmatpush1.msra.mxu0 %v2342
    %2638 = vmatprep.subr.mxu0 %v2345
    %2639 = vmatpush1.msra.mxu0 %v2344
    %2640 = vmatprep.subr.mxu0 %v2347
    %2641 = vmatpush1.msra.mxu0 %v2346
    %2642 = vmatprep.subr.mxu0 %v2349
    %2643 = vmatpush1.msra.mxu0 %v2348
    %2644 = vmatprep.subr.mxu0 %v2351
    %2645 = vmatpush1.msra.mxu0 %v2350
    %2646 = vmatprep.subr.mxu0 %v2353
    %2647 = vmatpush1.msra.mxu0 %v2352
    %2648 = vmatprep.subr.mxu0 %v2355
    %2649 = vmatpush1.msra.mxu0 %v2354
    %2650 = vmatprep.subr.mxu0 0.0
    %2651 = vmatpush1.msra.mxu0 0.0
    %2652 = vmatprep.subr.mxu0 0.0
    %2653 = vmatpush1.msra.mxu0 0.0
    %2654 = vmatprep.subr.mxu0 0.0
    %2655 = vmatpush1.msra.mxu0 0.0
    %2656 = vmatprep.subr.mxu0 0.0
    %2657 = vmatpush1.msra.mxu0 0.0
    %2658 = vmatprep.subr.mxu0 0.0
    %2659 = vmatpush1.msra.mxu0 0.0
    %2660 = vmatprep.subr.mxu0 0.0
    %2661 = vmatpush1.msra.mxu0 0.0
    %2662 = vmatprep.subr.mxu0 0.0
    %2663 = vmatpush1.msra.mxu0 0.0
    %2664 = vmatprep.subr.mxu0 0.0
    %2665 = vmatpush1.msra.mxu0 0.0
    %2666 = vmatprep.subr.mxu0 0.0
    %2667 = vmatpush1.msra.mxu0 0.0
    %2668 = vmatprep.subr.mxu0 0.0
    %2669 = vmatpush1.msra.mxu0 0.0
    %2670 = vmatprep.subr.mxu0 0.0
    %2671 = vmatpush1.msra.mxu0 0.0
    %2672 = vmatprep.subr.mxu0 0.0
    %2673 = vmatpush1.msra.mxu0 0.0
    %2674 = vmatprep.subr.mxu0 0.0
    %2675 = vmatpush1.msra.mxu0 0.0
    %2676 = vmatprep.subr.mxu0 0.0
    %2677 = vmatpush1.msra.mxu0 0.0
    %2678 = vmatprep.subr.mxu0 0.0
    %2679 = vmatpush1.msra.mxu0 0.0
    %2680 = vmatprep.subr.mxu0 0.0
    %2681 = vmatpush1.msra.mxu0 0.0
    %2682 = vmatprep.subr.mxu0 0.0
    %2683 = vmatpush1.msra.mxu0 0.0
    %2684 = vmatprep.subr.mxu0 0.0
    %2685 = vmatpush1.msra.mxu0 0.0
    %2686 = vmatprep.subr.mxu0 0.0
    %2687 = vmatpush1.msra.mxu0 0.0
    %2688 = vmatprep.subr.mxu0 0.0
    %2689 = vmatpush1.msra.mxu0 0.0
    %2690 = vmatprep.subr.mxu0 0.0
    %2691 = vmatpush1.msra.mxu0 0.0
    %2692 = vmatprep.subr.mxu0 0.0
    %2693 = vmatpush1.msra.mxu0 0.0
    %2694 = vmatprep.subr.mxu0 0.0
    %2695 = vmatpush1.msra.mxu0 0.0
    %2696 = vmatprep.subr.mxu0 0.0
    %2697 = vmatpush1.msra.mxu0 0.0
    %2698 = vmatprep.mubr.f32.mxu0 0.0
    %2699 = vmatmul.mubr.f32.gmra.mrb[0].mxu0 %v2632
    %v2700 = vpop.f32.mrb[0].mxu0
    %v2701 = vadd.f32 0.0, %v2700
    %v2702 = vpop.f32.mrb[0].mxu0
    %v2703 = vadd.f32 0.0, %v2702
    %2704 = vdwg.mxu0
    %v2705 = vadd.f32 %v2186, %v2701
    %v2706 = vadd.f32 %v2202, %v2703
    %v2707 = vxor.u32 %v2705, 2147483648
    %v2708 = vxor.u32 %v2706, 2147483648
    %v2709 = vmul.f32 %v2707, 1.442695
    %v2710 = vpow.pop %v2709
    %v2711 = vmul.f32 %v2708, 1.442695
    %v2712 = vpow.pop %v2711
    %v2713 = vadd.f32 %v2710, 1.0
    %v2714 = vadd.f32 %v2712, 1.0
    %v2715 = vrcp.pop %v2713
    %v2716 = vmul.f32 1.0, %v2715
    %v2717 = vrcp.pop %v2714
    %v2718 = vmul.f32 1.0, %v2717
    %v2719 = vtanh.pop %v2705
    %v2720 = vtanh.pop %v2706
    %v2721 = vmul.f32 %v2716, %v2594
    %2723 = vrot.lane.b32.xlu0 %v2719, 64
    %v2724 = vpop.permute.xlu0 %2723
    %v2726 = vmul.f32 %v2716, %v2724
    %2728 = vrot.lane.b32.xlu0 %v2726, 32
    %v2729 = vpop.permute.xlu0 %2728
    %v2731 = vadd.f32 %v2721, %v2729
    %v2732 = vmul.f32 %v2718, %v2605
    %2734 = vrot.lane.b32.xlu0 %v2720, 64
    %v2735 = vpop.permute.xlu0 %2734
    %v2737 = vmul.f32 %v2718, %v2735
    %2739 = vrot.lane.b32.xlu0 %v2737, 32
    %v2740 = vpop.permute.xlu0 %2739
    %v2742 = vadd.f32 %v2732, %v2740
    %v2743 = vtanh.pop %v2731
    %2745 = vrot.lane.b32.xlu0 %v2743, 64
    %v2746 = vpop.permute.xlu0 %2745
    %v2748 = vmul.f32 %v2716, %v2746
    %v2749 = vtanh.pop %v2742
    %2751 = vrot.lane.b32.xlu0 %v2749, 64
    %v2752 = vpop.permute.xlu0 %2751
    %v2754 = vmul.f32 %v2718, %v2752
    %2756 = vrot.lane.b32.xlu0 %v2748, 32
    %v2757 = vpop.permute.xlu0 %2756
    %2760 = vrot.lane.b32.xlu0 %v2754, 64
    %v2761 = vpop.permute.xlu0 %2760
    %v2763 = vsel %vm733, %v2757, %v2761
    %s2764 = scalar_lea.vmem [#allocation2], 4
    %2765 = vst.msk [vmem:[%s2764] sm:$0x3] %vm2489, %v2757
    %s2766 = scalar_lea.vmem [#allocation2], 8
    %2767 = vst.msk [vmem:[%s2766] sm:$0x3] %vm2492, %v2761
    %v2769 = vsel %vm1613, %v2763, 0
    %2771 = vmatprep.subr.mxu0 %v2341
    %2772 = vmatpush1.msra.mxu0 %v2340
    %2773 = vmatprep.subr.mxu0 %v2343
    %2774 = vmatpush1.msra.mxu0 %v2342
    %2775 = vmatprep.subr.mxu0 %v2345
    %2776 = vmatpush1.msra.mxu0 %v2344
    %2777 = vmatprep.subr.mxu0 %v2347
    %2778 = vmatpush1.msra.mxu0 %v2346
    %2779 = vmatprep.subr.mxu0 %v2349
    %2780 = vmatpush1.msra.mxu0 %v2348
    %2781 = vmatprep.subr.mxu0 %v2351
    %2782 = vmatpush1.msra.mxu0 %v2350
    %2783 = vmatprep.subr.mxu0 %v2353
    %2784 = vmatpush1.msra.mxu0 %v2352
    %2785 = vmatprep.subr.mxu0 %v2355
    %2786 = vmatpush1.msra.mxu0 %v2354
    %2787 = vmatprep.subr.mxu0 0.0
    %2788 = vmatpush1.msra.mxu0 0.0
    %2789 = vmatprep.subr.mxu0 0.0
    %2790 = vmatpush1.msra.mxu0 0.0
    %2791 = vmatprep.subr.mxu0 0.0
    %2792 = vmatpush1.msra.mxu0 0.0
    %2793 = vmatprep.subr.mxu0 0.0
    %2794 = vmatpush1.msra.mxu0 0.0
    %2795 = vmatprep.subr.mxu0 0.0
    %2796 = vmatpush1.msra.mxu0 0.0
    %2797 = vmatprep.subr.mxu0 0.0
    %2798 = vmatpush1.msra.mxu0 0.0
    %2799 = vmatprep.subr.mxu0 0.0
    %2800 = vmatpush1.msra.mxu0 0.0
    %2801 = vmatprep.subr.mxu0 0.0
    %2802 = vmatpush1.msra.mxu0 0.0
    %2803 = vmatprep.subr.mxu0 0.0
    %2804 = vmatpush1.msra.mxu0 0.0
    %2805 = vmatprep.subr.mxu0 0.0
    %2806 = vmatpush1.msra.mxu0 0.0
    %2807 = vmatprep.subr.mxu0 0.0
    %2808 = vmatpush1.msra.mxu0 0.0
    %2809 = vmatprep.subr.mxu0 0.0
    %2810 = vmatpush1.msra.mxu0 0.0
    %2811 = vmatprep.subr.mxu0 0.0
    %2812 = vmatpush1.msra.mxu0 0.0
    %2813 = vmatprep.subr.mxu0 0.0
    %2814 = vmatpush1.msra.mxu0 0.0
    %2815 = vmatprep.subr.mxu0 0.0
    %2816 = vmatpush1.msra.mxu0 0.0
    %2817 = vmatprep.subr.mxu0 0.0
    %2818 = vmatpush1.msra.mxu0 0.0
    %2819 = vmatprep.subr.mxu0 0.0
    %2820 = vmatpush1.msra.mxu0 0.0
    %2821 = vmatprep.subr.mxu0 0.0
    %2822 = vmatpush1.msra.mxu0 0.0
    %2823 = vmatprep.subr.mxu0 0.0
    %2824 = vmatpush1.msra.mxu0 0.0
    %2825 = vmatprep.subr.mxu0 0.0
    %2826 = vmatpush1.msra.mxu0 0.0
    %2827 = vmatprep.subr.mxu0 0.0
    %2828 = vmatpush1.msra.mxu0 0.0
    %2829 = vmatprep.subr.mxu0 0.0
    %2830 = vmatpush1.msra.mxu0 0.0
    %2831 = vmatprep.subr.mxu0 0.0
    %2832 = vmatpush1.msra.mxu0 0.0
    %2833 = vmatprep.subr.mxu0 0.0
    %2834 = vmatpush1.msra.mxu0 0.0
    %2835 = vmatprep.mubr.f32.mxu0 0.0
    %2836 = vmatmul.mubr.f32.gmra.mrb[0].mxu0 %v2769
    %v2837 = vpop.f32.mrb[0].mxu0
    %v2838 = vadd.f32 0.0, %v2837
    %v2839 = vpop.f32.mrb[0].mxu0
    %v2840 = vadd.f32 0.0, %v2839
    %2841 = vdwg.mxu0
    %v2842 = vadd.f32 %v2220, %v2838
    %v2843 = vadd.f32 %v2236, %v2840
    %v2844 = vxor.u32 %v2842, 2147483648
    %v2845 = vxor.u32 %v2843, 2147483648
    %v2846 = vmul.f32 %v2844, 1.442695
    %v2847 = vpow.pop %v2846
    %v2848 = vmul.f32 %v2845, 1.442695
    %v2849 = vpow.pop %v2848
    %v2850 = vadd.f32 %v2847, 1.0
    %v2851 = vadd.f32 %v2849, 1.0
    %v2852 = vrcp.pop %v2850
    %v2853 = vmul.f32 1.0, %v2852
    %v2854 = vrcp.pop %v2851
    %v2855 = vmul.f32 1.0, %v2854
    %v2856 = vtanh.pop %v2842
    %v2857 = vtanh.pop %v2843
    %v2858 = vmul.f32 %v2853, %v2731
    %2860 = vrot.lane.b32.xlu0 %v2856, 64
    %v2861 = vpop.permute.xlu0 %2860
    %v2863 = vmul.f32 %v2853, %v2861
    %2865 = vrot.lane.b32.xlu0 %v2863, 32
    %v2866 = vpop.permute.xlu0 %2865
    %v2868 = vadd.f32 %v2858, %v2866
    %v2869 = vmul.f32 %v2855, %v2742
    %2871 = vrot.lane.b32.xlu0 %v2857, 64
    %v2872 = vpop.permute.xlu0 %2871
    %v2874 = vmul.f32 %v2855, %v2872
    %2876 = vrot.lane.b32.xlu0 %v2874, 32
    %v2877 = vpop.permute.xlu0 %2876
    %v2879 = vadd.f32 %v2869, %v2877
    %v2880 = vtanh.pop %v2868
    %2882 = vrot.lane.b32.xlu0 %v2880, 64
    %v2883 = vpop.permute.xlu0 %2882
    %v2885 = vmul.f32 %v2853, %v2883
    %v2886 = vtanh.pop %v2879
    %2888 = vrot.lane.b32.xlu0 %v2886, 64
    %v2889 = vpop.permute.xlu0 %2888
    %v2891 = vmul.f32 %v2855, %v2889
    %2893 = vrot.lane.b32.xlu0 %v2885, 32
    %v2894 = vpop.permute.xlu0 %2893
    %2897 = vrot.lane.b32.xlu0 %v2891, 64
    %v2898 = vpop.permute.xlu0 %2897
    %v2900 = vsel %vm733, %v2894, %v2898
    %s2901 = scalar_lea.vmem [#allocation2], 6
    %2902 = vst.msk [vmem:[%s2901] sm:$0x3] %vm2489, %v2894
    %2903 = vst.msk [vmem:[%s2901] sm:$0x3] %vm2492, %v2898
    %v2905 = vsel %vm1613, %v2900, 0
    %2907 = vmatprep.subr.mxu0 %v2341
    %2908 = vmatpush1.msra.mxu0 %v2340
    %2909 = vmatprep.subr.mxu0 %v2343
    %2910 = vmatpush1.msra.mxu0 %v2342
    %2911 = vmatprep.subr.mxu0 %v2345
    %2912 = vmatpush1.msra.mxu0 %v2344
    %2913 = vmatprep.subr.mxu0 %v2347
    %2914 = vmatpush1.msra.mxu0 %v2346
    %2915 = vmatprep.subr.mxu0 %v2349
    %2916 = vmatpush1.msra.mxu0 %v2348
    %2917 = vmatprep.subr.mxu0 %v2351
    %2918 = vmatpush1.msra.mxu0 %v2350
    %2919 = vmatprep.subr.mxu0 %v2353
    %2920 = vmatpush1.msra.mxu0 %v2352
    %2921 = vmatprep.subr.mxu0 %v2355
    %2922 = vmatpush1.msra.mxu0 %v2354
    %2923 = vmatprep.subr.mxu0 0.0
    %2924 = vmatpush1.msra.mxu0 0.0
    %2925 = vmatprep.subr.mxu0 0.0
    %2926 = vmatpush1.msra.mxu0 0.0
    %2927 = vmatprep.subr.mxu0 0.0
    %2928 = vmatpush1.msra.mxu0 0.0
    %2929 = vmatprep.subr.mxu0 0.0
    %2930 = vmatpush1.msra.mxu0 0.0
    %2931 = vmatprep.subr.mxu0 0.0
    %2932 = vmatpush1.msra.mxu0 0.0
    %2933 = vmatprep.subr.mxu0 0.0
    %2934 = vmatpush1.msra.mxu0 0.0
    %2935 = vmatprep.subr.mxu0 0.0
    %2936 = vmatpush1.msra.mxu0 0.0
    %2937 = vmatprep.subr.mxu0 0.0
    %2938 = vmatpush1.msra.mxu0 0.0
    %2939 = vmatprep.subr.mxu0 0.0
    %2940 = vmatpush1.msra.mxu0 0.0
    %2941 = vmatprep.subr.mxu0 0.0
    %2942 = vmatpush1.msra.mxu0 0.0
    %2943 = vmatprep.subr.mxu0 0.0
    %2944 = vmatpush1.msra.mxu0 0.0
    %2945 = vmatprep.subr.mxu0 0.0
    %2946 = vmatpush1.msra.mxu0 0.0
    %2947 = vmatprep.subr.mxu0 0.0
    %2948 = vmatpush1.msra.mxu0 0.0
    %2949 = vmatprep.subr.mxu0 0.0
    %2950 = vmatpush1.msra.mxu0 0.0
    %2951 = vmatprep.subr.mxu0 0.0
    %2952 = vmatpush1.msra.mxu0 0.0
    %2953 = vmatprep.subr.mxu0 0.0
    %2954 = vmatpush1.msra.mxu0 0.0
    %2955 = vmatprep.subr.mxu0 0.0
    %2956 = vmatpush1.msra.mxu0 0.0
    %2957 = vmatprep.subr.mxu0 0.0
    %2958 = vmatpush1.msra.mxu0 0.0
    %2959 = vmatprep.subr.mxu0 0.0
    %2960 = vmatpush1.msra.mxu0 0.0
    %2961 = vmatprep.subr.mxu0 0.0
    %2962 = vmatpush1.msra.mxu0 0.0
    %2963 = vmatprep.subr.mxu0 0.0
    %2964 = vmatpush1.msra.mxu0 0.0
    %2965 = vmatprep.subr.mxu0 0.0
    %2966 = vmatpush1.msra.mxu0 0.0
    %2967 = vmatprep.subr.mxu0 0.0
    %2968 = vmatpush1.msra.mxu0 0.0
    %2969 = vmatprep.subr.mxu0 0.0
    %2970 = vmatpush1.msra.mxu0 0.0
    %2971 = vmatprep.mubr.f32.mxu0 0.0
    %2972 = vmatmul.mubr.f32.gmra.mrb[0].mxu0 %v2905
    %v2973 = vpop.f32.mrb[0].mxu0
    %v2974 = vadd.f32 0.0, %v2973
    %v2975 = vpop.f32.mrb[0].mxu0
    %v2976 = vadd.f32 0.0, %v2975
    %2977 = vdwg.mxu0
    %v2978 = vadd.f32 %v2254, %v2974
    %v2979 = vadd.f32 %v2270, %v2976
    %v2980 = vxor.u32 %v2978, 2147483648
    %v2981 = vxor.u32 %v2979, 2147483648
    %v2982 = vmul.f32 %v2980, 1.442695
    %v2983 = vpow.pop %v2982
    %v2984 = vmul.f32 %v2981, 1.442695
    %v2985 = vpow.pop %v2984
    %v2986 = vadd.f32 %v2983, 1.0
    %v2987 = vadd.f32 %v2985, 1.0
    %v2988 = vrcp.pop %v2986
    %v2989 = vmul.f32 1.0, %v2988
    %v2990 = vrcp.pop %v2987
    %v2991 = vmul.f32 1.0, %v2990
    %v2992 = vtanh.pop %v2978
    %v2993 = vtanh.pop %v2979
    %v2994 = vmul.f32 %v2989, %v2868
    %2996 = vrot.lane.b32.xlu0 %v2992, 64
    %v2997 = vpop.permute.xlu0 %2996
    %v2999 = vmul.f32 %v2989, %v2997
    %3001 = vrot.lane.b32.xlu0 %v2999, 32
    %v3002 = vpop.permute.xlu0 %3001
    %v3004 = vadd.f32 %v2994, %v3002
    %v3005 = vmul.f32 %v2991, %v2879
    %3007 = vrot.lane.b32.xlu0 %v2993, 64
    %v3008 = vpop.permute.xlu0 %3007
    %v3010 = vmul.f32 %v2991, %v3008
    %3012 = vrot.lane.b32.xlu0 %v3010, 32
    %v3013 = vpop.permute.xlu0 %3012
    %v3015 = vadd.f32 %v3005, %v3013
    %v3016 = vtanh.pop %v3004
    %3018 = vrot.lane.b32.xlu0 %v3016, 64
    %v3019 = vpop.permute.xlu0 %3018
    %v3021 = vmul.f32 %v2989, %v3019
    %v3022 = vtanh.pop %v3015
    %3024 = vrot.lane.b32.xlu0 %v3022, 64
    %v3025 = vpop.permute.xlu0 %3024
    %v3027 = vmul.f32 %v2991, %v3025
    %3029 = vrot.lane.b32.xlu0 %v3021, 32
    %v3030 = vpop.permute.xlu0 %3029
    %3033 = vrot.lane.b32.xlu0 %v3027, 64
    %v3034 = vpop.permute.xlu0 %3033
    %v3036 = vsel %vm733, %v3030, %v3034
    %3037 = vst.msk [vmem:[%s2766] sm:$0x3] %vm2489, %v3030
    %3038 = vst.msk [vmem:[%s2764] sm:$0x3] %vm2492, %v3034
    %v3040 = vsel %vm1613, %v3036, 0
    %3042 = vmatprep.subr.mxu0 %v2341
    %3043 = vmatpush1.msra.mxu0 %v2340
    %3044 = vmatprep.subr.mxu0 %v2343
    %3045 = vmatpush1.msra.mxu0 %v2342
    %3046 = vmatprep.subr.mxu0 %v2345
    %3047 = vmatpush1.msra.mxu0 %v2344
    %3048 = vmatprep.subr.mxu0 %v2347
    %3049 = vmatpush1.msra.mxu0 %v2346
    %3050 = vmatprep.subr.mxu0 %v2349
    %3051 = vmatpush1.msra.mxu0 %v2348
    %3052 = vmatprep.subr.mxu0 %v2351
    %3053 = vmatpush1.msra.mxu0 %v2350
    %3054 = vmatprep.subr.mxu0 %v2353
    %3055 = vmatpush1.msra.mxu0 %v2352
    %3056 = vmatprep.subr.mxu0 %v2355
    %3057 = vmatpush1.msra.mxu0 %v2354
    %3058 = vmatprep.subr.mxu0 0.0
    %3059 = vmatpush1.msra.mxu0 0.0
    %3060 = vmatprep.subr.mxu0 0.0
    %3061 = vmatpush1.msra.mxu0 0.0
    %3062 = vmatprep.subr.mxu0 0.0
    %3063 = vmatpush1.msra.mxu0 0.0
    %3064 = vmatprep.subr.mxu0 0.0
    %3065 = vmatpush1.msra.mxu0 0.0
    %3066 = vmatprep.subr.mxu0 0.0
    %3067 = vmatpush1.msra.mxu0 0.0
    %3068 = vmatprep.subr.mxu0 0.0
    %3069 = vmatpush1.msra.mxu0 0.0
    %3070 = vmatprep.subr.mxu0 0.0
    %3071 = vmatpush1.msra.mxu0 0.0
    %3072 = vmatprep.subr.mxu0 0.0
    %3073 = vmatpush1.msra.mxu0 0.0
    %3074 = vmatprep.subr.mxu0 0.0
    %3075 = vmatpush1.msra.mxu0 0.0
    %3076 = vmatprep.subr.mxu0 0.0
    %3077 = vmatpush1.msra.mxu0 0.0
    %3078 = vmatprep.subr.mxu0 0.0
    %3079 = vmatpush1.msra.mxu0 0.0
    %3080 = vmatprep.subr.mxu0 0.0
    %3081 = vmatpush1.msra.mxu0 0.0
    %3082 = vmatprep.subr.mxu0 0.0
    %3083 = vmatpush1.msra.mxu0 0.0
    %3084 = vmatprep.subr.mxu0 0.0
    %3085 = vmatpush1.msra.mxu0 0.0
    %3086 = vmatprep.subr.mxu0 0.0
    %3087 = vmatpush1.msra.mxu0 0.0
    %3088 = vmatprep.subr.mxu0 0.0
    %3089 = vmatpush1.msra.mxu0 0.0
    %3090 = vmatprep.subr.mxu0 0.0
    %3091 = vmatpush1.msra.mxu0 0.0
    %3092 = vmatprep.subr.mxu0 0.0
    %3093 = vmatpush1.msra.mxu0 0.0
    %3094 = vmatprep.subr.mxu0 0.0
    %3095 = vmatpush1.msra.mxu0 0.0
    %3096 = vmatprep.subr.mxu0 0.0
    %3097 = vmatpush1.msra.mxu0 0.0
    %3098 = vmatprep.subr.mxu0 0.0
    %3099 = vmatpush1.msra.mxu0 0.0
    %3100 = vmatprep.subr.mxu0 0.0
    %3101 = vmatpush1.msra.mxu0 0.0
    %3102 = vmatprep.subr.mxu0 0.0
    %3103 = vmatpush1.msra.mxu0 0.0
    %3104 = vmatprep.subr.mxu0 0.0
    %3105 = vmatpush1.msra.mxu0 0.0
    %3106 = vmatprep.mubr.f32.mxu0 0.0
    %3107 = vmatmul.mubr.f32.gmra.mrb[0].mxu0 %v3040
    %v3108 = vpop.f32.mrb[0].mxu0
    %v3109 = vadd.f32 0.0, %v3108
    %v3110 = vpop.f32.mrb[0].mxu0
    %v3111 = vadd.f32 0.0, %v3110
    %3112 = vdwg.mxu0
    %v3113 = vadd.f32 %v2288, %v3109
    %v3114 = vadd.f32 %v2304, %v3111
    %v3115 = vxor.u32 %v3113, 2147483648
    %v3116 = vxor.u32 %v3114, 2147483648
    %v3117 = vmul.f32 %v3115, 1.442695
    %v3118 = vpow.pop %v3117
    %v3119 = vmul.f32 %v3116, 1.442695
    %v3120 = vpow.pop %v3119
    %v3121 = vadd.f32 %v3118, 1.0
    %v3122 = vadd.f32 %v3120, 1.0
    %v3123 = vrcp.pop %v3121
    %v3124 = vmul.f32 1.0, %v3123
    %v3125 = vrcp.pop %v3122
    %v3126 = vmul.f32 1.0, %v3125
    %v3127 = vtanh.pop %v3113
    %v3128 = vtanh.pop %v3114
    %v3129 = vmul.f32 %v3124, %v3004
    %3131 = vrot.lane.b32.xlu0 %v3127, 64
    %v3132 = vpop.permute.xlu0 %3131
    %v3134 = vmul.f32 %v3124, %v3132
    %3136 = vrot.lane.b32.xlu0 %v3134, 32
    %v3137 = vpop.permute.xlu0 %3136
    %v3139 = vadd.f32 %v3129, %v3137
    %v3140 = vmul.f32 %v3126, %v3015
    %3142 = vrot.lane.b32.xlu0 %v3128, 64
    %v3143 = vpop.permute.xlu0 %3142
    %v3145 = vmul.f32 %v3126, %v3143
    %3147 = vrot.lane.b32.xlu0 %v3145, 32
    %v3148 = vpop.permute.xlu0 %3147
    %v3150 = vadd.f32 %v3140, %v3148
    %v3151 = vtanh.pop %v3139
    %3153 = vrot.lane.b32.xlu0 %v3151, 64
    %v3154 = vpop.permute.xlu0 %3153
    %v3156 = vmul.f32 %v3124, %v3154
    %v3157 = vtanh.pop %v3150
    %3159 = vrot.lane.b32.xlu0 %v3157, 64
    %v3160 = vpop.permute.xlu0 %3159
    %v3162 = vmul.f32 %v3126, %v3160
    %3164 = vrot.lane.b32.xlu0 %v3156, 32
    %v3165 = vpop.permute.xlu0 %3164
    %3168 = vrot.lane.b32.xlu0 %v3162, 64
    %v3169 = vpop.permute.xlu0 %3168
    %v3171 = vsel %vm733, %v3165, %v3169
    %3172 = vst.msk [vmem:[%s2629] sm:$0x3] %vm2489, %v3165
    %3173 = vst.msk [vmem:[%s2627] sm:$0x3] %vm2492, %v3169
    %v3175 = vsel %vm1613, %v3171, 0
    %3177 = vmatprep.subr.mxu0 %v2341
    %3178 = vmatpush1.msra.mxu0 %v2340
    %3179 = vmatprep.subr.mxu0 %v2343
    %3180 = vmatpush1.msra.mxu0 %v2342
    %3181 = vmatprep.subr.mxu0 %v2345
    %3182 = vmatpush1.msra.mxu0 %v2344
    %3183 = vmatprep.subr.mxu0 %v2347
    %3184 = vmatpush1.msra.mxu0 %v2346
    %3185 = vmatprep.subr.mxu0 %v2349
    %3186 = vmatpush1.msra.mxu0 %v2348
    %3187 = vmatprep.subr.mxu0 %v2351
    %3188 = vmatpush1.msra.mxu0 %v2350
    %3189 = vmatprep.subr.mxu0 %v2353
    %3190 = vmatpush1.msra.mxu0 %v2352
    %3191 = vmatprep.subr.mxu0 %v2355
    %3192 = vmatpush1.msra.mxu0 %v2354
    %3193 = vmatprep.subr.mxu0 0.0
    %3194 = vmatpush1.msra.mxu0 0.0
    %3195 = vmatprep.subr.mxu0 0.0
    %3196 = vmatpush1.msra.mxu0 0.0
    %3197 = vmatprep.subr.mxu0 0.0
    %3198 = vmatpush1.msra.mxu0 0.0
    %3199 = vmatprep.subr.mxu0 0.0
    %3200 = vmatpush1.msra.mxu0 0.0
    %3201 = vmatprep.subr.mxu0 0.0
    %3202 = vmatpush1.msra.mxu0 0.0
    %3203 = vmatprep.subr.mxu0 0.0
    %3204 = vmatpush1.msra.mxu0 0.0
    %3205 = vmatprep.subr.mxu0 0.0
    %3206 = vmatpush1.msra.mxu0 0.0
    %3207 = vmatprep.subr.mxu0 0.0
    %3208 = vmatpush1.msra.mxu0 0.0
    %3209 = vmatprep.subr.mxu0 0.0
    %3210 = vmatpush1.msra.mxu0 0.0
    %3211 = vmatprep.subr.mxu0 0.0
    %3212 = vmatpush1.msra.mxu0 0.0
    %3213 = vmatprep.subr.mxu0 0.0
    %3214 = vmatpush1.msra.mxu0 0.0
    %3215 = vmatprep.subr.mxu0 0.0
    %3216 = vmatpush1.msra.mxu0 0.0
    %3217 = vmatprep.subr.mxu0 0.0
    %3218 = vmatpush1.msra.mxu0 0.0
    %3219 = vmatprep.subr.mxu0 0.0
    %3220 = vmatpush1.msra.mxu0 0.0
    %3221 = vmatprep.subr.mxu0 0.0
    %3222 = vmatpush1.msra.mxu0 0.0
    %3223 = vmatprep.subr.mxu0 0.0
    %3224 = vmatpush1.msra.mxu0 0.0
    %3225 = vmatprep.subr.mxu0 0.0
    %3226 = vmatpush1.msra.mxu0 0.0
    %3227 = vmatprep.subr.mxu0 0.0
    %3228 = vmatpush1.msra.mxu0 0.0
    %3229 = vmatprep.subr.mxu0 0.0
    %3230 = vmatpush1.msra.mxu0 0.0
    %3231 = vmatprep.subr.mxu0 0.0
    %3232 = vmatpush1.msra.mxu0 0.0
    %3233 = vmatprep.subr.mxu0 0.0
    %3234 = vmatpush1.msra.mxu0 0.0
    %3235 = vmatprep.subr.mxu0 0.0
    %3236 = vmatpush1.msra.mxu0 0.0
    %3237 = vmatprep.subr.mxu0 0.0
    %3238 = vmatpush1.msra.mxu0 0.0
    %3239 = vmatprep.subr.mxu0 0.0
    %3240 = vmatpush1.msra.mxu0 0.0
    %3241 = vmatprep.mubr.f32.mxu0 0.0
    %3242 = vmatmul.mubr.f32.gmra.mrb[0].mxu0 %v3175
    %v3243 = vpop.f32.mrb[0].mxu0
    %v3244 = vadd.f32 0.0, %v3243
    %v3245 = vpop.f32.mrb[0].mxu0
    %v3246 = vadd.f32 0.0, %v3245
    %3247 = vdwg.mxu0
    %v3248 = vadd.f32 %v2322, %v3244
    %v3249 = vadd.f32 %v2338, %v3246
    %v3250 = vxor.u32 %v3248, 2147483648
    %v3251 = vxor.u32 %v3249, 2147483648
    %v3252 = vmul.f32 %v3250, 1.442695
    %v3253 = vpow.pop %v3252
    %v3254 = vmul.f32 %v3251, 1.442695
    %v3255 = vpow.pop %v3254
    %v3256 = vadd.f32 %v3253, 1.0
    %v3257 = vadd.f32 %v3255, 1.0
    %v3258 = vrcp.pop %v3256
    %v3259 = vmul.f32 1.0, %v3258
    %v3260 = vrcp.pop %v3257
    %v3261 = vmul.f32 1.0, %v3260
    %v3262 = vtanh.pop %v3248
    %v3263 = vtanh.pop %v3249
    %v3264 = vmul.f32 %v3259, %v3139
    %3266 = vrot.lane.b32.xlu0 %v3262, 64
    %v3267 = vpop.permute.xlu0 %3266
    %v3269 = vmul.f32 %v3259, %v3267
    %3271 = vrot.lane.b32.xlu0 %v3269, 32
    %v3272 = vpop.permute.xlu0 %3271
    %v3274 = vadd.f32 %v3264, %v3272
    %v3275 = vmul.f32 %v3261, %v3150
    %3277 = vrot.lane.b32.xlu0 %v3263, 64
    %v3278 = vpop.permute.xlu0 %3277
    %v3280 = vmul.f32 %v3261, %v3278
    %3282 = vrot.lane.b32.xlu0 %v3280, 32
    %v3283 = vpop.permute.xlu0 %3282
    %v3285 = vadd.f32 %v3275, %v3283
    %v3286 = vtanh.pop %v3274
    %3288 = vrot.lane.b32.xlu0 %v3286, 64
    %v3289 = vpop.permute.xlu0 %3288
    %v3291 = vmul.f32 %v3259, %v3289
    %v3292 = vtanh.pop %v3285
    %3294 = vrot.lane.b32.xlu0 %v3292, 64
    %v3295 = vpop.permute.xlu0 %3294
    %v3297 = vmul.f32 %v3261, %v3295
    %3299 = vrot.lane.b32.xlu0 %v3291, 32
    %v3300 = vpop.permute.xlu0 %3299
    %3302 = vst.msk [vmem:[%s2491] sm:$0x3] %vm2489, %v3300
    %3304 = vrot.lane.b32.xlu0 %v3297, 64
    %v3305 = vpop.permute.xlu0 %3304
    %3307 = vst.msk [vmem:[#allocation2] sm:$0x3] %vm2492, %v3305
    %3308 = vrot.lane.b32.xlu0 %v3297, 32
    %v3309 = vpop.permute.xlu0 %3308
    %v3311 = vcombine.low %v3300, %v3309
    %v3313 = vunpack.c.l.s4 1934713408
    %v3314 = vunpack.c.0.s8 %v3313
    %v3315 = vlaneseq
    %v3316 = vshrl.u32 %v3315, 7
    %v3317 = vsub.s32 %v3314, %v3316
    %v3318 = vrot.slane %v3311, %v3317
    %v3319 = vcombine.high %v3318, 0.0
    %3321 = vrot.lane.b32.xlu0 %v3319, 32
    %v3322 = vpop.permute.xlu0 %3321
    %v3324 = vsel %vm733, %v3318, %v3322
    %v3325 = vld [vmem:[#allocation2] sm:$0x3]
    %v3326 = vld [vmem:[#allocation2 + $0x2] sm:$0x3]
    %v3327 = vld [vmem:[#allocation2 + $0x4] sm:$0x3]
    %v3328 = vld [vmem:[#allocation2 + $0x6] sm:$0x3]
    %v3329 = vld [vmem:[#allocation2 + $0x8] sm:$0x3]
    %v3330 = vld [vmem:[#allocation2 + $0xa] sm:$0x3]
    %v3331 = vld [vmem:[#allocation2 + $0xc] sm:$0x3]
    %v3332 = vld [vmem:[%s8] sm:$0xff]
    %v3333 = vld [vmem:[%s8 + $0x8] sm:$0xff]
    %v3334 = vld [vmem:[%s8 + $0x10] sm:$0xff]
    %v3335 = vld [vmem:[%s8 + $0x18] sm:$0xff]
    %v3336 = vld [vmem:[%s8 + $0x20] sm:$0xff]
    %v3337 = vld [vmem:[%s8 + $0x28] sm:$0xff]
    %v3338 = vld [vmem:[%s8 + $0x30] sm:$0xff]
    %v3339 = vld [vmem:[%s8 + $0x38] sm:$0xff]
    %v3340 = vld [vmem:[%s9] sm:$0x1]
    %v3342 = vlaneseq
    %v3343 = vshrl.u32 %v3342, 7
    %v3344 = vsub.s32 0, %v3343
    %v3345 = vrot.slane %v3340, %v3344
    %v3354 = vcombine.low %v3325, %v3326
    %v3355 = vcombine.low %v3327, %v3328
    %v3357 = vunpack.c.l.s4 1983009808
    %v3358 = vunpack.c.0.s8 %v3357
    %v3359 = vlaneseq
    %v3360 = vshrl.u32 %v3359, 7
    %v3361 = vsub.s32 %v3358, %v3360
    %v3362 = vrot.slane %v3354, %v3361
    %v3364 = vunpack.c.l.s4 1983009808
    %v3365 = vunpack.c.0.s8 %v3364
    %v3366 = vlaneseq
    %v3367 = vshrl.u32 %v3366, 7
    %v3368 = vsub.s32 %v3365, %v3367
    %v3369 = vrot.slane %v3355, %v3368
    %v3370 = vcombine.low %v3362, %v3369
    %v3371 = vcombine.low %v3329, %v3330
    %v3373 = vunpack.c.l.s4 1983009808
    %v3374 = vunpack.c.0.s8 %v3373
    %v3375 = vlaneseq
    %v3376 = vshrl.u32 %v3375, 7
    %v3377 = vsub.s32 %v3374, %v3376
    %v3378 = vrot.slane %v3371, %v3377
    %v3380 = vunpack.c.l.s4 1983009808
    %v3381 = vunpack.c.0.s8 %v3380
    %v3382 = vlaneseq
    %v3383 = vshrl.u32 %v3382, 7
    %v3384 = vsub.s32 %v3381, %v3383
    %v3385 = vrot.slane %v3331, %v3384
    %v3386 = vcombine.low %v3378, %v3385
    %v3387 = vsel %vm1613, %v3370, 0
    %v3389 = vsel %vm1613, %v3386, 0
    %3391 = vmatprep.subr.mxu0 0.0
    %3392 = vmatpush1.msra.mxu0 %v3332
    %3393 = vmatprep.subr.mxu0 0.0
    %3394 = vmatpush1.msra.mxu0 %v3333
    %3395 = vmatprep.subr.mxu0 0.0
    %3396 = vmatpush1.msra.mxu0 %v3334
    %3397 = vmatprep.subr.mxu0 0.0
    %3398 = vmatpush1.msra.mxu0 %v3335
    %3399 = vmatprep.subr.mxu0 0.0
    %3400 = vmatpush1.msra.mxu0 %v3336
    %3401 = vmatprep.subr.mxu0 0.0
    %3402 = vmatpush1.msra.mxu0 %v3337
    %3403 = vmatprep.subr.mxu0 0.0
    %3404 = vmatpush1.msra.mxu0 %v3338
    %3405 = vmatprep.subr.mxu0 0.0
    %3406 = vmatpush1.msra.mxu0 %v3339
    %3407 = vmatprep.subr.mxu0 0.0
    %3408 = vmatpush1.msra.mxu0 0.0
    %3409 = vmatprep.subr.mxu0 0.0
    %3410 = vmatpush1.msra.mxu0 0.0
    %3411 = vmatprep.subr.mxu0 0.0
    %3412 = vmatpush1.msra.mxu0 0.0
    %3413 = vmatprep.subr.mxu0 0.0
    %3414 = vmatpush1.msra.mxu0 0.0
    %3415 = vmatprep.subr.mxu0 0.0
    %3416 = vmatpush1.msra.mxu0 0.0
    %3417 = vmatprep.subr.mxu0 0.0
    %3418 = vmatpush1.msra.mxu0 0.0
    %3419 = vmatprep.subr.mxu0 0.0
    %3420 = vmatpush1.msra.mxu0 0.0
    %3421 = vmatprep.subr.mxu0 0.0
    %3422 = vmatpush1.msra.mxu0 0.0
    %3423 = vmatprep.subr.mxu0 0.0
    %3424 = vmatpush1.msra.mxu0 0.0
    %3425 = vmatprep.subr.mxu0 0.0
    %3426 = vmatpush1.msra.mxu0 0.0
    %3427 = vmatprep.subr.mxu0 0.0
    %3428 = vmatpush1.msra.mxu0 0.0
    %3429 = vmatprep.subr.mxu0 0.0
    %3430 = vmatpush1.msra.mxu0 0.0
    %3431 = vmatprep.subr.mxu0 0.0
    %3432 = vmatpush1.msra.mxu0 0.0
    %3433 = vmatprep.subr.mxu0 0.0
    %3434 = vmatpush1.msra.mxu0 0.0
    %3435 = vmatprep.subr.mxu0 0.0
    %3436 = vmatpush1.msra.mxu0 0.0
    %3437 = vmatprep.subr.mxu0 0.0
    %3438 = vmatpush1.msra.mxu0 0.0
    %3439 = vmatprep.subr.mxu0 0.0
    %3440 = vmatpush1.msra.mxu0 0.0
    %3441 = vmatprep.subr.mxu0 0.0
    %3442 = vmatpush1.msra.mxu0 0.0
    %3443 = vmatprep.subr.mxu0 0.0
    %3444 = vmatpush1.msra.mxu0 0.0
    %3445 = vmatprep.subr.mxu0 0.0
    %3446 = vmatpush1.msra.mxu0 0.0
    %3447 = vmatprep.subr.mxu0 0.0
    %3448 = vmatpush1.msra.mxu0 0.0
    %3449 = vmatprep.subr.mxu0 0.0
    %3450 = vmatpush1.msra.mxu0 0.0
    %3451 = vmatprep.subr.mxu0 0.0
    %3452 = vmatpush1.msra.mxu0 0.0
    %3453 = vmatprep.subr.mxu0 0.0
    %3454 = vmatpush1.msra.mxu0 0.0
    %3455 = vmatprep.mubr.f32.mxu0 0.0
    %3456 = vmatmul.mubr.f32.gmra.mrb[0].mxu0 %v3387
    %v3457 = vpop.f32.mrb[0].mxu0
    %v3458 = vadd.f32 %v3345, %v3457
    %v3459 = vpop.f32.mrb[0].mxu0
    %3460 = vmatprep.mubr.f32.mxu0 0.0
    %3461 = vmatmul.mubr.f32.gmra.mrb[0].mxu0 %v3389
    %v3462 = vpop.f32.mrb[0].mxu0
    %v3463 = vadd.f32 %v3345, %v3462
    %v3464 = vpop.f32.mrb[0].mxu0
    %3465 = vdwg.mxu0
    %v3468 = vcombine.high %v3458, %v3458
    %v3470 = vunpack.c.l.s4 1983009808
    %v3471 = vunpack.c.0.s8 %v3470
    %v3472 = vlaneseq
    %v3473 = vshrl.u32 %v3472, 7
    %v3474 = vsub.s32 %v3471, %v3473
    %v3475 = vrot.slane %v3458, %v3474
    %v3477 = vunpack.c.l.s4 1983009808
    %v3478 = vunpack.c.0.s8 %v3477
    %v3479 = vlaneseq
    %v3480 = vshrl.u32 %v3479, 7
    %v3481 = vsub.s32 %v3478, %v3480
    %v3482 = vrot.slane %v3468, %v3481
    %v3483 = vcombine.high %v3475, %v3475
    %v3484 = vcombine.high %v3482, %v3482
    %v3485 = vcombine.high %v3463, %v3463
    %v3487 = vunpack.c.l.s4 1983009808
    %v3488 = vunpack.c.0.s8 %v3487
    %v3489 = vlaneseq
    %v3490 = vshrl.u32 %v3489, 7
    %v3491 = vsub.s32 %v3488, %v3490
    %v3492 = vrot.slane %v3463, %v3491
    %v3494 = vunpack.c.l.s4 1983009808
    %v3495 = vunpack.c.0.s8 %v3494
    %v3496 = vlaneseq
    %v3497 = vshrl.u32 %v3496, 7
    %v3498 = vsub.s32 %v3495, %v3497
    %v3499 = vrot.slane %v3485, %v3498
    %v3500 = vcombine.high %v3492, %v3492
    %v3508 = vld [vmem:[%s10] sm:$0xff]
    %v3509 = vld [vmem:[%s10 + $0x8] sm:$0xff]
    %v3510 = vld [vmem:[%s10 + $0x10] sm:$0xff]
    %v3511 = vld [vmem:[%s10 + $0x18] sm:$0xff]
    %v3512 = vld [vmem:[%s10 + $0x20] sm:$0xff]
    %v3513 = vld [vmem:[%s10 + $0x28] sm:$0xff]
    %v3514 = vld [vmem:[%s10 + $0x30] sm:$0xff]
    %v3515 = vld [vmem:[%s10 + $0x38] sm:$0xff]
    %v3516 = vld [vmem:[%s11] sm:$0x1]
    %v3518 = vlaneseq
    %v3519 = vshrl.u32 %v3518, 7
    %v3520 = vsub.s32 0, %v3519
    %v3521 = vrot.slane %v3516, %v3520
    %v3524 = vsel %vm1613, %v3324, 0
    %3526 = vmatprep.subr.mxu0 0.0
    %3527 = vmatpush1.msra.mxu0 %v3508
    %3528 = vmatprep.subr.mxu0 0.0
    %3529 = vmatpush1.msra.mxu0 %v3509
    %3530 = vmatprep.subr.mxu0 0.0
    %3531 = vmatpush1.msra.mxu0 %v3510
    %3532 = vmatprep.subr.mxu0 0.0
    %3533 = vmatpush1.msra.mxu0 %v3511
    %3534 = vmatprep.subr.mxu0 0.0
    %3535 = vmatpush1.msra.mxu0 %v3512
    %3536 = vmatprep.subr.mxu0 0.0
    %3537 = vmatpush1.msra.mxu0 %v3513
    %3538 = vmatprep.subr.mxu0 0.0
    %3539 = vmatpush1.msra.mxu0 %v3514
    %3540 = vmatprep.subr.mxu0 0.0
    %3541 = vmatpush1.msra.mxu0 %v3515
    %3542 = vmatprep.subr.mxu0 0.0
    %3543 = vmatpush1.msra.mxu0 0.0
    %3544 = vmatprep.subr.mxu0 0.0
    %3545 = vmatpush1.msra.mxu0 0.0
    %3546 = vmatprep.subr.mxu0 0.0
    %3547 = vmatpush1.msra.mxu0 0.0
    %3548 = vmatprep.subr.mxu0 0.0
    %3549 = vmatpush1.msra.mxu0 0.0
    %3550 = vmatprep.subr.mxu0 0.0
    %3551 = vmatpush1.msra.mxu0 0.0
    %3552 = vmatprep.subr.mxu0 0.0
    %3553 = vmatpush1.msra.mxu0 0.0
    %3554 = vmatprep.subr.mxu0 0.0
    %3555 = vmatpush1.msra.mxu0 0.0
    %3556 = vmatprep.subr.mxu0 0.0
    %3557 = vmatpush1.msra.mxu0 0.0
    %3558 = vmatprep.subr.mxu0 0.0
    %3559 = vmatpush1.msra.mxu0 0.0
    %3560 = vmatprep.subr.mxu0 0.0
    %3561 = vmatpush1.msra.mxu0 0.0
    %3562 = vmatprep.subr.mxu0 0.0
    %3563 = vmatpush1.msra.mxu0 0.0
    %3564 = vmatprep.subr.mxu0 0.0
    %3565 = vmatpush1.msra.mxu0 0.0
    %3566 = vmatprep.subr.mxu0 0.0
    %3567 = vmatpush1.msra.mxu0 0.0
    %3568 = vmatprep.subr.mxu0 0.0
    %3569 = vmatpush1.msra.mxu0 0.0
    %3570 = vmatprep.subr.mxu0 0.0
    %3571 = vmatpush1.msra.mxu0 0.0
    %3572 = vmatprep.subr.mxu0 0.0
    %3573 = vmatpush1.msra.mxu0 0.0
    %3574 = vmatprep.subr.mxu0 0.0
    %3575 = vmatpush1.msra.mxu0 0.0
    %3576 = vmatprep.subr.mxu0 0.0
    %3577 = vmatpush1.msra.mxu0 0.0
    %3578 = vmatprep.subr.mxu0 0.0
    %3579 = vmatpush1.msra.mxu0 0.0
    %3580 = vmatprep.subr.mxu0 0.0
    %3581 = vmatpush1.msra.mxu0 0.0
    %3582 = vmatprep.subr.mxu0 0.0
    %3583 = vmatpush1.msra.mxu0 0.0
    %3584 = vmatprep.subr.mxu0 0.0
    %3585 = vmatpush1.msra.mxu0 0.0
    %3586 = vmatprep.subr.mxu0 0.0
    %3587 = vmatpush1.msra.mxu0 0.0
    %3588 = vmatprep.subr.mxu0 0.0
    %3589 = vmatpush1.msra.mxu0 0.0
    %3590 = vmatprep.mubr.f32.mxu0 0.0
    %3591 = vmatmul.mubr.f32.gmra.mrb[0].mxu0 %v3524
    %v3592 = vpop.f32.mrb[0].mxu0
    %v3593 = vadd.f32 %v3521, %v3592
    %v3594 = vpop.f32.mrb[0].mxu0
    %3595 = vdwg.mxu0
    %v3596 = vadd.f32 %v3475, %v3593
    %v3597 = vadd.f32 %v3483, %v3593
    %v3598 = vadd.f32 %v3482, %v3593
    %v3599 = vadd.f32 %v3484, %v3593
    %v3600 = vadd.f32 %v3492, %v3593
    %v3601 = vadd.f32 %v3500, %v3593
    %v3602 = vadd.f32 %v3499, %v3593
    %v3603 = vtanh.pop %v3596
    %v3604 = vtanh.pop %v3597
    %v3605 = vtanh.pop %v3598
    %v3606 = vtanh.pop %v3599
    %v3607 = vtanh.pop %v3600
    %v3608 = vtanh.pop %v3601
    %v3609 = vtanh.pop %v3602
    %v3610 = vld [vmem:[%s12] sm:$0xff]
    %v3611 = vld [vmem:[%s12 + $0x8] sm:$0xff]
    %v3612 = vld [vmem:[%s12 + $0x10] sm:$0xff]
    %v3613 = vld [vmem:[%s12 + $0x18] sm:$0xff]
    %v3614 = vld [vmem:[%s12 + $0x20] sm:$0xff]
    %v3615 = vld [vmem:[%s12 + $0x28] sm:$0xff]
    %v3616 = vld [vmem:[%s12 + $0x30] sm:$0xff]
    %v3617 = vld [vmem:[%s12 + $0x38] sm:$0xff]
    %v3618 = vld [vmem:[%s13] sm:$0x1]
    %v3620 = vlaneseq
    %v3621 = vshrl.u32 %v3620, 7
    %v3622 = vsub.s32 0, %v3621
    %v3623 = vrot.slane %v3618, %v3622
    %v3632 = vcombine.low %v3603, %v3604
    %v3633 = vcombine.low %v3605, %v3606
    %v3635 = vunpack.c.l.s4 1983009808
    %v3636 = vunpack.c.0.s8 %v3635
    %v3637 = vlaneseq
    %v3638 = vshrl.u32 %v3637, 7
    %v3639 = vsub.s32 %v3636, %v3638
    %v3640 = vrot.slane %v3632, %v3639
    %v3642 = vunpack.c.l.s4 1983009808
    %v3643 = vunpack.c.0.s8 %v3642
    %v3644 = vlaneseq
    %v3645 = vshrl.u32 %v3644, 7
    %v3646 = vsub.s32 %v3643, %v3645
    %v3647 = vrot.slane %v3633, %v3646
    %v3648 = vcombine.low %v3640, %v3647
    %v3649 = vcombine.low %v3607, %v3608
    %v3651 = vunpack.c.l.s4 1983009808
    %v3652 = vunpack.c.0.s8 %v3651
    %v3653 = vlaneseq
    %v3654 = vshrl.u32 %v3653, 7
    %v3655 = vsub.s32 %v3652, %v3654
    %v3656 = vrot.slane %v3649, %v3655
    %v3658 = vunpack.c.l.s4 1983009808
    %v3659 = vunpack.c.0.s8 %v3658
    %v3660 = vlaneseq
    %v3661 = vshrl.u32 %v3660, 7
    %v3662 = vsub.s32 %v3659, %v3661
    %v3663 = vrot.slane %v3609, %v3662
    %v3664 = vcombine.low %v3656, %v3663
    %v3665 = vsel %vm1613, %v3648, 0
    %v3667 = vsel %vm1613, %v3664, 0
    %3669 = vmatprep.subr.mxu0 0.0
    %3670 = vmatpush1.msra.mxu0 %v3610
    %3671 = vmatprep.subr.mxu0 0.0
    %3672 = vmatpush1.msra.mxu0 %v3611
    %3673 = vmatprep.subr.mxu0 0.0
    %3674 = vmatpush1.msra.mxu0 %v3612
    %3675 = vmatprep.subr.mxu0 0.0
    %3676 = vmatpush1.msra.mxu0 %v3613
    %3677 = vmatprep.subr.mxu0 0.0
    %3678 = vmatpush1.msra.mxu0 %v3614
    %3679 = vmatprep.subr.mxu0 0.0
    %3680 = vmatpush1.msra.mxu0 %v3615
    %3681 = vmatprep.subr.mxu0 0.0
    %3682 = vmatpush1.msra.mxu0 %v3616
    %3683 = vmatprep.subr.mxu0 0.0
    %3684 = vmatpush1.msra.mxu0 %v3617
    %3685 = vmatprep.subr.mxu0 0.0
    %3686 = vmatpush1.msra.mxu0 0.0
    %3687 = vmatprep.subr.mxu0 0.0
    %3688 = vmatpush1.msra.mxu0 0.0
    %3689 = vmatprep.subr.mxu0 0.0
    %3690 = vmatpush1.msra.mxu0 0.0
    %3691 = vmatprep.subr.mxu0 0.0
    %3692 = vmatpush1.msra.mxu0 0.0
    %3693 = vmatprep.subr.mxu0 0.0
    %3694 = vmatpush1.msra.mxu0 0.0
    %3695 = vmatprep.subr.mxu0 0.0
    %3696 = vmatpush1.msra.mxu0 0.0
    %3697 = vmatprep.subr.mxu0 0.0
    %3698 = vmatpush1.msra.mxu0 0.0
    %3699 = vmatprep.subr.mxu0 0.0
    %3700 = vmatpush1.msra.mxu0 0.0
    %3701 = vmatprep.subr.mxu0 0.0
    %3702 = vmatpush1.msra.mxu0 0.0
    %3703 = vmatprep.subr.mxu0 0.0
    %3704 = vmatpush1.msra.mxu0 0.0
    %3705 = vmatprep.subr.mxu0 0.0
    %3706 = vmatpush1.msra.mxu0 0.0
    %3707 = vmatprep.subr.mxu0 0.0
    %3708 = vmatpush1.msra.mxu0 0.0
    %3709 = vmatprep.subr.mxu0 0.0
    %3710 = vmatpush1.msra.mxu0 0.0
    %3711 = vmatprep.subr.mxu0 0.0
    %3712 = vmatpush1.msra.mxu0 0.0
    %3713 = vmatprep.subr.mxu0 0.0
    %3714 = vmatpush1.msra.mxu0 0.0
    %3715 = vmatprep.subr.mxu0 0.0
    %3716 = vmatpush1.msra.mxu0 0.0
    %3717 = vmatprep.subr.mxu0 0.0
    %3718 = vmatpush1.msra.mxu0 0.0
    %3719 = vmatprep.subr.mxu0 0.0
    %3720 = vmatpush1.msra.mxu0 0.0
    %3721 = vmatprep.subr.mxu0 0.0
    %3722 = vmatpush1.msra.mxu0 0.0
    %3723 = vmatprep.subr.mxu0 0.0
    %3724 = vmatpush1.msra.mxu0 0.0
    %3725 = vmatprep.subr.mxu0 0.0
    %3726 = vmatpush1.msra.mxu0 0.0
    %3727 = vmatprep.subr.mxu0 0.0
    %3728 = vmatpush1.msra.mxu0 0.0
    %3729 = vmatprep.subr.mxu0 0.0
    %3730 = vmatpush1.msra.mxu0 0.0
    %3731 = vmatprep.subr.mxu0 0.0
    %3732 = vmatpush1.msra.mxu0 0.0
    %3733 = vmatprep.mubr.f32.mxu0 0.0
    %3734 = vmatmul.mubr.f32.gmra.mrb[0].mxu0 %v3665
    %v3735 = vpop.f32.mrb[0].mxu0
    %v3736 = vadd.f32 %v3623, %v3735
    %v3737 = vpop.f32.mrb[0].mxu0
    %3738 = vmatprep.mubr.f32.mxu0 0.0
    %3739 = vmatmul.mubr.f32.gmra.mrb[0].mxu0 %v3667
    %v3740 = vpop.f32.mrb[0].mxu0
    %v3741 = vadd.f32 %v3623, %v3740
    %v3742 = vpop.f32.mrb[0].mxu0
    %3743 = vdwg.mxu0
    %v3746 = vcombine.high %v3736, %v3736
    %v3748 = vunpack.c.l.s4 1983009808
    %v3749 = vunpack.c.0.s8 %v3748
    %v3750 = vlaneseq
    %v3751 = vshrl.u32 %v3750, 7
    %v3752 = vsub.s32 %v3749, %v3751
    %v3753 = vrot.slane %v3736, %v3752
    %v3755 = vunpack.c.l.s4 1983009808
    %v3756 = vunpack.c.0.s8 %v3755
    %v3757 = vlaneseq
    %v3758 = vshrl.u32 %v3757, 7
    %v3759 = vsub.s32 %v3756, %v3758
    %v3760 = vrot.slane %v3746, %v3759
    %v3761 = vcombine.high %v3753, %v3753
    %v3762 = vcombine.high %v3760, %v3760
    %v3763 = vcombine.high %v3741, %v3741
    %v3765 = vunpack.c.l.s4 1983009808
    %v3766 = vunpack.c.0.s8 %v3765
    %v3767 = vlaneseq
    %v3768 = vshrl.u32 %v3767, 7
    %v3769 = vsub.s32 %v3766, %v3768
    %v3770 = vrot.slane %v3741, %v3769
    %v3772 = vunpack.c.l.s4 1983009808
    %v3773 = vunpack.c.0.s8 %v3772
    %v3774 = vlaneseq
    %v3775 = vshrl.u32 %v3774, 7
    %v3776 = vsub.s32 %v3773, %v3775
    %v3777 = vrot.slane %v3763, %v3776
    %v3778 = vcombine.high %v3770, %v3770
    %vm3786 = vcmask 33792
    %v3787 = vsel %vm3786, %v3753, -inf
    %v3788 = vsel %vm3786, %v3761, -inf
    %v3789 = vsel %vm3786, %v3760, -inf
    %v3790 = vsel %vm3786, %v3762, -inf
    %v3791 = vsel %vm3786, %v3770, -inf
    %v3792 = vmax.f32 %v3787, %v3791
    %v3793 = vsel %vm3786, %v3778, -inf
    %v3794 = vmax.f32 %v3788, %v3793
    %v3795 = vsel %vm3786, %v3777, -inf
    %v3796 = vmax.f32 %v3789, %v3795
    %v3797 = vmax.f32 %v3792, %v3794
    %v3798 = vmax.f32 %v3796, %v3790
    %v3799 = vmax.f32 %v3797, %v3798
    %v3800 = vsub.f32 %v3753, %v3799
    %v3801 = vsub.f32 %v3761, %v3799
    %v3802 = vsub.f32 %v3760, %v3799
    %v3803 = vsub.f32 %v3762, %v3799
    %v3804 = vsub.f32 %v3770, %v3799
    %v3805 = vsub.f32 %v3778, %v3799
    %v3806 = vsub.f32 %v3777, %v3799
    %v3807 = vmul.f32 %v3800, 1.442695
    %v3808 = vpow.pop %v3807
    %v3809 = vmul.f32 %v3801, 1.442695
    %v3810 = vpow.pop %v3809
    %v3811 = vmul.f32 %v3802, 1.442695
    %v3812 = vpow.pop %v3811
    %v3813 = vmul.f32 %v3803, 1.442695
    %v3814 = vpow.pop %v3813
    %v3815 = vmul.f32 %v3804, 1.442695
    %v3816 = vpow.pop %v3815
    %v3817 = vmul.f32 %v3805, 1.442695
    %v3818 = vpow.pop %v3817
    %v3819 = vmul.f32 %v3806, 1.442695
    %v3820 = vpow.pop %v3819
    %v3821 = vsel %vm3786, %v3808, 0.0
    %v3822 = vsel %vm3786, %v3810, 0.0
    %v3823 = vadd.f32 %v3821, %v3822
    %v3824 = vsel %vm3786, %v3812, 0.0
    %v3825 = vadd.f32 %v3823, %v3824
    %v3826 = vsel %vm3786, %v3814, 0.0
    %v3827 = vadd.f32 %v3825, %v3826
    %v3828 = vsel %vm3786, %v3816, 0.0
    %v3829 = vadd.f32 %v3827, %v3828
    %v3830 = vsel %vm3786, %v3818, 0.0
    %v3831 = vadd.f32 %v3829, %v3830
    %v3832 = vsel %vm3786, %v3820, 0.0
    %v3833 = vadd.f32 %v3831, %v3832
    %v3834 = vrcp.pop %v3833
    %v3835 = vmul.f32 %v3808, %v3834
    %v3836 = vmul.f32 %v3810, %v3834
    %v3837 = vmul.f32 %v3812, %v3834
    %v3838 = vmul.f32 %v3814, %v3834
    %v3839 = vmul.f32 %v3816, %v3834
    %v3840 = vmul.f32 %v3818, %v3834
    %v3841 = vmul.f32 %v3820, %v3834
    %3842 = vxpose.xlu0.b32.start [1/16] %v3835, 128
    %3843 = vxpose.xlu0.b32.cont [2/16] 0.0, 128
    %3844 = vxpose.xlu0.b32.cont [3/16] 0.0, 128
    %3845 = vxpose.xlu0.b32.cont [4/16] 0.0, 128
    %3846 = vxpose.xlu0.b32.cont [5/16] 0.0, 128
    %3847 = vxpose.xlu0.b32.cont [6/16] 0.0, 128
    %3848 = vxpose.xlu0.b32.cont [7/16] 0.0, 128
    %3849 = vxpose.xlu0.b32.cont [8/16] 0.0, 128
    %3850 = vxpose.xlu0.b32.cont [9/16] 0.0, 128
    %3851 = vxpose.xlu0.b32.cont [10/16] 0.0, 128
    %3852 = vxpose.xlu0.b32.cont [11/16] 0.0, 128
    %3853 = vxpose.xlu0.b32.cont [12/16] 0.0, 128
    %3854 = vxpose.xlu0.b32.cont [13/16] 0.0, 128
    %3855 = vxpose.xlu0.b32.cont [14/16] 0.0, 128
    %3856 = vxpose.xlu0.b32.cont [15/16] 0.0, 128
    %3857 = vxpose.xlu0.b32.end [16/16] 0.0, 128
    %v3858 = vpop.trf.xlu0
    %v3859 = vpop.trf.xlu0
    %v3860 = vpop.trf.xlu0
    %v3861 = vpop.trf.xlu0
    %v3862 = vpop.trf.xlu0
    %v3863 = vpop.trf.xlu0
    %v3864 = vpop.trf.xlu0
    %v3865 = vpop.trf.xlu0
    %v3866 = vpop.trf.xlu0
    %v3867 = vpop.trf.xlu0
    %v3868 = vpop.trf.xlu0
    %v3869 = vpop.trf.xlu0
    %v3870 = vpop.trf.xlu0
    %v3871 = vpop.trf.xlu0
    %v3872 = vpop.trf.xlu0
    %v3873 = vpop.trf.xlu0
    %3874 = vxpose.xlu0.b32.start [1/16] %v3836, 128
    %3875 = vxpose.xlu0.b32.cont [2/16] 0.0, 128
    %3876 = vxpose.xlu0.b32.cont [3/16] 0.0, 128
    %3877 = vxpose.xlu0.b32.cont [4/16] 0.0, 128
    %3878 = vxpose.xlu0.b32.cont [5/16] 0.0, 128
    %3879 = vxpose.xlu0.b32.cont [6/16] 0.0, 128
    %3880 = vxpose.xlu0.b32.cont [7/16] 0.0, 128
    %3881 = vxpose.xlu0.b32.cont [8/16] 0.0, 128
    %3882 = vxpose.xlu0.b32.cont [9/16] 0.0, 128
    %3883 = vxpose.xlu0.b32.cont [10/16] 0.0, 128
    %3884 = vxpose.xlu0.b32.cont [11/16] 0.0, 128
    %3885 = vxpose.xlu0.b32.cont [12/16] 0.0, 128
    %3886 = vxpose.xlu0.b32.cont [13/16] 0.0, 128
    %3887 = vxpose.xlu0.b32.cont [14/16] 0.0, 128
    %3888 = vxpose.xlu0.b32.cont [15/16] 0.0, 128
    %3889 = vxpose.xlu0.b32.end [16/16] 0.0, 128
    %v3890 = vpop.trf.xlu0
    %v3891 = vpop.trf.xlu0
    %v3892 = vpop.trf.xlu0
    %v3893 = vpop.trf.xlu0
    %v3894 = vpop.trf.xlu0
    %v3895 = vpop.trf.xlu0
    %v3896 = vpop.trf.xlu0
    %v3897 = vpop.trf.xlu0
    %v3898 = vpop.trf.xlu0
    %v3899 = vpop.trf.xlu0
    %v3900 = vpop.trf.xlu0
    %v3901 = vpop.trf.xlu0
    %v3902 = vpop.trf.xlu0
    %v3903 = vpop.trf.xlu0
    %v3904 = vpop.trf.xlu0
    %v3905 = vpop.trf.xlu0
    %3906 = vxpose.xlu0.b32.start [1/16] %v3837, 128
    %3907 = vxpose.xlu0.b32.cont [2/16] 0.0, 128
    %3908 = vxpose.xlu0.b32.cont [3/16] 0.0, 128
    %3909 = vxpose.xlu0.b32.cont [4/16] 0.0, 128
    %3910 = vxpose.xlu0.b32.cont [5/16] 0.0, 128
    %3911 = vxpose.xlu0.b32.cont [6/16] 0.0, 128
    %3912 = vxpose.xlu0.b32.cont [7/16] 0.0, 128
    %3913 = vxpose.xlu0.b32.cont [8/16] 0.0, 128
    %3914 = vxpose.xlu0.b32.cont [9/16] 0.0, 128
    %3915 = vxpose.xlu0.b32.cont [10/16] 0.0, 128
    %3916 = vxpose.xlu0.b32.cont [11/16] 0.0, 128
    %3917 = vxpose.xlu0.b32.cont [12/16] 0.0, 128
    %3918 = vxpose.xlu0.b32.cont [13/16] 0.0, 128
    %3919 = vxpose.xlu0.b32.cont [14/16] 0.0, 128
    %3920 = vxpose.xlu0.b32.cont [15/16] 0.0, 128
    %3921 = vxpose.xlu0.b32.end [16/16] 0.0, 128
    %v3922 = vpop.trf.xlu0
    %v3923 = vpop.trf.xlu0
    %v3924 = vpop.trf.xlu0
    %v3925 = vpop.trf.xlu0
    %v3926 = vpop.trf.xlu0
    %v3927 = vpop.trf.xlu0
    %v3928 = vpop.trf.xlu0
    %v3929 = vpop.trf.xlu0
    %v3930 = vpop.trf.xlu0
    %v3931 = vpop.trf.xlu0
    %v3932 = vpop.trf.xlu0
    %v3933 = vpop.trf.xlu0
    %v3934 = vpop.trf.xlu0
    %v3935 = vpop.trf.xlu0
    %v3936 = vpop.trf.xlu0
    %v3937 = vpop.trf.xlu0
    %3938 = vxpose.xlu0.b32.start [1/16] %v3838, 128
    %3939 = vxpose.xlu0.b32.cont [2/16] 0.0, 128
    %3940 = vxpose.xlu0.b32.cont [3/16] 0.0, 128
    %3941 = vxpose.xlu0.b32.cont [4/16] 0.0, 128
    %3942 = vxpose.xlu0.b32.cont [5/16] 0.0, 128
    %3943 = vxpose.xlu0.b32.cont [6/16] 0.0, 128
    %3944 = vxpose.xlu0.b32.cont [7/16] 0.0, 128
    %3945 = vxpose.xlu0.b32.cont [8/16] 0.0, 128
    %3946 = vxpose.xlu0.b32.cont [9/16] 0.0, 128
    %3947 = vxpose.xlu0.b32.cont [10/16] 0.0, 128
    %3948 = vxpose.xlu0.b32.cont [11/16] 0.0, 128
    %3949 = vxpose.xlu0.b32.cont [12/16] 0.0, 128
    %3950 = vxpose.xlu0.b32.cont [13/16] 0.0, 128
    %3951 = vxpose.xlu0.b32.cont [14/16] 0.0, 128
    %3952 = vxpose.xlu0.b32.cont [15/16] 0.0, 128
    %3953 = vxpose.xlu0.b32.end [16/16] 0.0, 128
    %v3954 = vpop.trf.xlu0
    %v3955 = vpop.trf.xlu0
    %v3956 = vpop.trf.xlu0
    %v3957 = vpop.trf.xlu0
    %v3958 = vpop.trf.xlu0
    %v3959 = vpop.trf.xlu0
    %v3960 = vpop.trf.xlu0
    %v3961 = vpop.trf.xlu0
    %v3962 = vpop.trf.xlu0
    %v3963 = vpop.trf.xlu0
    %v3964 = vpop.trf.xlu0
    %v3965 = vpop.trf.xlu0
    %v3966 = vpop.trf.xlu0
    %v3967 = vpop.trf.xlu0
    %v3968 = vpop.trf.xlu0
    %v3969 = vpop.trf.xlu0
    %3970 = vxpose.xlu0.b32.start [1/16] %v3839, 128
    %3971 = vxpose.xlu0.b32.cont [2/16] 0.0, 128
    %3972 = vxpose.xlu0.b32.cont [3/16] 0.0, 128
    %3973 = vxpose.xlu0.b32.cont [4/16] 0.0, 128
    %3974 = vxpose.xlu0.b32.cont [5/16] 0.0, 128
    %3975 = vxpose.xlu0.b32.cont [6/16] 0.0, 128
    %3976 = vxpose.xlu0.b32.cont [7/16] 0.0, 128
    %3977 = vxpose.xlu0.b32.cont [8/16] 0.0, 128
    %3978 = vxpose.xlu0.b32.cont [9/16] 0.0, 128
    %3979 = vxpose.xlu0.b32.cont [10/16] 0.0, 128
    %3980 = vxpose.xlu0.b32.cont [11/16] 0.0, 128
    %3981 = vxpose.xlu0.b32.cont [12/16] 0.0, 128
    %3982 = vxpose.xlu0.b32.cont [13/16] 0.0, 128
    %3983 = vxpose.xlu0.b32.cont [14/16] 0.0, 128
    %3984 = vxpose.xlu0.b32.cont [15/16] 0.0, 128
    %3985 = vxpose.xlu0.b32.end [16/16] 0.0, 128
    %v3986 = vpop.trf.xlu0
    %v3987 = vpop.trf.xlu0
    %v3988 = vpop.trf.xlu0
    %v3989 = vpop.trf.xlu0
    %v3990 = vpop.trf.xlu0
    %v3991 = vpop.trf.xlu0
    %v3992 = vpop.trf.xlu0
    %v3993 = vpop.trf.xlu0
    %v3994 = vpop.trf.xlu0
    %v3995 = vpop.trf.xlu0
    %v3996 = vpop.trf.xlu0
    %v3997 = vpop.trf.xlu0
    %v3998 = vpop.trf.xlu0
    %v3999 = vpop.trf.xlu0
    %v4000 = vpop.trf.xlu0
    %v4001 = vpop.trf.xlu0
    %4002 = vxpose.xlu0.b32.start [1/16] %v3840, 128
    %4003 = vxpose.xlu0.b32.cont [2/16] 0.0, 128
    %4004 = vxpose.xlu0.b32.cont [3/16] 0.0, 128
    %4005 = vxpose.xlu0.b32.cont [4/16] 0.0, 128
    %4006 = vxpose.xlu0.b32.cont [5/16] 0.0, 128
    %4007 = vxpose.xlu0.b32.cont [6/16] 0.0, 128
    %4008 = vxpose.xlu0.b32.cont [7/16] 0.0, 128
    %4009 = vxpose.xlu0.b32.cont [8/16] 0.0, 128
    %4010 = vxpose.xlu0.b32.cont [9/16] 0.0, 128
    %4011 = vxpose.xlu0.b32.cont [10/16] 0.0, 128
    %4012 = vxpose.xlu0.b32.cont [11/16] 0.0, 128
    %4013 = vxpose.xlu0.b32.cont [12/16] 0.0, 128
    %4014 = vxpose.xlu0.b32.cont [13/16] 0.0, 128
    %4015 = vxpose.xlu0.b32.cont [14/16] 0.0, 128
    %4016 = vxpose.xlu0.b32.cont [15/16] 0.0, 128
    %4017 = vxpose.xlu0.b32.end [16/16] 0.0, 128
    %v4018 = vpop.trf.xlu0
    %v4019 = vpop.trf.xlu0
    %v4020 = vpop.trf.xlu0
    %v4021 = vpop.trf.xlu0
    %v4022 = vpop.trf.xlu0
    %v4023 = vpop.trf.xlu0
    %v4024 = vpop.trf.xlu0
    %v4025 = vpop.trf.xlu0
    %v4026 = vpop.trf.xlu0
    %v4027 = vpop.trf.xlu0
    %v4028 = vpop.trf.xlu0
    %v4029 = vpop.trf.xlu0
    %v4030 = vpop.trf.xlu0
    %v4031 = vpop.trf.xlu0
    %v4032 = vpop.trf.xlu0
    %v4033 = vpop.trf.xlu0
    %4034 = vxpose.xlu0.b32.start [1/16] %v3841, 128
    %4035 = vxpose.xlu0.b32.cont [2/16] 0.0, 128
    %4036 = vxpose.xlu0.b32.cont [3/16] 0.0, 128
    %4037 = vxpose.xlu0.b32.cont [4/16] 0.0, 128
    %4038 = vxpose.xlu0.b32.cont [5/16] 0.0, 128
    %4039 = vxpose.xlu0.b32.cont [6/16] 0.0, 128
    %4040 = vxpose.xlu0.b32.cont [7/16] 0.0, 128
    %4041 = vxpose.xlu0.b32.cont [8/16] 0.0, 128
    %4042 = vxpose.xlu0.b32.cont [9/16] 0.0, 128
    %4043 = vxpose.xlu0.b32.cont [10/16] 0.0, 128
    %4044 = vxpose.xlu0.b32.cont [11/16] 0.0, 128
    %4045 = vxpose.xlu0.b32.cont [12/16] 0.0, 128
    %4046 = vxpose.xlu0.b32.cont [13/16] 0.0, 128
    %4047 = vxpose.xlu0.b32.cont [14/16] 0.0, 128
    %4048 = vxpose.xlu0.b32.cont [15/16] 0.0, 128
    %4049 = vxpose.xlu0.b32.end [16/16] 0.0, 128
    %v4050 = vpop.trf.xlu0
    %v4051 = vpop.trf.xlu0
    %v4052 = vpop.trf.xlu0
    %v4053 = vpop.trf.xlu0
    %v4054 = vpop.trf.xlu0
    %v4055 = vpop.trf.xlu0
    %v4056 = vpop.trf.xlu0
    %v4057 = vpop.trf.xlu0
    %v4058 = vpop.trf.xlu0
    %v4059 = vpop.trf.xlu0
    %v4060 = vpop.trf.xlu0
    %v4061 = vpop.trf.xlu0
    %v4062 = vpop.trf.xlu0
    %v4063 = vpop.trf.xlu0
    %v4064 = vpop.trf.xlu0
    %v4065 = vpop.trf.xlu0
    %v4066 = vcombine.low %v3858, %v3922
    %v4067 = vcombine.high %v3858, %v3922
    %v4069 = vunpack.c.l.s4 1983009808
    %v4070 = vunpack.c.0.s8 %v4069
    %v4071 = vlaneseq
    %v4072 = vshrl.u32 %v4071, 7
    %v4073 = vsub.s32 %v4070, %v4072
    %v4074 = vrot.slane %v4066, %v4073
    %v4076 = vunpack.c.l.s4 1983009808
    %v4077 = vunpack.c.0.s8 %v4076
    %v4078 = vlaneseq
    %v4079 = vshrl.u32 %v4078, 7
    %v4080 = vsub.s32 %v4077, %v4079
    %v4081 = vrot.slane %v4067, %v4080
    %v4082 = vcombine.low %v3890, %v3954
    %v4083 = vcombine.high %v3890, %v3954
    %v4085 = vunpack.c.l.s4 1983009808
    %v4086 = vunpack.c.0.s8 %v4085
    %v4087 = vlaneseq
    %v4088 = vshrl.u32 %v4087, 7
    %v4089 = vsub.s32 %v4086, %v4088
    %v4090 = vrot.slane %v4082, %v4089
    %v4092 = vunpack.c.l.s4 1983009808
    %v4093 = vunpack.c.0.s8 %v4092
    %v4094 = vlaneseq
    %v4095 = vshrl.u32 %v4094, 7
    %v4096 = vsub.s32 %v4093, %v4095
    %v4097 = vrot.slane %v4083, %v4096
    %v4098 = vcombine.low %v3986, %v4050
    %v4099 = vcombine.high %v3986, %v4050
    %v4101 = vunpack.c.l.s4 1983009808
    %v4102 = vunpack.c.0.s8 %v4101
    %v4103 = vlaneseq
    %v4104 = vshrl.u32 %v4103, 7
    %v4105 = vsub.s32 %v4102, %v4104
    %v4106 = vrot.slane %v4098, %v4105
    %v4108 = vunpack.c.l.s4 1983009808
    %v4109 = vunpack.c.0.s8 %v4108
    %v4110 = vlaneseq
    %v4111 = vshrl.u32 %v4110, 7
    %v4112 = vsub.s32 %v4109, %v4111
    %v4113 = vrot.slane %v4099, %v4112
    %v4115 = vunpack.c.l.s4 1983009808
    %v4116 = vunpack.c.0.s8 %v4115
    %v4117 = vlaneseq
    %v4118 = vshrl.u32 %v4117, 7
    %v4119 = vsub.s32 %v4116, %v4118
    %v4120 = vrot.slane %v4018, %v4119
    %v4121 = vcombine.high %v4018, 0.0
    %v4122 = vcombine.low %v4074, %v4090
    %v4123 = vcombine.high %v4074, %v4090
    %v4125 = vunpack.c.l.s4 1934713408
    %v4126 = vunpack.c.0.s8 %v4125
    %v4127 = vlaneseq
    %v4128 = vshrl.u32 %v4127, 7
    %v4129 = vsub.s32 %v4126, %v4128
    %v4130 = vrot.slane %v4122, %v4129
    %v4132 = vunpack.c.l.s4 1934713408
    %v4133 = vunpack.c.0.s8 %v4132
    %v4134 = vlaneseq
    %v4135 = vshrl.u32 %v4134, 7
    %v4136 = vsub.s32 %v4133, %v4135
    %v4137 = vrot.slane %v4123, %v4136
    %v4138 = vcombine.low %v4081, %v4097
    %v4140 = vunpack.c.l.s4 1934713408
    %v4141 = vunpack.c.0.s8 %v4140
    %v4142 = vlaneseq
    %v4143 = vshrl.u32 %v4142, 7
    %v4144 = vsub.s32 %v4141, %v4143
    %v4145 = vrot.slane %v4138, %v4144
    %v4146 = vcombine.low %v4106, %v4120
    %v4147 = vcombine.high %v4106, %v4120
    %v4149 = vunpack.c.l.s4 1934713408
    %v4150 = vunpack.c.0.s8 %v4149
    %v4151 = vlaneseq
    %v4152 = vshrl.u32 %v4151, 7
    %v4153 = vsub.s32 %v4150, %v4152
    %v4154 = vrot.slane %v4146, %v4153
    %v4156 = vunpack.c.l.s4 1934713408
    %v4157 = vunpack.c.0.s8 %v4156
    %v4158 = vlaneseq
    %v4159 = vshrl.u32 %v4158, 7
    %v4160 = vsub.s32 %v4157, %v4159
    %v4161 = vrot.slane %v4147, %v4160
    %v4162 = vcombine.low %v4113, %v4121
    %v4164 = vunpack.c.l.s4 1934713408
    %v4165 = vunpack.c.0.s8 %v4164
    %v4166 = vlaneseq
    %v4167 = vshrl.u32 %v4166, 7
    %v4168 = vsub.s32 %v4165, %v4167
    %v4169 = vrot.slane %v4162, %v4168
    %v4170 = vcombine.low %v4130, %v4154
    %v4171 = vcombine.high %v4130, %v4154
    %v4172 = vcombine.low %v4137, %v4161
    %v4173 = vcombine.high %v4137, %v4161
    %v4174 = vcombine.low %v4145, %v4169
    %4175 = vxpose.xlu0.b32.start [1/16] %v4170, 128
    %4176 = vxpose.xlu0.b32.cont [2/16] 0.0, 128
    %4177 = vxpose.xlu0.b32.cont [3/16] 0.0, 128
    %4178 = vxpose.xlu0.b32.cont [4/16] 0.0, 128
    %4179 = vxpose.xlu0.b32.cont [5/16] 0.0, 128
    %4180 = vxpose.xlu0.b32.cont [6/16] 0.0, 128
    %4181 = vxpose.xlu0.b32.cont [7/16] 0.0, 128
    %4182 = vxpose.xlu0.b32.cont [8/16] 0.0, 128
    %4183 = vxpose.xlu0.b32.cont [9/16] 0.0, 128
    %4184 = vxpose.xlu0.b32.cont [10/16] 0.0, 128
    %4185 = vxpose.xlu0.b32.cont [11/16] 0.0, 128
    %4186 = vxpose.xlu0.b32.cont [12/16] 0.0, 128
    %4187 = vxpose.xlu0.b32.cont [13/16] 0.0, 128
    %4188 = vxpose.xlu0.b32.cont [14/16] 0.0, 128
    %4189 = vxpose.xlu0.b32.cont [15/16] 0.0, 128
    %4190 = vxpose.xlu0.b32.end [16/16] 0.0, 128
    %v4191 = vpop.trf.xlu0
    %v4192 = vpop.trf.xlu0
    %v4193 = vpop.trf.xlu0
    %v4194 = vpop.trf.xlu0
    %v4195 = vpop.trf.xlu0
    %v4196 = vpop.trf.xlu0
    %v4197 = vpop.trf.xlu0
    %v4198 = vpop.trf.xlu0
    %v4199 = vpop.trf.xlu0
    %v4200 = vpop.trf.xlu0
    %v4201 = vpop.trf.xlu0
    %v4202 = vpop.trf.xlu0
    %v4203 = vpop.trf.xlu0
    %v4204 = vpop.trf.xlu0
    %v4205 = vpop.trf.xlu0
    %v4206 = vpop.trf.xlu0
    %4207 = vxpose.xlu0.b32.start [1/16] %v4171, 128
    %4208 = vxpose.xlu0.b32.cont [2/16] 0.0, 128
    %4209 = vxpose.xlu0.b32.cont [3/16] 0.0, 128
    %4210 = vxpose.xlu0.b32.cont [4/16] 0.0, 128
    %4211 = vxpose.xlu0.b32.cont [5/16] 0.0, 128
    %4212 = vxpose.xlu0.b32.cont [6/16] 0.0, 128
    %4213 = vxpose.xlu0.b32.cont [7/16] 0.0, 128
    %4214 = vxpose.xlu0.b32.cont [8/16] 0.0, 128
    %4215 = vxpose.xlu0.b32.cont [9/16] 0.0, 128
    %4216 = vxpose.xlu0.b32.cont [10/16] 0.0, 128
    %4217 = vxpose.xlu0.b32.cont [11/16] 0.0, 128
    %4218 = vxpose.xlu0.b32.cont [12/16] 0.0, 128
    %4219 = vxpose.xlu0.b32.cont [13/16] 0.0, 128
    %4220 = vxpose.xlu0.b32.cont [14/16] 0.0, 128
    %4221 = vxpose.xlu0.b32.cont [15/16] 0.0, 128
    %4222 = vxpose.xlu0.b32.end [16/16] 0.0, 128
    %v4223 = vpop.trf.xlu0
    %v4224 = vpop.trf.xlu0
    %v4225 = vpop.trf.xlu0
    %v4226 = vpop.trf.xlu0
    %v4227 = vpop.trf.xlu0
    %v4228 = vpop.trf.xlu0
    %v4229 = vpop.trf.xlu0
    %v4230 = vpop.trf.xlu0
    %v4231 = vpop.trf.xlu0
    %v4232 = vpop.trf.xlu0
    %v4233 = vpop.trf.xlu0
    %v4234 = vpop.trf.xlu0
    %v4235 = vpop.trf.xlu0
    %v4236 = vpop.trf.xlu0
    %v4237 = vpop.trf.xlu0
    %v4238 = vpop.trf.xlu0
    %4239 = vxpose.xlu0.b32.start [1/16] %v4172, 128
    %4240 = vxpose.xlu0.b32.cont [2/16] 0.0, 128
    %4241 = vxpose.xlu0.b32.cont [3/16] 0.0, 128
    %4242 = vxpose.xlu0.b32.cont [4/16] 0.0, 128
    %4243 = vxpose.xlu0.b32.cont [5/16] 0.0, 128
    %4244 = vxpose.xlu0.b32.cont [6/16] 0.0, 128
    %4245 = vxpose.xlu0.b32.cont [7/16] 0.0, 128
    %4246 = vxpose.xlu0.b32.cont [8/16] 0.0, 128
    %4247 = vxpose.xlu0.b32.cont [9/16] 0.0, 128
    %4248 = vxpose.xlu0.b32.cont [10/16] 0.0, 128
    %4249 = vxpose.xlu0.b32.cont [11/16] 0.0, 128
    %4250 = vxpose.xlu0.b32.cont [12/16] 0.0, 128
    %4251 = vxpose.xlu0.b32.cont [13/16] 0.0, 128
    %4252 = vxpose.xlu0.b32.cont [14/16] 0.0, 128
    %4253 = vxpose.xlu0.b32.cont [15/16] 0.0, 128
    %4254 = vxpose.xlu0.b32.end [16/16] 0.0, 128
    %v4255 = vpop.trf.xlu0
    %v4256 = vpop.trf.xlu0
    %v4257 = vpop.trf.xlu0
    %v4258 = vpop.trf.xlu0
    %v4259 = vpop.trf.xlu0
    %v4260 = vpop.trf.xlu0
    %v4261 = vpop.trf.xlu0
    %v4262 = vpop.trf.xlu0
    %v4263 = vpop.trf.xlu0
    %v4264 = vpop.trf.xlu0
    %v4265 = vpop.trf.xlu0
    %v4266 = vpop.trf.xlu0
    %v4267 = vpop.trf.xlu0
    %v4268 = vpop.trf.xlu0
    %v4269 = vpop.trf.xlu0
    %v4270 = vpop.trf.xlu0
    %4271 = vxpose.xlu0.b32.start [1/16] %v4173, 128
    %4272 = vxpose.xlu0.b32.cont [2/16] 0.0, 128
    %4273 = vxpose.xlu0.b32.cont [3/16] 0.0, 128
    %4274 = vxpose.xlu0.b32.cont [4/16] 0.0, 128
    %4275 = vxpose.xlu0.b32.cont [5/16] 0.0, 128
    %4276 = vxpose.xlu0.b32.cont [6/16] 0.0, 128
    %4277 = vxpose.xlu0.b32.cont [7/16] 0.0, 128
    %4278 = vxpose.xlu0.b32.cont [8/16] 0.0, 128
    %4279 = vxpose.xlu0.b32.cont [9/16] 0.0, 128
    %4280 = vxpose.xlu0.b32.cont [10/16] 0.0, 128
    %4281 = vxpose.xlu0.b32.cont [11/16] 0.0, 128
    %4282 = vxpose.xlu0.b32.cont [12/16] 0.0, 128
    %4283 = vxpose.xlu0.b32.cont [13/16] 0.0, 128
    %4284 = vxpose.xlu0.b32.cont [14/16] 0.0, 128
    %4285 = vxpose.xlu0.b32.cont [15/16] 0.0, 128
    %4286 = vxpose.xlu0.b32.end [16/16] 0.0, 128
    %v4287 = vpop.trf.xlu0
    %v4288 = vpop.trf.xlu0
    %v4289 = vpop.trf.xlu0
    %v4290 = vpop.trf.xlu0
    %v4291 = vpop.trf.xlu0
    %v4292 = vpop.trf.xlu0
    %v4293 = vpop.trf.xlu0
    %v4294 = vpop.trf.xlu0
    %v4295 = vpop.trf.xlu0
    %v4296 = vpop.trf.xlu0
    %v4297 = vpop.trf.xlu0
    %v4298 = vpop.trf.xlu0
    %v4299 = vpop.trf.xlu0
    %v4300 = vpop.trf.xlu0
    %v4301 = vpop.trf.xlu0
    %v4302 = vpop.trf.xlu0
    %4303 = vxpose.xlu0.b32.start [1/16] %v4174, 128
    %4304 = vxpose.xlu0.b32.cont [2/16] 0.0, 128
    %4305 = vxpose.xlu0.b32.cont [3/16] 0.0, 128
    %4306 = vxpose.xlu0.b32.cont [4/16] 0.0, 128
    %4307 = vxpose.xlu0.b32.cont [5/16] 0.0, 128
    %4308 = vxpose.xlu0.b32.cont [6/16] 0.0, 128
    %4309 = vxpose.xlu0.b32.cont [7/16] 0.0, 128
    %4310 = vxpose.xlu0.b32.cont [8/16] 0.0, 128
    %4311 = vxpose.xlu0.b32.cont [9/16] 0.0, 128
    %4312 = vxpose.xlu0.b32.cont [10/16] 0.0, 128
    %4313 = vxpose.xlu0.b32.cont [11/16] 0.0, 128
    %4314 = vxpose.xlu0.b32.cont [12/16] 0.0, 128
    %4315 = vxpose.xlu0.b32.cont [13/16] 0.0, 128
    %4316 = vxpose.xlu0.b32.cont [14/16] 0.0, 128
    %4317 = vxpose.xlu0.b32.cont [15/16] 0.0, 128
    %4318 = vxpose.xlu0.b32.end [16/16] 0.0, 128
    %v4319 = vpop.trf.xlu0
    %v4320 = vpop.trf.xlu0
    %v4321 = vpop.trf.xlu0
    %v4322 = vpop.trf.xlu0
    %v4323 = vpop.trf.xlu0
    %v4324 = vpop.trf.xlu0
    %v4325 = vpop.trf.xlu0
    %v4326 = vpop.trf.xlu0
    %v4327 = vpop.trf.xlu0
    %v4328 = vpop.trf.xlu0
    %v4329 = vpop.trf.xlu0
    %v4330 = vpop.trf.xlu0
    %v4331 = vpop.trf.xlu0
    %v4332 = vpop.trf.xlu0
    %v4333 = vpop.trf.xlu0
    %v4334 = vpop.trf.xlu0
    %v4335 = vcombine.low %v4191, %v4255
    %v4337 = vunpack.c.l.s4 1983009808
    %v4338 = vunpack.c.0.s8 %v4337
    %v4339 = vlaneseq
    %v4340 = vshrl.u32 %v4339, 7
    %v4341 = vsub.s32 %v4338, %v4340
    %v4342 = vrot.slane %v4335, %v4341
    %v4343 = vcombine.low %v4223, %v4287
    %v4345 = vunpack.c.l.s4 1983009808
    %v4346 = vunpack.c.0.s8 %v4345
    %v4347 = vlaneseq
    %v4348 = vshrl.u32 %v4347, 7
    %v4349 = vsub.s32 %v4346, %v4348
    %v4350 = vrot.slane %v4343, %v4349
    %v4351 = vcombine.low %v4342, %v4350
    %v4353 = vunpack.c.l.s4 1934713408
    %v4354 = vunpack.c.0.s8 %v4353
    %v4355 = vlaneseq
    %v4356 = vshrl.u32 %v4355, 7
    %v4357 = vsub.s32 %v4354, %v4356
    %v4358 = vrot.slane %v4351, %v4357
    %v4360 = vunpack.c.l.s4 1934713408
    %v4361 = vunpack.c.0.s8 %v4360
    %v4362 = vlaneseq
    %v4363 = vshrl.u32 %v4362, 7
    %v4364 = vsub.s32 %v4361, %v4363
    %v4365 = vrot.slane %v4319, %v4364
    %v4366 = vcombine.low %v4358, %v4365
    %v4367 = vcombine.high %v4358, %v4365
    %v4368 = vcombine.low %v3325, %v3327
    %v4370 = vunpack.c.l.s4 1983009808
    %v4371 = vunpack.c.0.s8 %v4370
    %v4372 = vlaneseq
    %v4373 = vshrl.u32 %v4372, 7
    %v4374 = vsub.s32 %v4371, %v4373
    %v4375 = vrot.slane %v4368, %v4374
    %v4376 = vcombine.low %v3326, %v3328
    %v4378 = vunpack.c.l.s4 1983009808
    %v4379 = vunpack.c.0.s8 %v4378
    %v4380 = vlaneseq
    %v4381 = vshrl.u32 %v4380, 7
    %v4382 = vsub.s32 %v4379, %v4381
    %v4383 = vrot.slane %v4376, %v4382
    %v4384 = vcombine.low %v3329, %v3331
    %v4386 = vunpack.c.l.s4 1983009808
    %v4387 = vunpack.c.0.s8 %v4386
    %v4388 = vlaneseq
    %v4389 = vshrl.u32 %v4388, 7
    %v4390 = vsub.s32 %v4387, %v4389
    %v4391 = vrot.slane %v4384, %v4390
    %v4392 = vld [vmem:[#allocation2 + $0xa] sm:$0x3]
    %v4393 = vcombine.low %v4375, %v4383
    %v4395 = vunpack.c.l.s4 1934713408
    %v4396 = vunpack.c.0.s8 %v4395
    %v4397 = vlaneseq
    %v4398 = vshrl.u32 %v4397, 7
    %v4399 = vsub.s32 %v4396, %v4398
    %v4400 = vrot.slane %v4393, %v4399
    %v4401 = vcombine.low %v4391, %v4392
    %v4403 = vunpack.c.l.s4 1934713408
    %v4404 = vunpack.c.0.s8 %v4403
    %v4405 = vlaneseq
    %v4406 = vshrl.u32 %v4405, 7
    %v4407 = vsub.s32 %v4404, %v4406
    %v4408 = vrot.slane %v4401, %v4407
    %v4409 = vcombine.low %v4400, %v4408
    %v4410 = vcombine.high %v4400, %v4408
    %vm4411 = vcmask 56320
    %v4413 = vsel %vm4411, %v4366, 0
    %v4416 = vsel %vm111, %v4409, 0
    %4418 = vmatprep.subr.mxu0 0.0
    %4419 = vmatpush1.msra.mxu0 %v4416
    %4420 = vmatprep.subr.mxu0 0.0
    %4421 = vmatpush1.msra.mxu0 0.0
    %4422 = vmatprep.subr.mxu0 0.0
    %4423 = vmatpush1.msra.mxu0 0.0
    %4424 = vmatprep.subr.mxu0 0.0
    %4425 = vmatpush1.msra.mxu0 0.0
    %4426 = vmatprep.subr.mxu0 0.0
    %4427 = vmatpush1.msra.mxu0 0.0
    %4428 = vmatprep.subr.mxu0 0.0
    %4429 = vmatpush1.msra.mxu0 0.0
    %4430 = vmatprep.subr.mxu0 0.0
    %4431 = vmatpush1.msra.mxu0 0.0
    %4432 = vmatprep.subr.mxu0 0.0
    %4433 = vmatpush1.msra.mxu0 0.0
    %4434 = vmatprep.subr.mxu0 0.0
    %4435 = vmatpush1.msra.mxu0 0.0
    %4436 = vmatprep.subr.mxu0 0.0
    %4437 = vmatpush1.msra.mxu0 0.0
    %4438 = vmatprep.subr.mxu0 0.0
    %4439 = vmatpush1.msra.mxu0 0.0
    %4440 = vmatprep.subr.mxu0 0.0
    %4441 = vmatpush1.msra.mxu0 0.0
    %4442 = vmatprep.subr.mxu0 0.0
    %4443 = vmatpush1.msra.mxu0 0.0
    %4444 = vmatprep.subr.mxu0 0.0
    %4445 = vmatpush1.msra.mxu0 0.0
    %4446 = vmatprep.subr.mxu0 0.0
    %4447 = vmatpush1.msra.mxu0 0.0
    %4448 = vmatprep.subr.mxu0 0.0
    %4449 = vmatpush1.msra.mxu0 0.0
    %4450 = vmatprep.subr.mxu0 0.0
    %4451 = vmatpush1.msra.mxu0 0.0
    %4452 = vmatprep.subr.mxu0 0.0
    %4453 = vmatpush1.msra.mxu0 0.0
    %4454 = vmatprep.subr.mxu0 0.0
    %4455 = vmatpush1.msra.mxu0 0.0
    %4456 = vmatprep.subr.mxu0 0.0
    %4457 = vmatpush1.msra.mxu0 0.0
    %4458 = vmatprep.subr.mxu0 0.0
    %4459 = vmatpush1.msra.mxu0 0.0
    %4460 = vmatprep.subr.mxu0 0.0
    %4461 = vmatpush1.msra.mxu0 0.0
    %4462 = vmatprep.subr.mxu0 0.0
    %4463 = vmatpush1.msra.mxu0 0.0
    %4464 = vmatprep.subr.mxu0 0.0
    %4465 = vmatpush1.msra.mxu0 0.0
    %4466 = vmatprep.subr.mxu0 0.0
    %4467 = vmatpush1.msra.mxu0 0.0
    %4468 = vmatprep.subr.mxu0 0.0
    %4469 = vmatpush1.msra.mxu0 0.0
    %4470 = vmatprep.subr.mxu0 0.0
    %4471 = vmatpush1.msra.mxu0 0.0
    %4472 = vmatprep.subr.mxu0 0.0
    %4473 = vmatpush1.msra.mxu0 0.0
    %4474 = vmatprep.subr.mxu0 0.0
    %4475 = vmatpush1.msra.mxu0 0.0
    %4476 = vmatprep.subr.mxu0 0.0
    %4477 = vmatpush1.msra.mxu0 0.0
    %4478 = vmatprep.subr.mxu0 0.0
    %4479 = vmatpush1.msra.mxu0 0.0
    %4480 = vmatprep.subr.mxu0 0.0
    %4481 = vmatpush1.msra.mxu0 0.0
    %4482 = vmatprep.mubr.f32.mxu0 0.0
    %4483 = vmatmul.mubr.f32.gmra.mrb[0].mxu0 %v4413
    %v4484 = vpop.f32.mrb[0].mxu0
    %v4485 = vadd.f32 0.0, %v4484
    %v4486 = vpop.f32.mrb[0].mxu0
    %4487 = vdwg.mxu0
    %v4489 = vsel %vm4411, %v4367, 0
    %v4492 = vsel %vm111, %v4410, 0
    %4494 = vmatprep.subr.mxu0 0.0
    %4495 = vmatpush1.msra.mxu0 %v4492
    %4496 = vmatprep.subr.mxu0 0.0
    %4497 = vmatpush1.msra.mxu0 0.0
    %4498 = vmatprep.subr.mxu0 0.0
    %4499 = vmatpush1.msra.mxu0 0.0
    %4500 = vmatprep.subr.mxu0 0.0
    %4501 = vmatpush1.msra.mxu0 0.0
    %4502 = vmatprep.subr.mxu0 0.0
    %4503 = vmatpush1.msra.mxu0 0.0
    %4504 = vmatprep.subr.mxu0 0.0
    %4505 = vmatpush1.msra.mxu0 0.0
    %4506 = vmatprep.subr.mxu0 0.0
    %4507 = vmatpush1.msra.mxu0 0.0
    %4508 = vmatprep.subr.mxu0 0.0
    %4509 = vmatpush1.msra.mxu0 0.0
    %4510 = vmatprep.subr.mxu0 0.0
    %4511 = vmatpush1.msra.mxu0 0.0
    %4512 = vmatprep.subr.mxu0 0.0
    %4513 = vmatpush1.msra.mxu0 0.0
    %4514 = vmatprep.subr.mxu0 0.0
    %4515 = vmatpush1.msra.mxu0 0.0
    %4516 = vmatprep.subr.mxu0 0.0
    %4517 = vmatpush1.msra.mxu0 0.0
    %4518 = vmatprep.subr.mxu0 0.0
    %4519 = vmatpush1.msra.mxu0 0.0
    %4520 = vmatprep.subr.mxu0 0.0
    %4521 = vmatpush1.msra.mxu0 0.0
    %4522 = vmatprep.subr.mxu0 0.0
    %4523 = vmatpush1.msra.mxu0 0.0
    %4524 = vmatprep.subr.mxu0 0.0
    %4525 = vmatpush1.msra.mxu0 0.0
    %4526 = vmatprep.subr.mxu0 0.0
    %4527 = vmatpush1.msra.mxu0 0.0
    %4528 = vmatprep.subr.mxu0 0.0
    %4529 = vmatpush1.msra.mxu0 0.0
    %4530 = vmatprep.subr.mxu0 0.0
    %4531 = vmatpush1.msra.mxu0 0.0
    %4532 = vmatprep.subr.mxu0 0.0
    %4533 = vmatpush1.msra.mxu0 0.0
    %4534 = vmatprep.subr.mxu0 0.0
    %4535 = vmatpush1.msra.mxu0 0.0
    %4536 = vmatprep.subr.mxu0 0.0
    %4537 = vmatpush1.msra.mxu0 0.0
    %4538 = vmatprep.subr.mxu0 0.0
    %4539 = vmatpush1.msra.mxu0 0.0
    %4540 = vmatprep.subr.mxu0 0.0
    %4541 = vmatpush1.msra.mxu0 0.0
    %4542 = vmatprep.subr.mxu0 0.0
    %4543 = vmatpush1.msra.mxu0 0.0
    %4544 = vmatprep.subr.mxu0 0.0
    %4545 = vmatpush1.msra.mxu0 0.0
    %4546 = vmatprep.subr.mxu0 0.0
    %4547 = vmatpush1.msra.mxu0 0.0
    %4548 = vmatprep.subr.mxu0 0.0
    %4549 = vmatpush1.msra.mxu0 0.0
    %4550 = vmatprep.subr.mxu0 0.0
    %4551 = vmatpush1.msra.mxu0 0.0
    %4552 = vmatprep.subr.mxu0 0.0
    %4553 = vmatpush1.msra.mxu0 0.0
    %4554 = vmatprep.subr.mxu0 0.0
    %4555 = vmatpush1.msra.mxu0 0.0
    %4556 = vmatprep.subr.mxu0 0.0
    %4557 = vmatpush1.msra.mxu0 0.0
    %4558 = vmatprep.mubr.f32.mxu0 0.0
    %4559 = vmatmul.mubr.f32.gmra.mrb[0].mxu0 %v4489
    %v4560 = vpop.f32.mrb[0].mxu0
    %v4561 = vadd.f32 0.0, %v4560
    %v4562 = vpop.f32.mrb[0].mxu0
    %4563 = vdwg.mxu0
    %v4565 = vunpack.c.l.s4 1983009808
    %v4566 = vunpack.c.0.s8 %v4565
    %v4567 = vlaneseq
    %v4568 = vshrl.u32 %v4567, 7
    %v4569 = vsub.s32 %v4566, %v4568
    %v4570 = vrot.slane %v4485, %v4569
    %v4571 = vcombine.high %v4485, 0.0
    %v4573 = vunpack.c.l.s4 1983009808
    %v4574 = vunpack.c.0.s8 %v4573
    %v4575 = vlaneseq
    %v4576 = vshrl.u32 %v4575, 7
    %v4577 = vsub.s32 %v4574, %v4576
    %v4578 = vrot.slane %v4561, %v4577
    %v4579 = vcombine.high %v4561, 0.0
    %v4580 = vcombine.low %v4570, %v4578
    %v4581 = vcombine.high %v4570, %v4578
    %v4583 = vunpack.c.l.s4 1934713408
    %v4584 = vunpack.c.0.s8 %v4583
    %v4585 = vlaneseq
    %v4586 = vshrl.u32 %v4585, 7
    %v4587 = vsub.s32 %v4584, %v4586
    %v4588 = vrot.slane %v4580, %v4587
    %v4590 = vunpack.c.l.s4 1934713408
    %v4591 = vunpack.c.0.s8 %v4590
    %v4592 = vlaneseq
    %v4593 = vshrl.u32 %v4592, 7
    %v4594 = vsub.s32 %v4591, %v4593
    %v4595 = vrot.slane %v4581, %v4594
    %v4596 = vcombine.low %v4571, %v4579
    %v4597 = vcombine.high %v4588, 0.0
    %v4598 = vcombine.high %v4595, 0.0
    %v4600 = vunpack.c.l.s4 1934713408
    %v4601 = vunpack.c.0.s8 %v4600
    %v4602 = vlaneseq
    %v4603 = vshrl.u32 %v4602, 7
    %v4604 = vsub.s32 %v4601, %v4603
    %v4605 = vrot.slane %v4596, %v4604
    %4607 = vrot.lane.b32.xlu0 %v4597, 64
    %v4608 = vpop.permute.xlu0 %4607
    %4611 = vrot.lane.b32.xlu0 %v4598, 64
    %v4612 = vpop.permute.xlu0 %4611
    %v4614 = vsel %vm1613, %v4588, %v4608
    %v4615 = vsel %vm1613, %v4595, %v4612
    %v4616 = vld [vmem:[#allocation3] sm:$0xff]
    %v4617 = vld [vmem:[#allocation3 + $0x8] sm:$0xff]
    %v4618 = vld [vmem:[#allocation3 + $0x10] sm:$0xff]
    %v4619 = vld [vmem:[#allocation3 + $0x18] sm:$0xff]
    %v4620 = vld [vmem:[#allocation3 + $0x20] sm:$0xff]
    %v4621 = vld [vmem:[#allocation3 + $0x28] sm:$0xff]
    %v4622 = vld [vmem:[#allocation3 + $0x30] sm:$0xff]
    %v4623 = vld [vmem:[#allocation3 + $0x38] sm:$0xff]
    %v4624 = vld [vmem:[#allocation3 + $0x40] sm:$0xff]
    %v4625 = vld [vmem:[#allocation3 + $0x48] sm:$0xff]
    %v4626 = vld [vmem:[#allocation3 + $0x50] sm:$0xff]
    %v4627 = vld [vmem:[#allocation3 + $0x58] sm:$0xff]
    %v4628 = vld [vmem:[#allocation3 + $0x60] sm:$0xff]
    %v4629 = vld [vmem:[#allocation3 + $0x68] sm:$0xff]
    %v4630 = vld [vmem:[#allocation3 + $0x70] sm:$0xff]
    %v4631 = vld [vmem:[#allocation3 + $0x78] sm:$0xff]
    %v4632 = vld [vmem:[#allocation3 + $0x80] sm:$0xff]
    %v4633 = vld [vmem:[#allocation3 + $0x88] sm:$0xff]
    %v4634 = vld [vmem:[#allocation3 + $0x90] sm:$0xff]
    %v4635 = vld [vmem:[#allocation3 + $0x98] sm:$0xff]
    %v4636 = vld [vmem:[#allocation3 + $0xa0] sm:$0xff]
    %v4637 = vld [vmem:[#allocation3 + $0xa8] sm:$0xff]
    %v4638 = vld [vmem:[#allocation3 + $0xb0] sm:$0xff]
    %v4639 = vld [vmem:[#allocation3 + $0xb8] sm:$0xff]
    %v4640 = vld [vmem:[#allocation3 + $0xc0] sm:$0xff]
    %v4641 = vld [vmem:[#allocation3 + $0xc8] sm:$0xff]
    %v4642 = vld [vmem:[#allocation3 + $0xd0] sm:$0xff]
    %v4643 = vld [vmem:[#allocation3 + $0xd8] sm:$0xff]
    %v4644 = vld [vmem:[#allocation3 + $0xe0] sm:$0xff]
    %v4645 = vld [vmem:[#allocation3 + $0xe8] sm:$0xff]
    %v4646 = vld [vmem:[#allocation3 + $0xf0] sm:$0xff]
    %v4647 = vld [vmem:[#allocation3 + $0xf8] sm:$0xff]
    %v4648 = vld [vmem:[#allocation3 + $0x100] sm:$0xff]
    %v4649 = vld [vmem:[#allocation3 + $0x108] sm:$0xff]
    %v4650 = vld [vmem:[#allocation3 + $0x110] sm:$0xff]
    %v4651 = vld [vmem:[#allocation3 + $0x118] sm:$0xff]
    %v4652 = vld [vmem:[#allocation3 + $0x120] sm:$0xff]
    %v4653 = vld [vmem:[#allocation3 + $0x128] sm:$0xff]
    %v4654 = vld [vmem:[#allocation3 + $0x130] sm:$0xff]
    %v4655 = vld [vmem:[#allocation3 + $0x138] sm:$0xff]
    %v4656 = vld [vmem:[#allocation3 + $0x140] sm:$0xff]
    %v4657 = vld [vmem:[#allocation3 + $0x148] sm:$0xff]
    %v4658 = vld [vmem:[#allocation3 + $0x150] sm:$0xff]
    %v4659 = vld [vmem:[#allocation3 + $0x158] sm:$0xff]
    %v4660 = vld [vmem:[#allocation3 + $0x160] sm:$0xff]
    %v4661 = vld [vmem:[#allocation3 + $0x168] sm:$0xff]
    %v4662 = vld [vmem:[#allocation3 + $0x170] sm:$0xff]
    %v4663 = vld [vmem:[#allocation3 + $0x178] sm:$0xff]
    %v4664 = vld [vmem:[#allocation3 + $0x180] sm:$0xff]
    %v4665 = vld [vmem:[#allocation3 + $0x188] sm:$0xff]
    %v4666 = vld [vmem:[#allocation3 + $0x190] sm:$0xff]
    %v4667 = vld [vmem:[#allocation3 + $0x198] sm:$0xff]
    %v4668 = vld [vmem:[#allocation3 + $0x1a0] sm:$0xff]
    %v4669 = vld [vmem:[#allocation3 + $0x1a8] sm:$0xff]
    %v4670 = vld [vmem:[#allocation3 + $0x1b0] sm:$0xff]
    %v4671 = vld [vmem:[#allocation3 + $0x1b8] sm:$0xff]
    %v4672 = vld [vmem:[#allocation3 + $0x1c0] sm:$0xff]
    %v4673 = vld [vmem:[#allocation3 + $0x1c8] sm:$0xff]
    %v4674 = vld [vmem:[#allocation3 + $0x1d0] sm:$0xff]
    %v4675 = vld [vmem:[#allocation3 + $0x1d8] sm:$0xff]
    %v4676 = vld [vmem:[#allocation3 + $0x1e0] sm:$0xff]
    %v4677 = vld [vmem:[#allocation3 + $0x1e8] sm:$0xff]
    %v4678 = vld [vmem:[#allocation3 + $0x1f0] sm:$0xff]
    %v4679 = vld [vmem:[#allocation3 + $0x1f8] sm:$0xff]
    %v4680 = vld [vmem:[#allocation3 + $0x200] sm:$0xff]
    %v4681 = vld [vmem:[#allocation3 + $0x208] sm:$0xff]
    %v4682 = vld [vmem:[#allocation3 + $0x210] sm:$0xff]
    %v4683 = vld [vmem:[#allocation3 + $0x218] sm:$0xff]
    %v4684 = vld [vmem:[#allocation3 + $0x220] sm:$0xff]
    %v4685 = vld [vmem:[#allocation3 + $0x228] sm:$0xff]
    %v4686 = vld [vmem:[#allocation3 + $0x230] sm:$0xff]
    %v4687 = vld [vmem:[#allocation3 + $0x238] sm:$0xff]
    %v4688 = vld [vmem:[#allocation3 + $0x240] sm:$0xff]
    %v4689 = vld [vmem:[#allocation3 + $0x248] sm:$0xff]
    %v4690 = vld [vmem:[#allocation3 + $0x250] sm:$0xff]
    %v4691 = vld [vmem:[#allocation3 + $0x258] sm:$0xff]
    %v4692 = vld [vmem:[#allocation3 + $0x260] sm:$0xff]
    %v4693 = vld [vmem:[#allocation3 + $0x268] sm:$0xff]
    %v4694 = vld [vmem:[#allocation3 + $0x270] sm:$0xff]
    %v4695 = vld [vmem:[#allocation3 + $0x278] sm:$0xff]
    %v4696 = vld [vmem:[#allocation3 + $0x280] sm:$0xff]
    %v4697 = vld [vmem:[#allocation3 + $0x288] sm:$0xff]
    %v4698 = vld [vmem:[#allocation3 + $0x290] sm:$0xff]
    %v4699 = vld [vmem:[#allocation3 + $0x298] sm:$0xff]
    %v4700 = vld [vmem:[#allocation3 + $0x2a0] sm:$0xff]
    %v4701 = vld [vmem:[#allocation3 + $0x2a8] sm:$0xff]
    %v4702 = vld [vmem:[#allocation3 + $0x2b0] sm:$0xff]
    %v4703 = vld [vmem:[#allocation3 + $0x2b8] sm:$0xff]
    %v4704 = vld [vmem:[#allocation3 + $0x2c0] sm:$0xff]
    %v4705 = vld [vmem:[#allocation3 + $0x2c8] sm:$0xff]
    %v4706 = vld [vmem:[#allocation3 + $0x2d0] sm:$0xff]
    %v4707 = vld [vmem:[#allocation3 + $0x2d8] sm:$0xff]
    %v4708 = vld [vmem:[#allocation3 + $0x2e0] sm:$0xff]
    %v4709 = vld [vmem:[#allocation3 + $0x2e8] sm:$0xff]
    %v4710 = vld [vmem:[#allocation3 + $0x2f0] sm:$0xff]
    %v4711 = vld [vmem:[#allocation3 + $0x2f8] sm:$0xff]
    %v4712 = vld [vmem:[#allocation3 + $0x300] sm:$0xff]
    %v4713 = vld [vmem:[#allocation3 + $0x308] sm:$0xff]
    %v4714 = vld [vmem:[#allocation3 + $0x310] sm:$0xff]
    %v4715 = vld [vmem:[#allocation3 + $0x318] sm:$0xff]
    %v4716 = vld [vmem:[#allocation3 + $0x320] sm:$0xff]
    %v4717 = vld [vmem:[#allocation3 + $0x328] sm:$0xff]
    %v4718 = vld [vmem:[#allocation3 + $0x330] sm:$0xff]
    %v4719 = vld [vmem:[#allocation3 + $0x338] sm:$0xff]
    %v4720 = vld [vmem:[#allocation3 + $0x340] sm:$0xff]
    %v4721 = vld [vmem:[#allocation3 + $0x348] sm:$0xff]
    %v4722 = vld [vmem:[#allocation3 + $0x350] sm:$0xff]
    %v4723 = vld [vmem:[#allocation3 + $0x358] sm:$0xff]
    %v4724 = vld [vmem:[#allocation3 + $0x360] sm:$0xff]
    %v4725 = vld [vmem:[#allocation3 + $0x368] sm:$0xff]
    %v4726 = vld [vmem:[#allocation3 + $0x370] sm:$0xff]
    %v4727 = vld [vmem:[#allocation3 + $0x378] sm:$0xff]
    %v4728 = vld [vmem:[#allocation3 + $0x380] sm:$0xff]
    %v4729 = vld [vmem:[#allocation3 + $0x388] sm:$0xff]
    %v4730 = vld [vmem:[#allocation3 + $0x390] sm:$0xff]
    %v4731 = vld [vmem:[#allocation3 + $0x398] sm:$0xff]
    %v4732 = vld [vmem:[#allocation3 + $0x3a0] sm:$0xff]
    %v4733 = vld [vmem:[#allocation3 + $0x3a8] sm:$0xff]
    %v4734 = vld [vmem:[#allocation3 + $0x3b0] sm:$0xff]
    %v4735 = vld [vmem:[#allocation3 + $0x3b8] sm:$0xff]
    %v4736 = vld [vmem:[%s15] sm:$0x7]
    %v4738 = vlaneseq
    %v4739 = vshrl.u32 %v4738, 7
    %v4740 = vsub.s32 0, %v4739
    %v4741 = vrot.slane %v4736, %v4740
    %v4742 = vlaneseq
    %v4743 = vshrl.u32 %v4742, 7
    %v4744 = vsub.s32 1, %v4743
    %v4745 = vrot.slane %v4736, %v4744
    %v4746 = vlaneseq
    %v4747 = vshrl.u32 %v4746, 7
    %v4748 = vsub.s32 2, %v4747
    %v4749 = vrot.slane %v4736, %v4748
    %v4754 = vsel %vm1613, %v4605, 0
    %4756 = vmatprep.subr.mxu0 %v4617
    %4757 = vmatpush1.msra.mxu0 %v4616
    %4758 = vmatprep.subr.mxu0 %v4620
    %4759 = vmatpush1.msra.mxu0 %v4619
    %4760 = vmatprep.subr.mxu0 %v4623
    %4761 = vmatpush1.msra.mxu0 %v4622
    %4762 = vmatprep.subr.mxu0 %v4626
    %4763 = vmatpush1.msra.mxu0 %v4625
    %4764 = vmatprep.subr.mxu0 %v4629
    %4765 = vmatpush1.msra.mxu0 %v4628
    %4766 = vmatprep.subr.mxu0 %v4632
    %4767 = vmatpush1.msra.mxu0 %v4631
    %4768 = vmatprep.subr.mxu0 %v4635
    %4769 = vmatpush1.msra.mxu0 %v4634
    %4770 = vmatprep.subr.mxu0 %v4638
    %4771 = vmatpush1.msra.mxu0 %v4637
    %4772 = vmatprep.subr.mxu0 %v4641
    %4773 = vmatpush1.msra.mxu0 %v4640
    %4774 = vmatprep.subr.mxu0 %v4644
    %4775 = vmatpush1.msra.mxu0 %v4643
    %4776 = vmatprep.subr.mxu0 %v4647
    %4777 = vmatpush1.msra.mxu0 %v4646
    %4778 = vmatprep.subr.mxu0 %v4650
    %4779 = vmatpush1.msra.mxu0 %v4649
    %4780 = vmatprep.subr.mxu0 %v4653
    %4781 = vmatpush1.msra.mxu0 %v4652
    %4782 = vmatprep.subr.mxu0 %v4656
    %4783 = vmatpush1.msra.mxu0 %v4655
    %4784 = vmatprep.subr.mxu0 %v4659
    %4785 = vmatpush1.msra.mxu0 %v4658
    %4786 = vmatprep.subr.mxu0 %v4662
    %4787 = vmatpush1.msra.mxu0 %v4661
    %4788 = vmatprep.subr.mxu0 %v4665
    %4789 = vmatpush1.msra.mxu0 %v4664
    %4790 = vmatprep.subr.mxu0 %v4668
    %4791 = vmatpush1.msra.mxu0 %v4667
    %4792 = vmatprep.subr.mxu0 %v4671
    %4793 = vmatpush1.msra.mxu0 %v4670
    %4794 = vmatprep.subr.mxu0 %v4674
    %4795 = vmatpush1.msra.mxu0 %v4673
    %4796 = vmatprep.subr.mxu0 %v4677
    %4797 = vmatpush1.msra.mxu0 %v4676
    %4798 = vmatprep.subr.mxu0 %v4680
    %4799 = vmatpush1.msra.mxu0 %v4679
    %4800 = vmatprep.subr.mxu0 %v4683
    %4801 = vmatpush1.msra.mxu0 %v4682
    %4802 = vmatprep.subr.mxu0 %v4686
    %4803 = vmatpush1.msra.mxu0 %v4685
    %4804 = vmatprep.subr.mxu0 %v4689
    %4805 = vmatpush1.msra.mxu0 %v4688
    %4806 = vmatprep.subr.mxu0 %v4692
    %4807 = vmatpush1.msra.mxu0 %v4691
    %4808 = vmatprep.subr.mxu0 %v4695
    %4809 = vmatpush1.msra.mxu0 %v4694
    %4810 = vmatprep.subr.mxu0 %v4698
    %4811 = vmatpush1.msra.mxu0 %v4697
    %4812 = vmatprep.subr.mxu0 %v4701
    %4813 = vmatpush1.msra.mxu0 %v4700
    %4814 = vmatprep.subr.mxu0 %v4704
    %4815 = vmatpush1.msra.mxu0 %v4703
    %4816 = vmatprep.subr.mxu0 %v4707
    %4817 = vmatpush1.msra.mxu0 %v4706
    %4818 = vmatprep.subr.mxu0 %v4710
    %4819 = vmatpush1.msra.mxu0 %v4709
    %4820 = vmatprep.mubr.f32.mxu0 %v4615
    %4821 = vmatmul.mubr.f32.gmra.mrb[0].mxu0 %v4614
    %v4822 = vpop.f32.mrb[0].mxu0
    %v4823 = vadd.f32 %v4741, %v4822
    %v4824 = vpop.f32.mrb[0].mxu0
    %v4825 = vadd.f32 %v4745, %v4824
    %4826 = vdwg.mxu0
    %4827 = vmatprep.subr.mxu0 %v4713
    %4828 = vmatpush1.msra.mxu0 %v4712
    %4829 = vmatprep.subr.mxu0 %v4716
    %4830 = vmatpush1.msra.mxu0 %v4715
    %4831 = vmatprep.subr.mxu0 %v4719
    %4832 = vmatpush1.msra.mxu0 %v4718
    %4833 = vmatprep.subr.mxu0 %v4722
    %4834 = vmatpush1.msra.mxu0 %v4721
    %4835 = vmatprep.subr.mxu0 %v4725
    %4836 = vmatpush1.msra.mxu0 %v4724
    %4837 = vmatprep.subr.mxu0 %v4728
    %4838 = vmatpush1.msra.mxu0 %v4727
    %4839 = vmatprep.subr.mxu0 %v4731
    %4840 = vmatpush1.msra.mxu0 %v4730
    %4841 = vmatprep.subr.mxu0 %v4734
    %4842 = vmatpush1.msra.mxu0 %v4733
    %4843 = vmatprep.subr.mxu0 0.0
    %4844 = vmatpush1.msra.mxu0 0.0
    %4845 = vmatprep.subr.mxu0 0.0
    %4846 = vmatpush1.msra.mxu0 0.0
    %4847 = vmatprep.subr.mxu0 0.0
    %4848 = vmatpush1.msra.mxu0 0.0
    %4849 = vmatprep.subr.mxu0 0.0
    %4850 = vmatpush1.msra.mxu0 0.0
    %4851 = vmatprep.subr.mxu0 0.0
    %4852 = vmatpush1.msra.mxu0 0.0
    %4853 = vmatprep.subr.mxu0 0.0
    %4854 = vmatpush1.msra.mxu0 0.0
    %4855 = vmatprep.subr.mxu0 0.0
    %4856 = vmatpush1.msra.mxu0 0.0
    %4857 = vmatprep.subr.mxu0 0.0
    %4858 = vmatpush1.msra.mxu0 0.0
    %4859 = vmatprep.subr.mxu0 0.0
    %4860 = vmatpush1.msra.mxu0 0.0
    %4861 = vmatprep.subr.mxu0 0.0
    %4862 = vmatpush1.msra.mxu0 0.0
    %4863 = vmatprep.subr.mxu0 0.0
    %4864 = vmatpush1.msra.mxu0 0.0
    %4865 = vmatprep.subr.mxu0 0.0
    %4866 = vmatpush1.msra.mxu0 0.0
    %4867 = vmatprep.subr.mxu0 0.0
    %4868 = vmatpush1.msra.mxu0 0.0
    %4869 = vmatprep.subr.mxu0 0.0
    %4870 = vmatpush1.msra.mxu0 0.0
    %4871 = vmatprep.subr.mxu0 0.0
    %4872 = vmatpush1.msra.mxu0 0.0
    %4873 = vmatprep.subr.mxu0 0.0
    %4874 = vmatpush1.msra.mxu0 0.0
    %4875 = vmatprep.subr.mxu0 0.0
    %4876 = vmatpush1.msra.mxu0 0.0
    %4877 = vmatprep.subr.mxu0 0.0
    %4878 = vmatpush1.msra.mxu0 0.0
    %4879 = vmatprep.subr.mxu0 0.0
    %4880 = vmatpush1.msra.mxu0 0.0
    %4881 = vmatprep.subr.mxu0 0.0
    %4882 = vmatpush1.msra.mxu0 0.0
    %4883 = vmatprep.subr.mxu0 0.0
    %4884 = vmatpush1.msra.mxu0 0.0
    %4885 = vmatprep.subr.mxu0 0.0
    %4886 = vmatpush1.msra.mxu0 0.0
    %4887 = vmatprep.subr.mxu0 0.0
    %4888 = vmatpush1.msra.mxu0 0.0
    %4889 = vmatprep.subr.mxu0 0.0
    %4890 = vmatpush1.msra.mxu0 0.0
    %4891 = vmatprep.mubr.f32.mxu0 0.0
    %4892 = vmatmul.mubr.f32.gmra.mrb[0].mxu0 %v4754
    %v4893 = vpop.f32.mrb[0].mxu0
    %v4894 = vadd.f32 %v4823, %v4893
    %v4895 = vpop.f32.mrb[0].mxu0
    %v4896 = vadd.f32 %v4825, %v4895
    %4897 = vdwg.mxu0
    %4898 = vmatprep.subr.mxu0 0.0
    %4899 = vmatpush1.msra.mxu0 %v4618
    %4900 = vmatprep.subr.mxu0 0.0
    %4901 = vmatpush1.msra.mxu0 %v4621
    %4902 = vmatprep.subr.mxu0 0.0
    %4903 = vmatpush1.msra.mxu0 %v4624
    %4904 = vmatprep.subr.mxu0 0.0
    %4905 = vmatpush1.msra.mxu0 %v4627
    %4906 = vmatprep.subr.mxu0 0.0
    %4907 = vmatpush1.msra.mxu0 %v4630
    %4908 = vmatprep.subr.mxu0 0.0
    %4909 = vmatpush1.msra.mxu0 %v4633
    %4910 = vmatprep.subr.mxu0 0.0
    %4911 = vmatpush1.msra.mxu0 %v4636
    %4912 = vmatprep.subr.mxu0 0.0
    %4913 = vmatpush1.msra.mxu0 %v4639
    %4914 = vmatprep.subr.mxu0 0.0
    %4915 = vmatpush1.msra.mxu0 %v4642
    %4916 = vmatprep.subr.mxu0 0.0
    %4917 = vmatpush1.msra.mxu0 %v4645
    %4918 = vmatprep.subr.mxu0 0.0
    %4919 = vmatpush1.msra.mxu0 %v4648
    %4920 = vmatprep.subr.mxu0 0.0
    %4921 = vmatpush1.msra.mxu0 %v4651
    %4922 = vmatprep.subr.mxu0 0.0
    %4923 = vmatpush1.msra.mxu0 %v4654
    %4924 = vmatprep.subr.mxu0 0.0
    %4925 = vmatpush1.msra.mxu0 %v4657
    %4926 = vmatprep.subr.mxu0 0.0
    %4927 = vmatpush1.msra.mxu0 %v4660
    %4928 = vmatprep.subr.mxu0 0.0
    %4929 = vmatpush1.msra.mxu0 %v4663
    %4930 = vmatprep.subr.mxu0 0.0
    %4931 = vmatpush1.msra.mxu0 %v4666
    %4932 = vmatprep.subr.mxu0 0.0
    %4933 = vmatpush1.msra.mxu0 %v4669
    %4934 = vmatprep.subr.mxu0 0.0
    %4935 = vmatpush1.msra.mxu0 %v4672
    %4936 = vmatprep.subr.mxu0 0.0
    %4937 = vmatpush1.msra.mxu0 %v4675
    %4938 = vmatprep.subr.mxu0 0.0
    %4939 = vmatpush1.msra.mxu0 %v4678
    %4940 = vmatprep.subr.mxu0 0.0
    %4941 = vmatpush1.msra.mxu0 %v4681
    %4942 = vmatprep.subr.mxu0 0.0
    %4943 = vmatpush1.msra.mxu0 %v4684
    %4944 = vmatprep.subr.mxu0 0.0
    %4945 = vmatpush1.msra.mxu0 %v4687
    %4946 = vmatprep.subr.mxu0 0.0
    %4947 = vmatpush1.msra.mxu0 %v4690
    %4948 = vmatprep.subr.mxu0 0.0
    %4949 = vmatpush1.msra.mxu0 %v4693
    %4950 = vmatprep.subr.mxu0 0.0
    %4951 = vmatpush1.msra.mxu0 %v4696
    %4952 = vmatprep.subr.mxu0 0.0
    %4953 = vmatpush1.msra.mxu0 %v4699
    %4954 = vmatprep.subr.mxu0 0.0
    %4955 = vmatpush1.msra.mxu0 %v4702
    %4956 = vmatprep.subr.mxu0 0.0
    %4957 = vmatpush1.msra.mxu0 %v4705
    %4958 = vmatprep.subr.mxu0 0.0
    %4959 = vmatpush1.msra.mxu0 %v4708
    %4960 = vmatprep.subr.mxu0 0.0
    %4961 = vmatpush1.msra.mxu0 %v4711
    %4962 = vmatprep.mubr.f32.mxu0 %v4615
    %4963 = vmatmul.mubr.f32.gmra.mrb[0].mxu0 %v4614
    %v4964 = vpop.f32.mrb[0].mxu0
    %v4965 = vadd.f32 %v4749, %v4964
    %v4966 = vpop.f32.mrb[0].mxu0
    %4967 = vdwg.mxu0
    %4968 = vmatprep.subr.mxu0 0.0
    %4969 = vmatpush1.msra.mxu0 %v4714
    %4970 = vmatprep.subr.mxu0 0.0
    %4971 = vmatpush1.msra.mxu0 %v4717
    %4972 = vmatprep.subr.mxu0 0.0
    %4973 = vmatpush1.msra.mxu0 %v4720
    %4974 = vmatprep.subr.mxu0 0.0
    %4975 = vmatpush1.msra.mxu0 %v4723
    %4976 = vmatprep.subr.mxu0 0.0
    %4977 = vmatpush1.msra.mxu0 %v4726
    %4978 = vmatprep.subr.mxu0 0.0
    %4979 = vmatpush1.msra.mxu0 %v4729
    %4980 = vmatprep.subr.mxu0 0.0
    %4981 = vmatpush1.msra.mxu0 %v4732
    %4982 = vmatprep.subr.mxu0 0.0
    %4983 = vmatpush1.msra.mxu0 %v4735
    %4984 = vmatprep.subr.mxu0 0.0
    %4985 = vmatpush1.msra.mxu0 0.0
    %4986 = vmatprep.subr.mxu0 0.0
    %4987 = vmatpush1.msra.mxu0 0.0
    %4988 = vmatprep.subr.mxu0 0.0
    %4989 = vmatpush1.msra.mxu0 0.0
    %4990 = vmatprep.subr.mxu0 0.0
    %4991 = vmatpush1.msra.mxu0 0.0
    %4992 = vmatprep.subr.mxu0 0.0
    %4993 = vmatpush1.msra.mxu0 0.0
    %4994 = vmatprep.subr.mxu0 0.0
    %4995 = vmatpush1.msra.mxu0 0.0
    %4996 = vmatprep.subr.mxu0 0.0
    %4997 = vmatpush1.msra.mxu0 0.0
    %4998 = vmatprep.subr.mxu0 0.0
    %4999 = vmatpush1.msra.mxu0 0.0
    %5000 = vmatprep.subr.mxu0 0.0
    %5001 = vmatpush1.msra.mxu0 0.0
    %5002 = vmatprep.subr.mxu0 0.0
    %5003 = vmatpush1.msra.mxu0 0.0
    %5004 = vmatprep.subr.mxu0 0.0
    %5005 = vmatpush1.msra.mxu0 0.0
    %5006 = vmatprep.subr.mxu0 0.0
    %5007 = vmatpush1.msra.mxu0 0.0
    %5008 = vmatprep.subr.mxu0 0.0
    %5009 = vmatpush1.msra.mxu0 0.0
    %5010 = vmatprep.subr.mxu0 0.0
    %5011 = vmatpush1.msra.mxu0 0.0
    %5012 = vmatprep.subr.mxu0 0.0
    %5013 = vmatpush1.msra.mxu0 0.0
    %5014 = vmatprep.subr.mxu0 0.0
    %5015 = vmatpush1.msra.mxu0 0.0
    %5016 = vmatprep.subr.mxu0 0.0
    %5017 = vmatpush1.msra.mxu0 0.0
    %5018 = vmatprep.subr.mxu0 0.0
    %5019 = vmatpush1.msra.mxu0 0.0
    %5020 = vmatprep.subr.mxu0 0.0
    %5021 = vmatpush1.msra.mxu0 0.0
    %5022 = vmatprep.subr.mxu0 0.0
    %5023 = vmatpush1.msra.mxu0 0.0
    %5024 = vmatprep.subr.mxu0 0.0
    %5025 = vmatpush1.msra.mxu0 0.0
    %5026 = vmatprep.subr.mxu0 0.0
    %5027 = vmatpush1.msra.mxu0 0.0
    %5028 = vmatprep.subr.mxu0 0.0
    %5029 = vmatpush1.msra.mxu0 0.0
    %5030 = vmatprep.subr.mxu0 0.0
    %5031 = vmatpush1.msra.mxu0 0.0
    %5032 = vmatprep.mubr.f32.mxu0 0.0
    %5033 = vmatmul.mubr.f32.gmra.mrb[0].mxu0 %v4754
    %v5034 = vpop.f32.mrb[0].mxu0
    %v5035 = vadd.f32 %v4965, %v5034
    %v5036 = vpop.f32.mrb[0].mxu0
    %5037 = vdwg.mxu0
    %v5038 = vmax.f32 %v4894, 0.0
    %v5039 = vmax.f32 %v4896, 0.0
    %v5040 = vmax.f32 %v5035, 0.0
    %v5041 = vld [vmem:[%s16] sm:$0xff]
    %v5042 = vld [vmem:[%s16 + $0x8] sm:$0xff]
    %v5043 = vld [vmem:[%s16 + $0x10] sm:$0xff]
    %v5044 = vld [vmem:[%s16 + $0x18] sm:$0xff]
    %v5045 = vld [vmem:[%s16 + $0x20] sm:$0xff]
    %v5046 = vld [vmem:[%s16 + $0x28] sm:$0xff]
    %v5047 = vld [vmem:[%s16 + $0x30] sm:$0xff]
    %v5048 = vld [vmem:[%s16 + $0x38] sm:$0xff]
    %v5049 = vld [vmem:[%s16 + $0x40] sm:$0xff]
    %v5050 = vld [vmem:[%s16 + $0x48] sm:$0xff]
    %v5051 = vld [vmem:[%s16 + $0x50] sm:$0xff]
    %v5052 = vld [vmem:[%s16 + $0x58] sm:$0xff]
    %v5053 = vld [vmem:[%s16 + $0x60] sm:$0xff]
    %v5054 = vld [vmem:[%s16 + $0x68] sm:$0xff]
    %v5055 = vld [vmem:[%s16 + $0x70] sm:$0xff]
    %v5056 = vld [vmem:[%s16 + $0x78] sm:$0xff]
    %v5057 = vld [vmem:[%s16 + $0x80] sm:$0xff]
    %v5058 = vld [vmem:[%s16 + $0x88] sm:$0xff]
    %v5059 = vld [vmem:[%s16 + $0x90] sm:$0xff]
    %v5060 = vld [vmem:[%s16 + $0x98] sm:$0xff]
    %v5061 = vld [vmem:[%s16 + $0xa0] sm:$0xff]
    %v5062 = vld [vmem:[%s16 + $0xa8] sm:$0xff]
    %v5063 = vld [vmem:[%s16 + $0xb0] sm:$0xff]
    %v5064 = vld [vmem:[%s16 + $0xb8] sm:$0xff]
    %v5065 = vld [vmem:[%s16 + $0xc0] sm:$0xff]
    %v5066 = vld [vmem:[%s16 + $0xc8] sm:$0xff]
    %v5067 = vld [vmem:[%s16 + $0xd0] sm:$0xff]
    %v5068 = vld [vmem:[%s16 + $0xd8] sm:$0xff]
    %v5069 = vld [vmem:[%s16 + $0xe0] sm:$0xff]
    %v5070 = vld [vmem:[%s16 + $0xe8] sm:$0xff]
    %v5071 = vld [vmem:[%s16 + $0xf0] sm:$0xff]
    %v5072 = vld [vmem:[%s16 + $0xf8] sm:$0xff]
    %v5073 = vld [vmem:[%s16 + $0x100] sm:$0xff]
    %v5074 = vld [vmem:[%s16 + $0x108] sm:$0xff]
    %v5075 = vld [vmem:[%s16 + $0x110] sm:$0xff]
    %v5076 = vld [vmem:[%s16 + $0x118] sm:$0xff]
    %v5077 = vld [vmem:[%s16 + $0x120] sm:$0xff]
    %v5078 = vld [vmem:[%s16 + $0x128] sm:$0xff]
    %v5079 = vld [vmem:[%s16 + $0x130] sm:$0xff]
    %v5080 = vld [vmem:[%s16 + $0x138] sm:$0xff]
    %v5081 = vld [vmem:[%s17] sm:$0x1]
    %v5083 = vlaneseq
    %v5084 = vshrl.u32 %v5083, 7
    %v5085 = vsub.s32 0, %v5084
    %v5086 = vrot.slane %v5081, %v5085
    %v5089 = vsel %vm1613, %v5040, 0
    %5091 = vmatprep.subr.mxu0 0.0
    %5092 = vmatpush1.msra.mxu0 %v5041
    %5093 = vmatprep.subr.mxu0 0.0
    %5094 = vmatpush1.msra.mxu0 %v5042
    %5095 = vmatprep.subr.mxu0 0.0
    %5096 = vmatpush1.msra.mxu0 %v5043
    %5097 = vmatprep.subr.mxu0 0.0
    %5098 = vmatpush1.msra.mxu0 %v5044
    %5099 = vmatprep.subr.mxu0 0.0
    %5100 = vmatpush1.msra.mxu0 %v5045
    %5101 = vmatprep.subr.mxu0 0.0
    %5102 = vmatpush1.msra.mxu0 %v5046
    %5103 = vmatprep.subr.mxu0 0.0
    %5104 = vmatpush1.msra.mxu0 %v5047
    %5105 = vmatprep.subr.mxu0 0.0
    %5106 = vmatpush1.msra.mxu0 %v5048
    %5107 = vmatprep.subr.mxu0 0.0
    %5108 = vmatpush1.msra.mxu0 %v5049
    %5109 = vmatprep.subr.mxu0 0.0
    %5110 = vmatpush1.msra.mxu0 %v5050
    %5111 = vmatprep.subr.mxu0 0.0
    %5112 = vmatpush1.msra.mxu0 %v5051
    %5113 = vmatprep.subr.mxu0 0.0
    %5114 = vmatpush1.msra.mxu0 %v5052
    %5115 = vmatprep.subr.mxu0 0.0
    %5116 = vmatpush1.msra.mxu0 %v5053
    %5117 = vmatprep.subr.mxu0 0.0
    %5118 = vmatpush1.msra.mxu0 %v5054
    %5119 = vmatprep.subr.mxu0 0.0
    %5120 = vmatpush1.msra.mxu0 %v5055
    %5121 = vmatprep.subr.mxu0 0.0
    %5122 = vmatpush1.msra.mxu0 %v5056
    %5123 = vmatprep.subr.mxu0 0.0
    %5124 = vmatpush1.msra.mxu0 %v5057
    %5125 = vmatprep.subr.mxu0 0.0
    %5126 = vmatpush1.msra.mxu0 %v5058
    %5127 = vmatprep.subr.mxu0 0.0
    %5128 = vmatpush1.msra.mxu0 %v5059
    %5129 = vmatprep.subr.mxu0 0.0
    %5130 = vmatpush1.msra.mxu0 %v5060
    %5131 = vmatprep.subr.mxu0 0.0
    %5132 = vmatpush1.msra.mxu0 %v5061
    %5133 = vmatprep.subr.mxu0 0.0
    %5134 = vmatpush1.msra.mxu0 %v5062
    %5135 = vmatprep.subr.mxu0 0.0
    %5136 = vmatpush1.msra.mxu0 %v5063
    %5137 = vmatprep.subr.mxu0 0.0
    %5138 = vmatpush1.msra.mxu0 %v5064
    %5139 = vmatprep.subr.mxu0 0.0
    %5140 = vmatpush1.msra.mxu0 %v5065
    %5141 = vmatprep.subr.mxu0 0.0
    %5142 = vmatpush1.msra.mxu0 %v5066
    %5143 = vmatprep.subr.mxu0 0.0
    %5144 = vmatpush1.msra.mxu0 %v5067
    %5145 = vmatprep.subr.mxu0 0.0
    %5146 = vmatpush1.msra.mxu0 %v5068
    %5147 = vmatprep.subr.mxu0 0.0
    %5148 = vmatpush1.msra.mxu0 %v5069
    %5149 = vmatprep.subr.mxu0 0.0
    %5150 = vmatpush1.msra.mxu0 %v5070
    %5151 = vmatprep.subr.mxu0 0.0
    %5152 = vmatpush1.msra.mxu0 %v5071
    %5153 = vmatprep.subr.mxu0 0.0
    %5154 = vmatpush1.msra.mxu0 %v5072
    %5155 = vmatprep.mubr.f32.mxu0 %v5039
    %5156 = vmatmul.mubr.f32.gmra.mrb[0].mxu0 %v5038
    %v5157 = vpop.f32.mrb[0].mxu0
    %v5158 = vadd.f32 %v5086, %v5157
    %v5159 = vpop.f32.mrb[0].mxu0
    %5160 = vdwg.mxu0
    %5161 = vmatprep.subr.mxu0 0.0
    %5162 = vmatpush1.msra.mxu0 %v5073
    %5163 = vmatprep.subr.mxu0 0.0
    %5164 = vmatpush1.msra.mxu0 %v5074
    %5165 = vmatprep.subr.mxu0 0.0
    %5166 = vmatpush1.msra.mxu0 %v5075
    %5167 = vmatprep.subr.mxu0 0.0
    %5168 = vmatpush1.msra.mxu0 %v5076
    %5169 = vmatprep.subr.mxu0 0.0
    %5170 = vmatpush1.msra.mxu0 %v5077
    %5171 = vmatprep.subr.mxu0 0.0
    %5172 = vmatpush1.msra.mxu0 %v5078
    %5173 = vmatprep.subr.mxu0 0.0
    %5174 = vmatpush1.msra.mxu0 %v5079
    %5175 = vmatprep.subr.mxu0 0.0
    %5176 = vmatpush1.msra.mxu0 %v5080
    %5177 = vmatprep.subr.mxu0 0.0
    %5178 = vmatpush1.msra.mxu0 0.0
    %5179 = vmatprep.subr.mxu0 0.0
    %5180 = vmatpush1.msra.mxu0 0.0
    %5181 = vmatprep.subr.mxu0 0.0
    %5182 = vmatpush1.msra.mxu0 0.0
    %5183 = vmatprep.subr.mxu0 0.0
    %5184 = vmatpush1.msra.mxu0 0.0
    %5185 = vmatprep.subr.mxu0 0.0
    %5186 = vmatpush1.msra.mxu0 0.0
    %5187 = vmatprep.subr.mxu0 0.0
    %5188 = vmatpush1.msra.mxu0 0.0
    %5189 = vmatprep.subr.mxu0 0.0
    %5190 = vmatpush1.msra.mxu0 0.0
    %5191 = vmatprep.subr.mxu0 0.0
    %5192 = vmatpush1.msra.mxu0 0.0
    %5193 = vmatprep.subr.mxu0 0.0
    %5194 = vmatpush1.msra.mxu0 0.0
    %5195 = vmatprep.subr.mxu0 0.0
    %5196 = vmatpush1.msra.mxu0 0.0
    %5197 = vmatprep.subr.mxu0 0.0
    %5198 = vmatpush1.msra.mxu0 0.0
    %5199 = vmatprep.subr.mxu0 0.0
    %5200 = vmatpush1.msra.mxu0 0.0
    %5201 = vmatprep.subr.mxu0 0.0
    %5202 = vmatpush1.msra.mxu0 0.0
    %5203 = vmatprep.subr.mxu0 0.0
    %5204 = vmatpush1.msra.mxu0 0.0
    %5205 = vmatprep.subr.mxu0 0.0
    %5206 = vmatpush1.msra.mxu0 0.0
    %5207 = vmatprep.subr.mxu0 0.0
    %5208 = vmatpush1.msra.mxu0 0.0
    %5209 = vmatprep.subr.mxu0 0.0
    %5210 = vmatpush1.msra.mxu0 0.0
    %5211 = vmatprep.subr.mxu0 0.0
    %5212 = vmatpush1.msra.mxu0 0.0
    %5213 = vmatprep.subr.mxu0 0.0
    %5214 = vmatpush1.msra.mxu0 0.0
    %5215 = vmatprep.subr.mxu0 0.0
    %5216 = vmatpush1.msra.mxu0 0.0
    %5217 = vmatprep.subr.mxu0 0.0
    %5218 = vmatpush1.msra.mxu0 0.0
    %5219 = vmatprep.subr.mxu0 0.0
    %5220 = vmatpush1.msra.mxu0 0.0
    %5221 = vmatprep.subr.mxu0 0.0
    %5222 = vmatpush1.msra.mxu0 0.0
    %5223 = vmatprep.subr.mxu0 0.0
    %5224 = vmatpush1.msra.mxu0 0.0
    %5225 = vmatprep.mubr.f32.mxu0 0.0
    %5226 = vmatmul.mubr.f32.gmra.mrb[0].mxu0 %v5089
    %v5227 = vpop.f32.mrb[0].mxu0
    %v5228 = vadd.f32 %v5158, %v5227
    %v5229 = vpop.f32.mrb[0].mxu0
    %5230 = vdwg.mxu0
    %5231 = vst.msk [vmem:[#allocation6] sm:$0x3] %vm3786, %v5228
    // Predicated region
    $region78: #{tfnet3_forward.1} parent=1 // pred_check
      _
    $region79: #{tfnet3_forward.1} parent=1 // pred_check_branch
      %5233 = sbr.rel (0) target = $region81
    $region80: #{tfnet3_forward.1} parent=1 // pred_region
      %s5235 = ssub.s32 32, 32
      %5236 = vsyncadd [#allocation5], %s5235
      %s5238 = sshll.u32 [#allocation6], 4
      %s5239 = int_to_ptr.vmem [resolvable:$true] %s5238
      %5241 = dma.vmem_to_hbm [thread:$0]  %s5239, 32, %s18, [#allocation5]
    $region81: #{tfnet3_forward.1} parent=1 // pred_fallthru
      _
    // Predicated region
    $region82: #{tfnet3_forward.1} parent=1 // pred_check
      _
    $region83: #{tfnet3_forward.1} parent=1 // pred_check_branch
      %5243 = sbr.rel (0) target = $region85
    $region84: #{tfnet3_forward.1} parent=1 // pred_region
      %5244 = dma.done [#allocation5], 32
    $region85: #{tfnet3_forward.1} parent=1 // pred_fallthru
      _
    %5245 = vsyncpa [#allocation4], 1
    %5246 = vsyncpa [#allocation5], 1

</llo_original>
